<compile_context>
chip_gen: v7x
topology: tpu7x:2x2x1
jax: 0.10.0
libtpu: 0.0.40
codegen_flags: <defaults>
</compile_context>

<pallas_src>
import functools

import jax
import jax.numpy as jnp
from jax.experimental import pallas as pl
from jax.experimental.pallas import tpu as pltpu


# ----------------------------------------------------------------------------
# Fused Pallas kernel: the whole VBMLP forward in a single invocation.
# ----------------------------------------------------------------------------
def _vbmlp_fused_kernel(x_ref, w1_ref, w2_ref, we_ref, wd_ref, w3_ref,
                        bias_ref, eps_ref, o_ref, *, width, latent, n_pad):
    # Concatenated bias layout (all offsets are multiples of 128):
    #   [ b1 (width) | b2 (width) | be (2*latent) | bd (width) | b3 (n_pad) ]
    o1 = 0
    o2 = o1 + width
    oe = o2 + width
    od = oe + 2 * latent
    o3 = od + width
    b1 = bias_ref[:, o1:o2]
    b2 = bias_ref[:, o2:oe]
    be = bias_ref[:, oe:od]
    bd = bias_ref[:, od:o3]
    b3 = bias_ref[:, o3:o3 + n_pad]

    # ---- l1 + ReLU (bf16 MXU feed, f32 accumulation & elementwise) ----------
    h = jnp.dot(x_ref[...], w1_ref[...], preferred_element_type=jnp.float32)
    h = jnp.maximum(h + b1, 0.0)

    # ---- l2 + ReLU -----------------------------------------------------------
    h = jnp.dot(h.astype(jnp.bfloat16), w2_ref[...],
                preferred_element_type=jnp.float32)
    h = jnp.maximum(h + b2, 0.0)

    # ---- variational bottleneck: encoder + reparameterize --------------------
    stats = jnp.dot(h.astype(jnp.bfloat16), we_ref[...],
                    preferred_element_type=jnp.float32) + be
    mu = stats[:, :latent]
    logvar = stats[:, latent:]
    z = mu + jnp.exp(0.5 * logvar) * eps_ref[...]          # exp -> EUP slot

    # ---- variational bottleneck: decoder -------------------------------------
    h = jnp.dot(z.astype(jnp.bfloat16), wd_ref[...],
                preferred_element_type=jnp.float32) + bd

    # ---- l3 (output padded to 128 lanes for dense stores) --------------------
    o_ref[...] = jnp.dot(h.astype(jnp.bfloat16), w3_ref[...],
                         preferred_element_type=jnp.float32) + b3


# ----------------------------------------------------------------------------
# Parameter init (torch nn.Linear-style uniform) + one-time weight preparation
# ----------------------------------------------------------------------------
def init_vbmlp_params(key, width=256, latent=256, num_classes=10,
                      data_shape=(3, 32, 32)):
    in_dim = data_shape[0] * data_shape[1] * data_shape[2]
    dims = {
        "l1": (in_dim, width),
        "l2": (width, width),
        "vb_enc": (width, 2 * latent),
        "vb_dec": (latent, width),
        "l3": (width, num_classes),
    }
    params = {}
    for name, (fan_in, fan_out) in dims.items():
        key, kw, kb = jax.random.split(key, 3)
        bound = 1.0 / jnp.sqrt(float(fan_in))
        # stored directly as (in, out) == W^T of the PyTorch (out, in) weight
        params[name + "_w"] = jax.random.uniform(
            kw, (fan_in, fan_out), jnp.float32, -bound, bound)
        params[name + "_b"] = jax.random.uniform(
            kb, (fan_out,), jnp.float32, -bound, bound)
    return params


def prepare_vbmlp_weights(params, num_classes=10, n_pad=128):
    """One-time prep: bf16 weight copies, 128-lane padded l3, concatenated biases."""
    width = params["l2_w"].shape[0]
    latent = params["vb_dec_w"].shape[0]
    assert width % 128 == 0 and latent % 128 == 0, (
        "width/latent must be multiples of 128 for the lane-aligned bias slices")

    w1 = params["l1_w"].astype(jnp.bfloat16)
    w2 = params["l2_w"].astype(jnp.bfloat16)
    we = params["vb_enc_w"].astype(jnp.bfloat16)
    wd = params["vb_dec_w"].astype(jnp.bfloat16)
    w3 = jnp.zeros((width, n_pad), jnp.bfloat16).at[:, :num_classes].set(
        params["l3_w"].astype(jnp.bfloat16))

    b3 = jnp.zeros((n_pad,), jnp.float32).at[:num_classes].set(params["l3_b"])
    bias = jnp.concatenate(
        [params["l1_b"], params["l2_b"], params["vb_enc_b"],
         params["vb_dec_b"], b3]).reshape(1, -1).astype(jnp.float32)

    return {"w1": w1, "w2": w2, "we": we, "wd": wd, "w3": w3, "bias": bias}


# ----------------------------------------------------------------------------
# Jitted forward wrapper
# ----------------------------------------------------------------------------
@functools.partial(jax.jit, static_argnames=("num_classes",))
def vbmlp_forward(prepped, x, eps, num_classes=10):
    B = x.shape[0]
    # Flatten (NCHW row-major -> (B, C*H*W)), same as torch.nn.Flatten.
    x_flat = x.reshape(B, -1).astype(jnp.bfloat16)

    width = prepped["w2"].shape[0]
    latent = prepped["wd"].shape[0]
    n_pad = prepped["w3"].shape[1]

    args = (x_flat, prepped["w1"], prepped["w2"], prepped["we"],
            prepped["wd"], prepped["w3"], prepped["bias"],
            eps.astype(jnp.float32))

    # Single-buffered, everything VMEM-resident (no grid -> no pipelining, no
    # dead second buffer).  Scoped-VMEM limit derived from the actual bytes,
    # capped below v7x's 64 MiB physical VMEM.
    total_bytes = sum(int(a.size) * a.dtype.itemsize for a in args)
    total_bytes += B * n_pad * 4
    vmem_limit = int(min(max(2 * total_bytes, 16 << 20), 60 << 20))

    vspec = pl.BlockSpec(memory_space=pltpu.MemorySpace.VMEM)

    out_padded = pl.pallas_call(
        functools.partial(_vbmlp_fused_kernel,
                          width=width, latent=latent, n_pad=n_pad),
        out_shape=jax.ShapeDtypeStruct((B, n_pad), jnp.float32),
        in_specs=[vspec] * len(args),
        out_specs=vspec,
        compiler_params=pltpu.CompilerParams(vmem_limit_bytes=vmem_limit),
    )(*args)

    return out_padded[:, :num_classes]


if __name__ == "__main__":
    key = jax.random.PRNGKey(0)
    k_param, k_x, k_eps = jax.random.split(key, 3)

    WIDTH = 256      # module default is 1024; kept small, still a multiple of 128
    LATENT = 256     # fixed by the module's (1, 256) eps buffers
    B = 8

    params = init_vbmlp_params(k_param, width=WIDTH, latent=LATENT)
    prepped = prepare_vbmlp_weights(params)            # one-time weight prep

    x = jax.random.normal(k_x, (B, 3, 32, 32), jnp.float32)
    # flag == 0 -> eps = None in torch, sampled inside the VB (randn_like):
    # independent noise per batch row, drawn here deterministically.
    eps = jax.random.normal(k_eps, (B, LATENT), jnp.float32)

    out = vbmlp_forward(prepped, x, eps, num_classes=10)
    out = jax.block_until_ready(out)
    assert out.shape == (B, 10) and out.dtype == jnp.float32

    # Second call: weights already prepped, forward is a single cached jit hit.
    out2 = jax.block_until_ready(vbmlp_forward(prepped, x, eps, num_classes=10))
    assert out2.shape == (B, 10)

    print("KERNEL_OK")
</pallas_src>

<mosaic_0001>
module attributes {stable_mosaic.version = 11 : i64} {
  func.func @_vbmlp_fused_kernel(%arg0: memref<8x3072xbf16, #tpu.memory_space<vmem>>, %arg1: memref<3072x256xbf16, #tpu.memory_space<vmem>>, %arg2: memref<256x256xbf16, #tpu.memory_space<vmem>>, %arg3: memref<256x512xbf16, #tpu.memory_space<vmem>>, %arg4: memref<256x256xbf16, #tpu.memory_space<vmem>>, %arg5: memref<256x128xbf16, #tpu.memory_space<vmem>>, %arg6: memref<1x1408xf32, #tpu.memory_space<vmem>>, %arg7: memref<8x256xf32, #tpu.memory_space<vmem>>, %arg8: memref<8x128xf32, #tpu.memory_space<vmem>>) attributes {dimension_semantics = [], scalar_prefetch = 0 : i64, scratch_operands = 0 : i64, tpu.core_type = #tpu.core_type<tc>} {
    %c0 = arith.constant 0 : index
    %c0_0 = arith.constant 0 : index
    %0 = vector.load %arg6[%c0, %c0_0] : memref<1x1408xf32, #tpu.memory_space<vmem>>, vector<1x256xf32>
    %c0_1 = arith.constant 0 : index
    %c256 = arith.constant 256 : index
    %1 = vector.load %arg6[%c0_1, %c256] : memref<1x1408xf32, #tpu.memory_space<vmem>>, vector<1x256xf32>
    %c0_2 = arith.constant 0 : index
    %c512 = arith.constant 512 : index
    %2 = vector.load %arg6[%c0_2, %c512] : memref<1x1408xf32, #tpu.memory_space<vmem>>, vector<1x512xf32>
    %c0_3 = arith.constant 0 : index
    %c1024 = arith.constant 1024 : index
    %3 = vector.load %arg6[%c0_3, %c1024] : memref<1x1408xf32, #tpu.memory_space<vmem>>, vector<1x256xf32>
    %c0_4 = arith.constant 0 : index
    %c1280 = arith.constant 1280 : index
    %4 = vector.load %arg6[%c0_4, %c1280] : memref<1x1408xf32, #tpu.memory_space<vmem>>, vector<1x128xf32>
    %c0_5 = arith.constant 0 : index
    %c0_6 = arith.constant 0 : index
    %5 = vector.load %arg0[%c0_5, %c0_6] : memref<8x3072xbf16, #tpu.memory_space<vmem>>, vector<8x3072xbf16>
    %c0_7 = arith.constant 0 : index
    %c0_8 = arith.constant 0 : index
    %6 = vector.load %arg1[%c0_7, %c0_8] : memref<3072x256xbf16, #tpu.memory_space<vmem>>, vector<3072x256xbf16>
    %cst = arith.constant dense<0.000000e+00> : vector<8x256xf32>
    %7 = tpu.matmul %5, %6, %cst {dimension_numbers = #tpu.dot_dimension_numbers<[1], [0], [0], [1], [0, 0, 1, 1], [], []>} : vector<8x3072xbf16>, vector<3072x256xbf16>, vector<8x256xf32> -> vector<8x256xf32>
    %8 = vector.broadcast %0 : vector<1x256xf32> to vector<8x256xf32>
    %9 = arith.addf %7, %8 : vector<8x256xf32>
    %cst_9 = arith.constant 0.000000e+00 : f32
    %10 = vector.broadcast %cst_9 : f32 to vector<8x256xf32>
    %11 = arith.maximumf %9, %10 : vector<8x256xf32>
    %12 = arith.truncf %11 : vector<8x256xf32> to vector<8x256xbf16>
    %c0_10 = arith.constant 0 : index
    %c0_11 = arith.constant 0 : index
    %13 = vector.load %arg2[%c0_10, %c0_11] : memref<256x256xbf16, #tpu.memory_space<vmem>>, vector<256x256xbf16>
    %cst_12 = arith.constant dense<0.000000e+00> : vector<8x256xf32>
    %14 = tpu.matmul %12, %13, %cst_12 {dimension_numbers = #tpu.dot_dimension_numbers<[1], [0], [0], [1], [0, 0, 1, 1], [], []>} : vector<8x256xbf16>, vector<256x256xbf16>, vector<8x256xf32> -> vector<8x256xf32>
    %15 = vector.broadcast %1 : vector<1x256xf32> to vector<8x256xf32>
    %16 = arith.addf %14, %15 : vector<8x256xf32>
    %cst_13 = arith.constant 0.000000e+00 : f32
    %17 = vector.broadcast %cst_13 : f32 to vector<8x256xf32>
    %18 = arith.maximumf %16, %17 : vector<8x256xf32>
    %19 = arith.truncf %18 : vector<8x256xf32> to vector<8x256xbf16>
    %c0_14 = arith.constant 0 : index
    %c0_15 = arith.constant 0 : index
    %20 = vector.load %arg3[%c0_14, %c0_15] : memref<256x512xbf16, #tpu.memory_space<vmem>>, vector<256x512xbf16>
    %cst_16 = arith.constant dense<0.000000e+00> : vector<8x512xf32>
    %21 = tpu.matmul %19, %20, %cst_16 {dimension_numbers = #tpu.dot_dimension_numbers<[1], [0], [0], [1], [0, 0, 1, 1], [], []>} : vector<8x256xbf16>, vector<256x512xbf16>, vector<8x512xf32> -> vector<8x512xf32>
    %22 = vector.broadcast %2 : vector<1x512xf32> to vector<8x512xf32>
    %23 = arith.addf %21, %22 : vector<8x512xf32>
    %24 = vector.extract_strided_slice %23 {offsets = [0, 0], sizes = [8, 256], strides = [1, 1]} : vector<8x512xf32> to vector<8x256xf32>
    %25 = vector.extract_strided_slice %23 {offsets = [0, 256], sizes = [8, 256], strides = [1, 1]} : vector<8x512xf32> to vector<8x256xf32>
    %cst_17 = arith.constant 5.000000e-01 : f32
    %26 = vector.broadcast %cst_17 : f32 to vector<8x256xf32>
    %27 = arith.mulf %26, %25 : vector<8x256xf32>
    %28 = math.exp %27 : vector<8x256xf32>
    %c0_18 = arith.constant 0 : index
    %c0_19 = arith.constant 0 : index
    %29 = vector.load %arg7[%c0_18, %c0_19] : memref<8x256xf32, #tpu.memory_space<vmem>>, vector<8x256xf32>
    %30 = arith.mulf %28, %29 : vector<8x256xf32>
    %31 = arith.addf %24, %30 : vector<8x256xf32>
    %32 = arith.truncf %31 : vector<8x256xf32> to vector<8x256xbf16>
    %c0_20 = arith.constant 0 : index
    %c0_21 = arith.constant 0 : index
    %33 = vector.load %arg4[%c0_20, %c0_21] : memref<256x256xbf16, #tpu.memory_space<vmem>>, vector<256x256xbf16>
    %cst_22 = arith.constant dense<0.000000e+00> : vector<8x256xf32>
    %34 = tpu.matmul %32, %33, %cst_22 {dimension_numbers = #tpu.dot_dimension_numbers<[1], [0], [0], [1], [0, 0, 1, 1], [], []>} : vector<8x256xbf16>, vector<256x256xbf16>, vector<8x256xf32> -> vector<8x256xf32>
    %35 = vector.broadcast %3 : vector<1x256xf32> to vector<8x256xf32>
    %36 = arith.addf %34, %35 : vector<8x256xf32>
    %37 = arith.truncf %36 : vector<8x256xf32> to vector<8x256xbf16>
    %c0_23 = arith.constant 0 : index
    %c0_24 = arith.constant 0 : index
    %38 = vector.load %arg5[%c0_23, %c0_24] : memref<256x128xbf16, #tpu.memory_space<vmem>>, vector<256x128xbf16>
    %cst_25 = arith.constant dense<0.000000e+00> : vector<8x128xf32>
    %39 = tpu.matmul %37, %38, %cst_25 {dimension_numbers = #tpu.dot_dimension_numbers<[1], [0], [0], [1], [0, 0, 1, 1], [], []>} : vector<8x256xbf16>, vector<256x128xbf16>, vector<8x128xf32> -> vector<8x128xf32>
    %40 = vector.broadcast %4 : vector<1x128xf32> to vector<8x128xf32>
    %41 = arith.addf %39, %40 : vector<8x128xf32>
    %c0_26 = arith.constant 0 : index
    %c0_27 = arith.constant 0 : index
    %42 = vector.load %arg8[%c0_26, %c0_27] : memref<8x128xf32, #tpu.memory_space<vmem>>, vector<8x128xf32>
    tpu.vector_store %arg8[%c0_26, %c0_27], %41 {strides = array<i32>} : memref<8x128xf32, #tpu.memory_space<vmem>>, vector<8x128xf32>,
    return
  }
}

</mosaic_0001>

<llo_original>
// kernel: vbmlp_forward.1
$region0: #{vbmlp_forward.1}
  #allocation0 [shape = 'u32[]', space=smem, size = 0x4, offset = 0x4, fixed_abs, tag = 'smem constant byte address 0x4 - core index']
  #allocation1 [shape = 'u32[144,128]{1,0:T(1,128)}', space=vmem, size = 0x12000, scoped, tag = 'internal scratch']
  %s0 = inlined_call_operand.vmem [shape: bf16[8,3072], index: 0, kind: input, shape index: {}]
  %s1 = inlined_call_operand.hbm [shape: bf16[3072,256], index: 1, kind: input, shape index: {}]
  %s2 = inlined_call_operand.hbm [shape: bf16[256,256], index: 2, kind: input, shape index: {}]
  %s3 = inlined_call_operand.hbm [shape: bf16[256,512], index: 3, kind: input, shape index: {}]
  %s4 = inlined_call_operand.hbm [shape: bf16[256,256], index: 4, kind: input, shape index: {}]
  %s5 = inlined_call_operand.hbm [shape: bf16[256,128], index: 5, kind: input, shape index: {}]
  %s6 = inlined_call_operand.hbm [shape: f32[1,1408], index: 6, kind: input, shape index: {}]
  %s7 = inlined_call_operand.hbm [shape: f32[8,256], index: 7, kind: input, shape index: {}]
  %s8 = inlined_call_operand.hbm [shape: f32[8,128], index: 8, kind: output, shape index: {}]
  %s9 = sld [smem:[#allocation0]]
  $region70: #{vbmlp_forward.1} parent=0
    _
  %s11 = ssub.s32 1, %s9
  %s12 = scalar_select 0, %s11, %s9
  $region1: #{vbmlp_forward.1} parent=0
    #allocation2 [shape = 'u8[1572864]{0}', space=vmem, size = 0x180000, scoped, tag = 'input window, operand 1, single buffered']
    #allocation3 [shape = 's32[1]{0}', space=sflag, size = 0x4, scoped, tag = 'scoped memory for vbmlp_forward.1']
    #allocation4 [shape = 's32[1]{0}', space=sflag, size = 0x4, scoped, tag = 'scoped memory for vbmlp_forward.1']
    #allocation5 [shape = 'u8[131072]{0}', space=vmem, size = 0x20000, scoped, tag = 'input window, operand 2, single buffered']
    #allocation6 [shape = 's32[1]{0}', space=sflag, size = 0x4, scoped, tag = 'scoped memory for vbmlp_forward.1']
    #allocation7 [shape = 'u8[262144]{0}', space=vmem, size = 0x40000, scoped, tag = 'input window, operand 3, single buffered']
    #allocation8 [shape = 'u8[131072]{0}', space=vmem, size = 0x20000, scoped, tag = 'input window, operand 4, single buffered']
    #allocation9 [shape = 's32[1]{0}', space=sflag, size = 0x4, scoped, tag = 'scoped memory for vbmlp_forward.1']
    #allocation10 [shape = 'u8[65536]{0}', space=vmem, size = 0x10000, scoped, tag = 'input window, operand 5, single buffered']
    #allocation11 [shape = 'u8[5632]{0}', space=vmem, size = 0x1800, scoped, tag = 'input window, operand 6, single buffered']
    #allocation12 [shape = 's32[1]{0}', space=sflag, size = 0x4, scoped, tag = 'scoped memory for vbmlp_forward.1']
    #allocation13 [shape = 'u8[8192]{0}', space=vmem, size = 0x2000, scoped, tag = 'input window, operand 7, single buffered']
    #allocation14 [shape = 'u8[4096]{0}', space=vmem, size = 0x1000, scoped, tag = 'output window, operand 0, single buffered']
    %13 = vsyncpa [#allocation3], 0
    %14 = vsyncpa [#allocation6], 0
    %15 = vsyncpa [#allocation9], 0
    %16 = vsyncpa [#allocation12], 0
    %17 = vsyncpa [#allocation4], 0
    // Predicated region
    $region2: #{vbmlp_forward.1} parent=1 // pred_check
      _
    $region3: #{vbmlp_forward.1} parent=1 // pred_check_branch
      %19 = sbr.rel (0) target = $region5
    $region4: #{vbmlp_forward.1} parent=1 // pred_region
      _
    $region5: #{vbmlp_forward.1} parent=1 // pred_fallthru
      _
    // Predicated region
    $region6: #{vbmlp_forward.1} parent=1 // pred_check
      _
    $region7: #{vbmlp_forward.1} parent=1 // pred_check_branch
      %21 = sbr.rel (0) target = $region9
    $region8: #{vbmlp_forward.1} parent=1 // pred_region
      %s23 = ssub.s32 49152, 49152
      %24 = vsyncadd [#allocation3], %s23
      %s25 = sshll.u32 [#allocation2], 4
      %s26 = int_to_ptr.vmem [resolvable:$true] %s25
      %31 = dma.hbm_to_vmem [thread:$0]  %s1, 49152, %s26, [#allocation3], 128, 128, 8
    $region9: #{vbmlp_forward.1} parent=1 // pred_fallthru
      _
    // Predicated region
    $region10: #{vbmlp_forward.1} parent=1 // pred_check
      _
    $region11: #{vbmlp_forward.1} parent=1 // pred_check_branch
      %33 = sbr.rel (0) target = $region13
    $region12: #{vbmlp_forward.1} parent=1 // pred_region
      %s35 = ssub.s32 4096, 4096
      %36 = vsyncadd [#allocation6], %s35
      %s37 = sshll.u32 [#allocation5], 4
      %s38 = int_to_ptr.vmem [resolvable:$true] %s37
      %43 = dma.hbm_to_vmem [thread:$0]  %s2, 4096, %s38, [#allocation6], 128, 128, 8
    $region13: #{vbmlp_forward.1} parent=1 // pred_fallthru
      _
    // Predicated region
    $region14: #{vbmlp_forward.1} parent=1 // pred_check
      _
    $region15: #{vbmlp_forward.1} parent=1 // pred_check_branch
      %45 = sbr.rel (0) target = $region17
    $region16: #{vbmlp_forward.1} parent=1 // pred_region
      %s47 = ssub.s32 8192, 8192
      %48 = vsyncadd [#allocation6], %s47
      %s49 = sshll.u32 [#allocation7], 4
      %s50 = int_to_ptr.vmem [resolvable:$true] %s49
      %55 = dma.hbm_to_vmem [thread:$0]  %s3, 8192, %s50, [#allocation6], 256, 256, 16
    $region17: #{vbmlp_forward.1} parent=1 // pred_fallthru
      _
    // Predicated region
    $region18: #{vbmlp_forward.1} parent=1 // pred_check
      _
    $region19: #{vbmlp_forward.1} parent=1 // pred_check_branch
      %57 = sbr.rel (0) target = $region21
    $region20: #{vbmlp_forward.1} parent=1 // pred_region
      %s59 = ssub.s32 4096, 4096
      %60 = vsyncadd [#allocation9], %s59
      %s61 = sshll.u32 [#allocation8], 4
      %s62 = int_to_ptr.vmem [resolvable:$true] %s61
      %67 = dma.hbm_to_vmem [thread:$0]  %s4, 4096, %s62, [#allocation9], 128, 128, 8
    $region21: #{vbmlp_forward.1} parent=1 // pred_fallthru
      _
    // Predicated region
    $region22: #{vbmlp_forward.1} parent=1 // pred_check
      _
    $region23: #{vbmlp_forward.1} parent=1 // pred_check_branch
      %69 = sbr.rel (0) target = $region25
    $region24: #{vbmlp_forward.1} parent=1 // pred_region
      %s71 = ssub.s32 2048, 2048
      %72 = vsyncadd [#allocation9], %s71
      %s73 = sshll.u32 [#allocation10], 4
      %s74 = int_to_ptr.vmem [resolvable:$true] %s73
      %79 = dma.hbm_to_vmem [thread:$0]  %s5, 2048, %s74, [#allocation9], 64, 64, 4
    $region25: #{vbmlp_forward.1} parent=1 // pred_fallthru
      _
    // Predicated region
    $region26: #{vbmlp_forward.1} parent=1 // pred_check
      _
    $region27: #{vbmlp_forward.1} parent=1 // pred_check_branch
      %81 = sbr.rel (0) target = $region29
    $region28: #{vbmlp_forward.1} parent=1 // pred_region
      %s83 = ssub.s32 176, 176
      %84 = vsyncadd [#allocation12], %s83
      %s86 = sshll.u32 [#allocation11], 4
      %s87 = int_to_ptr.vmem [resolvable:$true] %s86
      %89 = dma.hbm_to_vmem [thread:$0]  %s6, 176, %s87, [#allocation12]
    $region29: #{vbmlp_forward.1} parent=1 // pred_fallthru
      _
    // Predicated region
    $region30: #{vbmlp_forward.1} parent=1 // pred_check
      _
    $region31: #{vbmlp_forward.1} parent=1 // pred_check_branch
      %91 = sbr.rel (0) target = $region33
    $region32: #{vbmlp_forward.1} parent=1 // pred_region
      %s93 = ssub.s32 256, 256
      %94 = vsyncadd [#allocation12], %s93
      %s96 = sshll.u32 [#allocation13], 4
      %s97 = int_to_ptr.vmem [resolvable:$true] %s96
      %99 = dma.hbm_to_vmem [thread:$0]  %s7, 256, %s97, [#allocation12]
    $region33: #{vbmlp_forward.1} parent=1 // pred_fallthru
      _
    // Predicated region
    $region34: #{vbmlp_forward.1} parent=1 // pred_check
      _
    $region35: #{vbmlp_forward.1} parent=1 // pred_check_branch
      %101 = sbr.rel (0) target = $region37
    $region36: #{vbmlp_forward.1} parent=1 // pred_region
      %102 = dma.done [#allocation3], 49152
    $region37: #{vbmlp_forward.1} parent=1 // pred_fallthru
      _
    // Predicated region
    $region38: #{vbmlp_forward.1} parent=1 // pred_check
      _
    $region39: #{vbmlp_forward.1} parent=1 // pred_check_branch
      %104 = sbr.rel (0) target = $region41
    $region40: #{vbmlp_forward.1} parent=1 // pred_region
      %105 = dma.done [#allocation6], 4096
    $region41: #{vbmlp_forward.1} parent=1 // pred_fallthru
      _
    // Predicated region
    $region42: #{vbmlp_forward.1} parent=1 // pred_check
      _
    $region43: #{vbmlp_forward.1} parent=1 // pred_check_branch
      %107 = sbr.rel (0) target = $region45
    $region44: #{vbmlp_forward.1} parent=1 // pred_region
      %108 = dma.done [#allocation6], 8192
    $region45: #{vbmlp_forward.1} parent=1 // pred_fallthru
      _
    // Predicated region
    $region46: #{vbmlp_forward.1} parent=1 // pred_check
      _
    $region47: #{vbmlp_forward.1} parent=1 // pred_check_branch
      %110 = sbr.rel (0) target = $region49
    $region48: #{vbmlp_forward.1} parent=1 // pred_region
      %111 = dma.done [#allocation9], 4096
    $region49: #{vbmlp_forward.1} parent=1 // pred_fallthru
      _
    // Predicated region
    $region50: #{vbmlp_forward.1} parent=1 // pred_check
      _
    $region51: #{vbmlp_forward.1} parent=1 // pred_check_branch
      %113 = sbr.rel (0) target = $region53
    $region52: #{vbmlp_forward.1} parent=1 // pred_region
      %114 = dma.done [#allocation9], 2048
    $region53: #{vbmlp_forward.1} parent=1 // pred_fallthru
      _
    // Predicated region
    $region54: #{vbmlp_forward.1} parent=1 // pred_check
      _
    $region55: #{vbmlp_forward.1} parent=1 // pred_check_branch
      %116 = sbr.rel (0) target = $region57
    $region56: #{vbmlp_forward.1} parent=1 // pred_region
      %117 = dma.done [#allocation12], 176
    $region57: #{vbmlp_forward.1} parent=1 // pred_fallthru
      _
    // Predicated region
    $region58: #{vbmlp_forward.1} parent=1 // pred_check
      _
    $region59: #{vbmlp_forward.1} parent=1 // pred_check_branch
      %119 = sbr.rel (0) target = $region61
    $region60: #{vbmlp_forward.1} parent=1 // pred_region
      %120 = dma.done [#allocation12], 256
    $region61: #{vbmlp_forward.1} parent=1 // pred_fallthru
      _
    %v122 = vld [vmem:[#allocation11] sm:$0x3]
    %v123 = vld [vmem:[#allocation11 + $0x2] sm:$0x3]
    %v124 = vld [vmem:[#allocation11 + $0x4] sm:$0xf]
    %v125 = vld [vmem:[#allocation11 + $0x8] sm:$0x3]
    %v126 = vld [vmem:[#allocation11 + $0xa] sm:$0x1]
    %v127 = vld [vmem:[%s0] sm:$0xff]
    %v128 = vld [vmem:[%s0 + $0x8] sm:$0xff]
    %v129 = vld [vmem:[%s0 + $0x10] sm:$0xff]
    %v130 = vld [vmem:[%s0 + $0x18] sm:$0xff]
    %v131 = vld [vmem:[%s0 + $0x20] sm:$0xff]
    %v132 = vld [vmem:[%s0 + $0x28] sm:$0xff]
    %v133 = vld [vmem:[%s0 + $0x30] sm:$0xff]
    %v134 = vld [vmem:[%s0 + $0x38] sm:$0xff]
    %v135 = vld [vmem:[%s0 + $0x40] sm:$0xff]
    %v136 = vld [vmem:[%s0 + $0x48] sm:$0xff]
    %v137 = vld [vmem:[%s0 + $0x50] sm:$0xff]
    %v138 = vld [vmem:[%s0 + $0x58] sm:$0xff]
    %v139 = vld [vmem:[#allocation2] sm:$0xff]
    %v140 = vld [vmem:[#allocation2 + $0x8] sm:$0xff]
    %v141 = vld [vmem:[#allocation2 + $0x10] sm:$0xff]
    %v142 = vld [vmem:[#allocation2 + $0x18] sm:$0xff]
    %v143 = vld [vmem:[#allocation2 + $0x20] sm:$0xff]
    %v144 = vld [vmem:[#allocation2 + $0x28] sm:$0xff]
    %v145 = vld [vmem:[#allocation2 + $0x30] sm:$0xff]
    %v146 = vld [vmem:[#allocation2 + $0x38] sm:$0xff]
    %v147 = vld [vmem:[#allocation2 + $0x40] sm:$0xff]
    %v148 = vld [vmem:[#allocation2 + $0x48] sm:$0xff]
    %v149 = vld [vmem:[#allocation2 + $0x50] sm:$0xff]
    %v150 = vld [vmem:[#allocation2 + $0x58] sm:$0xff]
    %v151 = vld [vmem:[#allocation2 + $0x60] sm:$0xff]
    %v152 = vld [vmem:[#allocation2 + $0x68] sm:$0xff]
    %v153 = vld [vmem:[#allocation2 + $0x70] sm:$0xff]
    %v154 = vld [vmem:[#allocation2 + $0x78] sm:$0xff]
    %v155 = vld [vmem:[#allocation2 + $0x80] sm:$0xff]
    %v156 = vld [vmem:[#allocation2 + $0x88] sm:$0xff]
    %v157 = vld [vmem:[#allocation2 + $0x90] sm:$0xff]
    %v158 = vld [vmem:[#allocation2 + $0x98] sm:$0xff]
    %v159 = vld [vmem:[#allocation2 + $0xa0] sm:$0xff]
    %v160 = vld [vmem:[#allocation2 + $0xa8] sm:$0xff]
    %v161 = vld [vmem:[#allocation2 + $0xb0] sm:$0xff]
    %v162 = vld [vmem:[#allocation2 + $0xb8] sm:$0xff]
    %v163 = vld [vmem:[#allocation2 + $0xc0] sm:$0xff]
    %v164 = vld [vmem:[#allocation2 + $0xc8] sm:$0xff]
    %v165 = vld [vmem:[#allocation2 + $0xd0] sm:$0xff]
    %v166 = vld [vmem:[#allocation2 + $0xd8] sm:$0xff]
    %v167 = vld [vmem:[#allocation2 + $0xe0] sm:$0xff]
    %v168 = vld [vmem:[#allocation2 + $0xe8] sm:$0xff]
    %v169 = vld [vmem:[#allocation2 + $0xf0] sm:$0xff]
    %v170 = vld [vmem:[#allocation2 + $0xf8] sm:$0xff]
    %v171 = vld [vmem:[#allocation2 + $0x100] sm:$0xff]
    %v172 = vld [vmem:[#allocation2 + $0x108] sm:$0xff]
    %v173 = vld [vmem:[#allocation2 + $0x110] sm:$0xff]
    %v174 = vld [vmem:[#allocation2 + $0x118] sm:$0xff]
    %v175 = vld [vmem:[#allocation2 + $0x120] sm:$0xff]
    %v176 = vld [vmem:[#allocation2 + $0x128] sm:$0xff]
    %v177 = vld [vmem:[#allocation2 + $0x130] sm:$0xff]
    %v178 = vld [vmem:[#allocation2 + $0x138] sm:$0xff]
    %v179 = vld [vmem:[#allocation2 + $0x140] sm:$0xff]
    %v180 = vld [vmem:[#allocation2 + $0x148] sm:$0xff]
    %v181 = vld [vmem:[#allocation2 + $0x150] sm:$0xff]
    %v182 = vld [vmem:[#allocation2 + $0x158] sm:$0xff]
    %v183 = vld [vmem:[#allocation2 + $0x160] sm:$0xff]
    %v184 = vld [vmem:[#allocation2 + $0x168] sm:$0xff]
    %v185 = vld [vmem:[#allocation2 + $0x170] sm:$0xff]
    %v186 = vld [vmem:[#allocation2 + $0x178] sm:$0xff]
    %v187 = vld [vmem:[#allocation2 + $0x180] sm:$0xff]
    %v188 = vld [vmem:[#allocation2 + $0x188] sm:$0xff]
    %v189 = vld [vmem:[#allocation2 + $0x190] sm:$0xff]
    %v190 = vld [vmem:[#allocation2 + $0x198] sm:$0xff]
    %v191 = vld [vmem:[#allocation2 + $0x1a0] sm:$0xff]
    %v192 = vld [vmem:[#allocation2 + $0x1a8] sm:$0xff]
    %v193 = vld [vmem:[#allocation2 + $0x1b0] sm:$0xff]
    %v194 = vld [vmem:[#allocation2 + $0x1b8] sm:$0xff]
    %v195 = vld [vmem:[#allocation2 + $0x1c0] sm:$0xff]
    %v196 = vld [vmem:[#allocation2 + $0x1c8] sm:$0xff]
    %v197 = vld [vmem:[#allocation2 + $0x1d0] sm:$0xff]
    %v198 = vld [vmem:[#allocation2 + $0x1d8] sm:$0xff]
    %v199 = vld [vmem:[#allocation2 + $0x1e0] sm:$0xff]
    %v200 = vld [vmem:[#allocation2 + $0x1e8] sm:$0xff]
    %v201 = vld [vmem:[#allocation2 + $0x1f0] sm:$0xff]
    %v202 = vld [vmem:[#allocation2 + $0x1f8] sm:$0xff]
    %v203 = vld [vmem:[#allocation2 + $0x200] sm:$0xff]
    %v204 = vld [vmem:[#allocation2 + $0x208] sm:$0xff]
    %v205 = vld [vmem:[#allocation2 + $0x210] sm:$0xff]
    %v206 = vld [vmem:[#allocation2 + $0x218] sm:$0xff]
    %v207 = vld [vmem:[#allocation2 + $0x220] sm:$0xff]
    %v208 = vld [vmem:[#allocation2 + $0x228] sm:$0xff]
    %v209 = vld [vmem:[#allocation2 + $0x230] sm:$0xff]
    %v210 = vld [vmem:[#allocation2 + $0x238] sm:$0xff]
    %v211 = vld [vmem:[#allocation2 + $0x240] sm:$0xff]
    %v212 = vld [vmem:[#allocation2 + $0x248] sm:$0xff]
    %v213 = vld [vmem:[#allocation2 + $0x250] sm:$0xff]
    %v214 = vld [vmem:[#allocation2 + $0x258] sm:$0xff]
    %v215 = vld [vmem:[#allocation2 + $0x260] sm:$0xff]
    %v216 = vld [vmem:[#allocation2 + $0x268] sm:$0xff]
    %v217 = vld [vmem:[#allocation2 + $0x270] sm:$0xff]
    %v218 = vld [vmem:[#allocation2 + $0x278] sm:$0xff]
    %v219 = vld [vmem:[#allocation2 + $0x280] sm:$0xff]
    %v220 = vld [vmem:[#allocation2 + $0x288] sm:$0xff]
    %v221 = vld [vmem:[#allocation2 + $0x290] sm:$0xff]
    %v222 = vld [vmem:[#allocation2 + $0x298] sm:$0xff]
    %v223 = vld [vmem:[#allocation2 + $0x2a0] sm:$0xff]
    %v224 = vld [vmem:[#allocation2 + $0x2a8] sm:$0xff]
    %v225 = vld [vmem:[#allocation2 + $0x2b0] sm:$0xff]
    %v226 = vld [vmem:[#allocation2 + $0x2b8] sm:$0xff]
    %v227 = vld [vmem:[#allocation2 + $0x2c0] sm:$0xff]
    %v228 = vld [vmem:[#allocation2 + $0x2c8] sm:$0xff]
    %v229 = vld [vmem:[#allocation2 + $0x2d0] sm:$0xff]
    %v230 = vld [vmem:[#allocation2 + $0x2d8] sm:$0xff]
    %v231 = vld [vmem:[#allocation2 + $0x2e0] sm:$0xff]
    %v232 = vld [vmem:[#allocation2 + $0x2e8] sm:$0xff]
    %v233 = vld [vmem:[#allocation2 + $0x2f0] sm:$0xff]
    %v234 = vld [vmem:[#allocation2 + $0x2f8] sm:$0xff]
    %v235 = vld [vmem:[#allocation2 + $0x300] sm:$0xff]
    %v236 = vld [vmem:[#allocation2 + $0x308] sm:$0xff]
    %v237 = vld [vmem:[#allocation2 + $0x310] sm:$0xff]
    %v238 = vld [vmem:[#allocation2 + $0x318] sm:$0xff]
    %v239 = vld [vmem:[#allocation2 + $0x320] sm:$0xff]
    %v240 = vld [vmem:[#allocation2 + $0x328] sm:$0xff]
    %v241 = vld [vmem:[#allocation2 + $0x330] sm:$0xff]
    %v242 = vld [vmem:[#allocation2 + $0x338] sm:$0xff]
    %v243 = vld [vmem:[#allocation2 + $0x340] sm:$0xff]
    %v244 = vld [vmem:[#allocation2 + $0x348] sm:$0xff]
    %v245 = vld [vmem:[#allocation2 + $0x350] sm:$0xff]
    %v246 = vld [vmem:[#allocation2 + $0x358] sm:$0xff]
    %v247 = vld [vmem:[#allocation2 + $0x360] sm:$0xff]
    %v248 = vld [vmem:[#allocation2 + $0x368] sm:$0xff]
    %v249 = vld [vmem:[#allocation2 + $0x370] sm:$0xff]
    %v250 = vld [vmem:[#allocation2 + $0x378] sm:$0xff]
    %v251 = vld [vmem:[#allocation2 + $0x380] sm:$0xff]
    %v252 = vld [vmem:[#allocation2 + $0x388] sm:$0xff]
    %v253 = vld [vmem:[#allocation2 + $0x390] sm:$0xff]
    %v254 = vld [vmem:[#allocation2 + $0x398] sm:$0xff]
    %v255 = vld [vmem:[#allocation2 + $0x3a0] sm:$0xff]
    %v256 = vld [vmem:[#allocation2 + $0x3a8] sm:$0xff]
    %v257 = vld [vmem:[#allocation2 + $0x3b0] sm:$0xff]
    %v258 = vld [vmem:[#allocation2 + $0x3b8] sm:$0xff]
    %v259 = vld [vmem:[#allocation2 + $0x3c0] sm:$0xff]
    %v260 = vld [vmem:[#allocation2 + $0x3c8] sm:$0xff]
    %v261 = vld [vmem:[#allocation2 + $0x3d0] sm:$0xff]
    %v262 = vld [vmem:[#allocation2 + $0x3d8] sm:$0xff]
    %v263 = vld [vmem:[#allocation2 + $0x3e0] sm:$0xff]
    %v264 = vld [vmem:[#allocation2 + $0x3e8] sm:$0xff]
    %v265 = vld [vmem:[#allocation2 + $0x3f0] sm:$0xff]
    %v266 = vld [vmem:[#allocation2 + $0x3f8] sm:$0xff]
    %v267 = vld [vmem:[#allocation2 + $0x400] sm:$0xff]
    %v268 = vld [vmem:[#allocation2 + $0x408] sm:$0xff]
    %v269 = vld [vmem:[#allocation2 + $0x410] sm:$0xff]
    %v270 = vld [vmem:[#allocation2 + $0x418] sm:$0xff]
    %v271 = vld [vmem:[#allocation2 + $0x420] sm:$0xff]
    %v272 = vld [vmem:[#allocation2 + $0x428] sm:$0xff]
    %v273 = vld [vmem:[#allocation2 + $0x430] sm:$0xff]
    %v274 = vld [vmem:[#allocation2 + $0x438] sm:$0xff]
    %v275 = vld [vmem:[#allocation2 + $0x440] sm:$0xff]
    %v276 = vld [vmem:[#allocation2 + $0x448] sm:$0xff]
    %v277 = vld [vmem:[#allocation2 + $0x450] sm:$0xff]
    %v278 = vld [vmem:[#allocation2 + $0x458] sm:$0xff]
    %v279 = vld [vmem:[#allocation2 + $0x460] sm:$0xff]
    %v280 = vld [vmem:[#allocation2 + $0x468] sm:$0xff]
    %v281 = vld [vmem:[#allocation2 + $0x470] sm:$0xff]
    %v282 = vld [vmem:[#allocation2 + $0x478] sm:$0xff]
    %v283 = vld [vmem:[#allocation2 + $0x480] sm:$0xff]
    %v284 = vld [vmem:[#allocation2 + $0x488] sm:$0xff]
    %v285 = vld [vmem:[#allocation2 + $0x490] sm:$0xff]
    %v286 = vld [vmem:[#allocation2 + $0x498] sm:$0xff]
    %v287 = vld [vmem:[#allocation2 + $0x4a0] sm:$0xff]
    %v288 = vld [vmem:[#allocation2 + $0x4a8] sm:$0xff]
    %v289 = vld [vmem:[#allocation2 + $0x4b0] sm:$0xff]
    %v290 = vld [vmem:[#allocation2 + $0x4b8] sm:$0xff]
    %v291 = vld [vmem:[#allocation2 + $0x4c0] sm:$0xff]
    %v292 = vld [vmem:[#allocation2 + $0x4c8] sm:$0xff]
    %v293 = vld [vmem:[#allocation2 + $0x4d0] sm:$0xff]
    %v294 = vld [vmem:[#allocation2 + $0x4d8] sm:$0xff]
    %v295 = vld [vmem:[#allocation2 + $0x4e0] sm:$0xff]
    %v296 = vld [vmem:[#allocation2 + $0x4e8] sm:$0xff]
    %v297 = vld [vmem:[#allocation2 + $0x4f0] sm:$0xff]
    %v298 = vld [vmem:[#allocation2 + $0x4f8] sm:$0xff]
    %v299 = vld [vmem:[#allocation2 + $0x500] sm:$0xff]
    %v300 = vld [vmem:[#allocation2 + $0x508] sm:$0xff]
    %v301 = vld [vmem:[#allocation2 + $0x510] sm:$0xff]
    %v302 = vld [vmem:[#allocation2 + $0x518] sm:$0xff]
    %v303 = vld [vmem:[#allocation2 + $0x520] sm:$0xff]
    %v304 = vld [vmem:[#allocation2 + $0x528] sm:$0xff]
    %v305 = vld [vmem:[#allocation2 + $0x530] sm:$0xff]
    %v306 = vld [vmem:[#allocation2 + $0x538] sm:$0xff]
    %v307 = vld [vmem:[#allocation2 + $0x540] sm:$0xff]
    %v308 = vld [vmem:[#allocation2 + $0x548] sm:$0xff]
    %v309 = vld [vmem:[#allocation2 + $0x550] sm:$0xff]
    %v310 = vld [vmem:[#allocation2 + $0x558] sm:$0xff]
    %v311 = vld [vmem:[#allocation2 + $0x560] sm:$0xff]
    %v312 = vld [vmem:[#allocation2 + $0x568] sm:$0xff]
    %v313 = vld [vmem:[#allocation2 + $0x570] sm:$0xff]
    %v314 = vld [vmem:[#allocation2 + $0x578] sm:$0xff]
    %v315 = vld [vmem:[#allocation2 + $0x580] sm:$0xff]
    %v316 = vld [vmem:[#allocation2 + $0x588] sm:$0xff]
    %v317 = vld [vmem:[#allocation2 + $0x590] sm:$0xff]
    %v318 = vld [vmem:[#allocation2 + $0x598] sm:$0xff]
    %v319 = vld [vmem:[#allocation2 + $0x5a0] sm:$0xff]
    %v320 = vld [vmem:[#allocation2 + $0x5a8] sm:$0xff]
    %v321 = vld [vmem:[#allocation2 + $0x5b0] sm:$0xff]
    %v322 = vld [vmem:[#allocation2 + $0x5b8] sm:$0xff]
    %v323 = vld [vmem:[#allocation2 + $0x5c0] sm:$0xff]
    %v324 = vld [vmem:[#allocation2 + $0x5c8] sm:$0xff]
    %v325 = vld [vmem:[#allocation2 + $0x5d0] sm:$0xff]
    %v326 = vld [vmem:[#allocation2 + $0x5d8] sm:$0xff]
    %v327 = vld [vmem:[#allocation2 + $0x5e0] sm:$0xff]
    %v328 = vld [vmem:[#allocation2 + $0x5e8] sm:$0xff]
    %v329 = vld [vmem:[#allocation2 + $0x5f0] sm:$0xff]
    %v330 = vld [vmem:[#allocation2 + $0x5f8] sm:$0xff]
    %v331 = vld [vmem:[#allocation2 + $0x600] sm:$0xff]
    %v332 = vld [vmem:[#allocation2 + $0x608] sm:$0xff]
    %v333 = vld [vmem:[#allocation2 + $0x610] sm:$0xff]
    %v334 = vld [vmem:[#allocation2 + $0x618] sm:$0xff]
    %v335 = vld [vmem:[#allocation2 + $0x620] sm:$0xff]
    %v336 = vld [vmem:[#allocation2 + $0x628] sm:$0xff]
    %v337 = vld [vmem:[#allocation2 + $0x630] sm:$0xff]
    %v338 = vld [vmem:[#allocation2 + $0x638] sm:$0xff]
    %v339 = vld [vmem:[#allocation2 + $0x640] sm:$0xff]
    %v340 = vld [vmem:[#allocation2 + $0x648] sm:$0xff]
    %v341 = vld [vmem:[#allocation2 + $0x650] sm:$0xff]
    %v342 = vld [vmem:[#allocation2 + $0x658] sm:$0xff]
    %v343 = vld [vmem:[#allocation2 + $0x660] sm:$0xff]
    %v344 = vld [vmem:[#allocation2 + $0x668] sm:$0xff]
    %v345 = vld [vmem:[#allocation2 + $0x670] sm:$0xff]
    %v346 = vld [vmem:[#allocation2 + $0x678] sm:$0xff]
    %v347 = vld [vmem:[#allocation2 + $0x680] sm:$0xff]
    %v348 = vld [vmem:[#allocation2 + $0x688] sm:$0xff]
    %v349 = vld [vmem:[#allocation2 + $0x690] sm:$0xff]
    %v350 = vld [vmem:[#allocation2 + $0x698] sm:$0xff]
    %v351 = vld [vmem:[#allocation2 + $0x6a0] sm:$0xff]
    %v352 = vld [vmem:[#allocation2 + $0x6a8] sm:$0xff]
    %v353 = vld [vmem:[#allocation2 + $0x6b0] sm:$0xff]
    %v354 = vld [vmem:[#allocation2 + $0x6b8] sm:$0xff]
    %v355 = vld [vmem:[#allocation2 + $0x6c0] sm:$0xff]
    %v356 = vld [vmem:[#allocation2 + $0x6c8] sm:$0xff]
    %v357 = vld [vmem:[#allocation2 + $0x6d0] sm:$0xff]
    %v358 = vld [vmem:[#allocation2 + $0x6d8] sm:$0xff]
    %v359 = vld [vmem:[#allocation2 + $0x6e0] sm:$0xff]
    %v360 = vld [vmem:[#allocation2 + $0x6e8] sm:$0xff]
    %v361 = vld [vmem:[#allocation2 + $0x6f0] sm:$0xff]
    %v362 = vld [vmem:[#allocation2 + $0x6f8] sm:$0xff]
    %v363 = vld [vmem:[#allocation2 + $0x700] sm:$0xff]
    %v364 = vld [vmem:[#allocation2 + $0x708] sm:$0xff]
    %v365 = vld [vmem:[#allocation2 + $0x710] sm:$0xff]
    %v366 = vld [vmem:[#allocation2 + $0x718] sm:$0xff]
    %v367 = vld [vmem:[#allocation2 + $0x720] sm:$0xff]
    %v368 = vld [vmem:[#allocation2 + $0x728] sm:$0xff]
    %v369 = vld [vmem:[#allocation2 + $0x730] sm:$0xff]
    %v370 = vld [vmem:[#allocation2 + $0x738] sm:$0xff]
    %v371 = vld [vmem:[#allocation2 + $0x740] sm:$0xff]
    %v372 = vld [vmem:[#allocation2 + $0x748] sm:$0xff]
    %v373 = vld [vmem:[#allocation2 + $0x750] sm:$0xff]
    %v374 = vld [vmem:[#allocation2 + $0x758] sm:$0xff]
    %v375 = vld [vmem:[#allocation2 + $0x760] sm:$0xff]
    %v376 = vld [vmem:[#allocation2 + $0x768] sm:$0xff]
    %v377 = vld [vmem:[#allocation2 + $0x770] sm:$0xff]
    %v378 = vld [vmem:[#allocation2 + $0x778] sm:$0xff]
    %v379 = vld [vmem:[#allocation2 + $0x780] sm:$0xff]
    %v380 = vld [vmem:[#allocation2 + $0x788] sm:$0xff]
    %v381 = vld [vmem:[#allocation2 + $0x790] sm:$0xff]
    %v382 = vld [vmem:[#allocation2 + $0x798] sm:$0xff]
    %v383 = vld [vmem:[#allocation2 + $0x7a0] sm:$0xff]
    %v384 = vld [vmem:[#allocation2 + $0x7a8] sm:$0xff]
    %v385 = vld [vmem:[#allocation2 + $0x7b0] sm:$0xff]
    %v386 = vld [vmem:[#allocation2 + $0x7b8] sm:$0xff]
    %v387 = vld [vmem:[#allocation2 + $0x7c0] sm:$0xff]
    %v388 = vld [vmem:[#allocation2 + $0x7c8] sm:$0xff]
    %v389 = vld [vmem:[#allocation2 + $0x7d0] sm:$0xff]
    %v390 = vld [vmem:[#allocation2 + $0x7d8] sm:$0xff]
    %v391 = vld [vmem:[#allocation2 + $0x7e0] sm:$0xff]
    %v392 = vld [vmem:[#allocation2 + $0x7e8] sm:$0xff]
    %v393 = vld [vmem:[#allocation2 + $0x7f0] sm:$0xff]
    %v394 = vld [vmem:[#allocation2 + $0x7f8] sm:$0xff]
    %v395 = vld [vmem:[#allocation2 + $0x800] sm:$0xff]
    %v396 = vld [vmem:[#allocation2 + $0x808] sm:$0xff]
    %v397 = vld [vmem:[#allocation2 + $0x810] sm:$0xff]
    %v398 = vld [vmem:[#allocation2 + $0x818] sm:$0xff]
    %v399 = vld [vmem:[#allocation2 + $0x820] sm:$0xff]
    %v400 = vld [vmem:[#allocation2 + $0x828] sm:$0xff]
    %v401 = vld [vmem:[#allocation2 + $0x830] sm:$0xff]
    %v402 = vld [vmem:[#allocation2 + $0x838] sm:$0xff]
    %v403 = vld [vmem:[#allocation2 + $0x840] sm:$0xff]
    %v404 = vld [vmem:[#allocation2 + $0x848] sm:$0xff]
    %v405 = vld [vmem:[#allocation2 + $0x850] sm:$0xff]
    %v406 = vld [vmem:[#allocation2 + $0x858] sm:$0xff]
    %v407 = vld [vmem:[#allocation2 + $0x860] sm:$0xff]
    %v408 = vld [vmem:[#allocation2 + $0x868] sm:$0xff]
    %v409 = vld [vmem:[#allocation2 + $0x870] sm:$0xff]
    %v410 = vld [vmem:[#allocation2 + $0x878] sm:$0xff]
    %v411 = vld [vmem:[#allocation2 + $0x880] sm:$0xff]
    %v412 = vld [vmem:[#allocation2 + $0x888] sm:$0xff]
    %v413 = vld [vmem:[#allocation2 + $0x890] sm:$0xff]
    %v414 = vld [vmem:[#allocation2 + $0x898] sm:$0xff]
    %v415 = vld [vmem:[#allocation2 + $0x8a0] sm:$0xff]
    %v416 = vld [vmem:[#allocation2 + $0x8a8] sm:$0xff]
    %v417 = vld [vmem:[#allocation2 + $0x8b0] sm:$0xff]
    %v418 = vld [vmem:[#allocation2 + $0x8b8] sm:$0xff]
    %v419 = vld [vmem:[#allocation2 + $0x8c0] sm:$0xff]
    %v420 = vld [vmem:[#allocation2 + $0x8c8] sm:$0xff]
    %v421 = vld [vmem:[#allocation2 + $0x8d0] sm:$0xff]
    %v422 = vld [vmem:[#allocation2 + $0x8d8] sm:$0xff]
    %v423 = vld [vmem:[#allocation2 + $0x8e0] sm:$0xff]
    %v424 = vld [vmem:[#allocation2 + $0x8e8] sm:$0xff]
    %v425 = vld [vmem:[#allocation2 + $0x8f0] sm:$0xff]
    %v426 = vld [vmem:[#allocation2 + $0x8f8] sm:$0xff]
    %v427 = vld [vmem:[#allocation2 + $0x900] sm:$0xff]
    %v428 = vld [vmem:[#allocation2 + $0x908] sm:$0xff]
    %v429 = vld [vmem:[#allocation2 + $0x910] sm:$0xff]
    %v430 = vld [vmem:[#allocation2 + $0x918] sm:$0xff]
    %v431 = vld [vmem:[#allocation2 + $0x920] sm:$0xff]
    %v432 = vld [vmem:[#allocation2 + $0x928] sm:$0xff]
    %v433 = vld [vmem:[#allocation2 + $0x930] sm:$0xff]
    %v434 = vld [vmem:[#allocation2 + $0x938] sm:$0xff]
    %v435 = vld [vmem:[#allocation2 + $0x940] sm:$0xff]
    %v436 = vld [vmem:[#allocation2 + $0x948] sm:$0xff]
    %v437 = vld [vmem:[#allocation2 + $0x950] sm:$0xff]
    %v438 = vld [vmem:[#allocation2 + $0x958] sm:$0xff]
    %v439 = vld [vmem:[#allocation2 + $0x960] sm:$0xff]
    %v440 = vld [vmem:[#allocation2 + $0x968] sm:$0xff]
    %v441 = vld [vmem:[#allocation2 + $0x970] sm:$0xff]
    %v442 = vld [vmem:[#allocation2 + $0x978] sm:$0xff]
    %v443 = vld [vmem:[#allocation2 + $0x980] sm:$0xff]
    %v444 = vld [vmem:[#allocation2 + $0x988] sm:$0xff]
    %v445 = vld [vmem:[#allocation2 + $0x990] sm:$0xff]
    %v446 = vld [vmem:[#allocation2 + $0x998] sm:$0xff]
    %v447 = vld [vmem:[#allocation2 + $0x9a0] sm:$0xff]
    %v448 = vld [vmem:[#allocation2 + $0x9a8] sm:$0xff]
    %v449 = vld [vmem:[#allocation2 + $0x9b0] sm:$0xff]
    %v450 = vld [vmem:[#allocation2 + $0x9b8] sm:$0xff]
    %v451 = vld [vmem:[#allocation2 + $0x9c0] sm:$0xff]
    %v452 = vld [vmem:[#allocation2 + $0x9c8] sm:$0xff]
    %v453 = vld [vmem:[#allocation2 + $0x9d0] sm:$0xff]
    %v454 = vld [vmem:[#allocation2 + $0x9d8] sm:$0xff]
    %v455 = vld [vmem:[#allocation2 + $0x9e0] sm:$0xff]
    %v456 = vld [vmem:[#allocation2 + $0x9e8] sm:$0xff]
    %v457 = vld [vmem:[#allocation2 + $0x9f0] sm:$0xff]
    %v458 = vld [vmem:[#allocation2 + $0x9f8] sm:$0xff]
    %v459 = vld [vmem:[#allocation2 + $0xa00] sm:$0xff]
    %v460 = vld [vmem:[#allocation2 + $0xa08] sm:$0xff]
    %v461 = vld [vmem:[#allocation2 + $0xa10] sm:$0xff]
    %v462 = vld [vmem:[#allocation2 + $0xa18] sm:$0xff]
    %v463 = vld [vmem:[#allocation2 + $0xa20] sm:$0xff]
    %v464 = vld [vmem:[#allocation2 + $0xa28] sm:$0xff]
    %v465 = vld [vmem:[#allocation2 + $0xa30] sm:$0xff]
    %v466 = vld [vmem:[#allocation2 + $0xa38] sm:$0xff]
    %v467 = vld [vmem:[#allocation2 + $0xa40] sm:$0xff]
    %v468 = vld [vmem:[#allocation2 + $0xa48] sm:$0xff]
    %v469 = vld [vmem:[#allocation2 + $0xa50] sm:$0xff]
    %v470 = vld [vmem:[#allocation2 + $0xa58] sm:$0xff]
    %v471 = vld [vmem:[#allocation2 + $0xa60] sm:$0xff]
    %v472 = vld [vmem:[#allocation2 + $0xa68] sm:$0xff]
    %v473 = vld [vmem:[#allocation2 + $0xa70] sm:$0xff]
    %v474 = vld [vmem:[#allocation2 + $0xa78] sm:$0xff]
    %v475 = vld [vmem:[#allocation2 + $0xa80] sm:$0xff]
    %v476 = vld [vmem:[#allocation2 + $0xa88] sm:$0xff]
    %v477 = vld [vmem:[#allocation2 + $0xa90] sm:$0xff]
    %v478 = vld [vmem:[#allocation2 + $0xa98] sm:$0xff]
    %v479 = vld [vmem:[#allocation2 + $0xaa0] sm:$0xff]
    %v480 = vld [vmem:[#allocation2 + $0xaa8] sm:$0xff]
    %v481 = vld [vmem:[#allocation2 + $0xab0] sm:$0xff]
    %v482 = vld [vmem:[#allocation2 + $0xab8] sm:$0xff]
    %v483 = vld [vmem:[#allocation2 + $0xac0] sm:$0xff]
    %v484 = vld [vmem:[#allocation2 + $0xac8] sm:$0xff]
    %v485 = vld [vmem:[#allocation2 + $0xad0] sm:$0xff]
    %v486 = vld [vmem:[#allocation2 + $0xad8] sm:$0xff]
    %v487 = vld [vmem:[#allocation2 + $0xae0] sm:$0xff]
    %v488 = vld [vmem:[#allocation2 + $0xae8] sm:$0xff]
    %v489 = vld [vmem:[#allocation2 + $0xaf0] sm:$0xff]
    %v490 = vld [vmem:[#allocation2 + $0xaf8] sm:$0xff]
    %v491 = vld [vmem:[#allocation2 + $0xb00] sm:$0xff]
    %v492 = vld [vmem:[#allocation2 + $0xb08] sm:$0xff]
    %v493 = vld [vmem:[#allocation2 + $0xb10] sm:$0xff]
    %v494 = vld [vmem:[#allocation2 + $0xb18] sm:$0xff]
    %v495 = vld [vmem:[#allocation2 + $0xb20] sm:$0xff]
    %v496 = vld [vmem:[#allocation2 + $0xb28] sm:$0xff]
    %v497 = vld [vmem:[#allocation2 + $0xb30] sm:$0xff]
    %v498 = vld [vmem:[#allocation2 + $0xb38] sm:$0xff]
    %v499 = vld [vmem:[#allocation2 + $0xb40] sm:$0xff]
    %v500 = vld [vmem:[#allocation2 + $0xb48] sm:$0xff]
    %v501 = vld [vmem:[#allocation2 + $0xb50] sm:$0xff]
    %v502 = vld [vmem:[#allocation2 + $0xb58] sm:$0xff]
    %v503 = vld [vmem:[#allocation2 + $0xb60] sm:$0xff]
    %v504 = vld [vmem:[#allocation2 + $0xb68] sm:$0xff]
    %v505 = vld [vmem:[#allocation2 + $0xb70] sm:$0xff]
    %v506 = vld [vmem:[#allocation2 + $0xb78] sm:$0xff]
    %v507 = vld [vmem:[#allocation2 + $0xb80] sm:$0xff]
    %v508 = vld [vmem:[#allocation2 + $0xb88] sm:$0xff]
    %v509 = vld [vmem:[#allocation2 + $0xb90] sm:$0xff]
    %v510 = vld [vmem:[#allocation2 + $0xb98] sm:$0xff]
    %v511 = vld [vmem:[#allocation2 + $0xba0] sm:$0xff]
    %v512 = vld [vmem:[#allocation2 + $0xba8] sm:$0xff]
    %v513 = vld [vmem:[#allocation2 + $0xbb0] sm:$0xff]
    %v514 = vld [vmem:[#allocation2 + $0xbb8] sm:$0xff]
    %v515 = vld [vmem:[#allocation2 + $0xbc0] sm:$0xff]
    %v516 = vld [vmem:[#allocation2 + $0xbc8] sm:$0xff]
    %v517 = vld [vmem:[#allocation2 + $0xbd0] sm:$0xff]
    %v518 = vld [vmem:[#allocation2 + $0xbd8] sm:$0xff]
    %v519 = vld [vmem:[#allocation2 + $0xbe0] sm:$0xff]
    %v520 = vld [vmem:[#allocation2 + $0xbe8] sm:$0xff]
    %v521 = vld [vmem:[#allocation2 + $0xbf0] sm:$0xff]
    %v522 = vld [vmem:[#allocation2 + $0xbf8] sm:$0xff]
    %v524 = vlaneseq
    %v525 = vshrl.u32 %v524, 7
    %v526 = vsub.s32 0, %v525
    %v527 = vrot.slane %v122, %v526
    %v528 = vlaneseq
    %v529 = vshrl.u32 %v528, 7
    %v530 = vsub.s32 1, %v529
    %v531 = vrot.slane %v122, %v530
    %v546 = vunpack.c.l.b16 %v127
    %v547 = vunpack.c.h.b16 %v127
    %v548 = vunpack.c.l.b16 %v128
    %v549 = vunpack.c.h.b16 %v128
    %v550 = vunpack.c.l.b16 %v129
    %v551 = vunpack.c.h.b16 %v129
    %v552 = vunpack.c.l.b16 %v130
    %v553 = vunpack.c.h.b16 %v130
    %v554 = vunpack.c.l.b16 %v131
    %v555 = vunpack.c.h.b16 %v131
    %v556 = vunpack.c.l.b16 %v132
    %v557 = vunpack.c.h.b16 %v132
    %v558 = vunpack.c.l.b16 %v133
    %v559 = vunpack.c.h.b16 %v133
    %v560 = vunpack.c.l.b16 %v134
    %v561 = vunpack.c.h.b16 %v134
    %v562 = vunpack.c.l.b16 %v135
    %v563 = vunpack.c.h.b16 %v135
    %v564 = vunpack.c.l.b16 %v136
    %v565 = vunpack.c.h.b16 %v136
    %v566 = vunpack.c.l.b16 %v137
    %v567 = vunpack.c.h.b16 %v137
    %v568 = vunpack.c.l.b16 %v138
    %v569 = vunpack.c.h.b16 %v138
    %v570 = vpack.c.b16 %v546, %v546
    %v571 = vpack.c.b16 %v547, %v547
    %v572 = vpack.c.b16 %v548, %v548
    %v573 = vpack.c.b16 %v549, %v549
    %v574 = vpack.c.b16 %v550, %v550
    %v575 = vpack.c.b16 %v551, %v551
    %v576 = vpack.c.b16 %v552, %v552
    %v577 = vpack.c.b16 %v553, %v553
    %v578 = vpack.c.b16 %v554, %v554
    %v579 = vpack.c.b16 %v555, %v555
    %v580 = vpack.c.b16 %v556, %v556
    %v581 = vpack.c.b16 %v557, %v557
    %v582 = vpack.c.b16 %v558, %v558
    %v583 = vpack.c.b16 %v559, %v559
    %v584 = vpack.c.b16 %v560, %v560
    %v585 = vpack.c.b16 %v561, %v561
    %v586 = vpack.c.b16 %v562, %v562
    %v587 = vpack.c.b16 %v563, %v563
    %v588 = vpack.c.b16 %v564, %v564
    %v589 = vpack.c.b16 %v565, %v565
    %v590 = vpack.c.b16 %v566, %v566
    %v591 = vpack.c.b16 %v567, %v567
    %v592 = vpack.c.b16 %v568, %v568
    %v593 = vpack.c.b16 %v569, %v569
    %v1002 = vunpack.c.l.b16 %v139
    %v1003 = vunpack.c.h.b16 %v139
    %v1004 = vunpack.c.l.b16 %v140
    %v1005 = vunpack.c.h.b16 %v140
    %v1006 = vunpack.c.l.b16 %v141
    %v1007 = vunpack.c.h.b16 %v141
    %v1008 = vunpack.c.l.b16 %v142
    %v1009 = vunpack.c.h.b16 %v142
    %v1010 = vunpack.c.l.b16 %v143
    %v1011 = vunpack.c.h.b16 %v143
    %v1012 = vunpack.c.l.b16 %v144
    %v1013 = vunpack.c.h.b16 %v144
    %v1014 = vunpack.c.l.b16 %v145
    %v1015 = vunpack.c.h.b16 %v145
    %v1016 = vunpack.c.l.b16 %v146
    %v1017 = vunpack.c.h.b16 %v146
    %v1018 = vunpack.c.l.b16 %v147
    %v1019 = vunpack.c.h.b16 %v147
    %v1020 = vunpack.c.l.b16 %v148
    %v1021 = vunpack.c.h.b16 %v148
    %v1022 = vunpack.c.l.b16 %v149
    %v1023 = vunpack.c.h.b16 %v149
    %v1024 = vunpack.c.l.b16 %v150
    %v1025 = vunpack.c.h.b16 %v150
    %v1026 = vunpack.c.l.b16 %v151
    %v1027 = vunpack.c.h.b16 %v151
    %v1028 = vunpack.c.l.b16 %v152
    %v1029 = vunpack.c.h.b16 %v152
    %v1030 = vunpack.c.l.b16 %v153
    %v1031 = vunpack.c.h.b16 %v153
    %v1032 = vunpack.c.l.b16 %v154
    %v1033 = vunpack.c.h.b16 %v154
    %v1034 = vunpack.c.l.b16 %v155
    %v1035 = vunpack.c.h.b16 %v155
    %v1036 = vunpack.c.l.b16 %v156
    %v1037 = vunpack.c.h.b16 %v156
    %v1038 = vunpack.c.l.b16 %v157
    %v1039 = vunpack.c.h.b16 %v157
    %v1040 = vunpack.c.l.b16 %v158
    %v1041 = vunpack.c.h.b16 %v158
    %v1042 = vunpack.c.l.b16 %v159
    %v1043 = vunpack.c.h.b16 %v159
    %v1044 = vunpack.c.l.b16 %v160
    %v1045 = vunpack.c.h.b16 %v160
    %v1046 = vunpack.c.l.b16 %v161
    %v1047 = vunpack.c.h.b16 %v161
    %v1048 = vunpack.c.l.b16 %v162
    %v1049 = vunpack.c.h.b16 %v162
    %v1050 = vunpack.c.l.b16 %v163
    %v1051 = vunpack.c.h.b16 %v163
    %v1052 = vunpack.c.l.b16 %v164
    %v1053 = vunpack.c.h.b16 %v164
    %v1054 = vunpack.c.l.b16 %v165
    %v1055 = vunpack.c.h.b16 %v165
    %v1056 = vunpack.c.l.b16 %v166
    %v1057 = vunpack.c.h.b16 %v166
    %v1058 = vunpack.c.l.b16 %v167
    %v1059 = vunpack.c.h.b16 %v167
    %v1060 = vunpack.c.l.b16 %v168
    %v1061 = vunpack.c.h.b16 %v168
    %v1062 = vunpack.c.l.b16 %v169
    %v1063 = vunpack.c.h.b16 %v169
    %v1064 = vunpack.c.l.b16 %v170
    %v1065 = vunpack.c.h.b16 %v170
    %v1066 = vunpack.c.l.b16 %v171
    %v1067 = vunpack.c.h.b16 %v171
    %v1068 = vunpack.c.l.b16 %v172
    %v1069 = vunpack.c.h.b16 %v172
    %v1070 = vunpack.c.l.b16 %v173
    %v1071 = vunpack.c.h.b16 %v173
    %v1072 = vunpack.c.l.b16 %v174
    %v1073 = vunpack.c.h.b16 %v174
    %v1074 = vunpack.c.l.b16 %v175
    %v1075 = vunpack.c.h.b16 %v175
    %v1076 = vunpack.c.l.b16 %v176
    %v1077 = vunpack.c.h.b16 %v176
    %v1078 = vunpack.c.l.b16 %v177
    %v1079 = vunpack.c.h.b16 %v177
    %v1080 = vunpack.c.l.b16 %v178
    %v1081 = vunpack.c.h.b16 %v178
    %v1082 = vunpack.c.l.b16 %v179
    %v1083 = vunpack.c.h.b16 %v179
    %v1084 = vunpack.c.l.b16 %v180
    %v1085 = vunpack.c.h.b16 %v180
    %v1086 = vunpack.c.l.b16 %v181
    %v1087 = vunpack.c.h.b16 %v181
    %v1088 = vunpack.c.l.b16 %v182
    %v1089 = vunpack.c.h.b16 %v182
    %v1090 = vunpack.c.l.b16 %v183
    %v1091 = vunpack.c.h.b16 %v183
    %v1092 = vunpack.c.l.b16 %v184
    %v1093 = vunpack.c.h.b16 %v184
    %v1094 = vunpack.c.l.b16 %v185
    %v1095 = vunpack.c.h.b16 %v185
    %v1096 = vunpack.c.l.b16 %v186
    %v1097 = vunpack.c.h.b16 %v186
    %v1098 = vunpack.c.l.b16 %v187
    %v1099 = vunpack.c.h.b16 %v187
    %v1100 = vunpack.c.l.b16 %v188
    %v1101 = vunpack.c.h.b16 %v188
    %v1102 = vunpack.c.l.b16 %v189
    %v1103 = vunpack.c.h.b16 %v189
    %v1104 = vunpack.c.l.b16 %v190
    %v1105 = vunpack.c.h.b16 %v190
    %v1106 = vunpack.c.l.b16 %v191
    %v1107 = vunpack.c.h.b16 %v191
    %v1108 = vunpack.c.l.b16 %v192
    %v1109 = vunpack.c.h.b16 %v192
    %v1110 = vunpack.c.l.b16 %v193
    %v1111 = vunpack.c.h.b16 %v193
    %v1112 = vunpack.c.l.b16 %v194
    %v1113 = vunpack.c.h.b16 %v194
    %v1114 = vunpack.c.l.b16 %v195
    %v1115 = vunpack.c.h.b16 %v195
    %v1116 = vunpack.c.l.b16 %v196
    %v1117 = vunpack.c.h.b16 %v196
    %v1118 = vunpack.c.l.b16 %v197
    %v1119 = vunpack.c.h.b16 %v197
    %v1120 = vunpack.c.l.b16 %v198
    %v1121 = vunpack.c.h.b16 %v198
    %v1122 = vunpack.c.l.b16 %v199
    %v1123 = vunpack.c.h.b16 %v199
    %v1124 = vunpack.c.l.b16 %v200
    %v1125 = vunpack.c.h.b16 %v200
    %v1126 = vunpack.c.l.b16 %v201
    %v1127 = vunpack.c.h.b16 %v201
    %v1128 = vunpack.c.l.b16 %v202
    %v1129 = vunpack.c.h.b16 %v202
    %v1130 = vunpack.c.l.b16 %v203
    %v1131 = vunpack.c.h.b16 %v203
    %v1132 = vunpack.c.l.b16 %v204
    %v1133 = vunpack.c.h.b16 %v204
    %v1134 = vunpack.c.l.b16 %v205
    %v1135 = vunpack.c.h.b16 %v205
    %v1136 = vunpack.c.l.b16 %v206
    %v1137 = vunpack.c.h.b16 %v206
    %v1138 = vunpack.c.l.b16 %v207
    %v1139 = vunpack.c.h.b16 %v207
    %v1140 = vunpack.c.l.b16 %v208
    %v1141 = vunpack.c.h.b16 %v208
    %v1142 = vunpack.c.l.b16 %v209
    %v1143 = vunpack.c.h.b16 %v209
    %v1144 = vunpack.c.l.b16 %v210
    %v1145 = vunpack.c.h.b16 %v210
    %v1146 = vunpack.c.l.b16 %v211
    %v1147 = vunpack.c.h.b16 %v211
    %v1148 = vunpack.c.l.b16 %v212
    %v1149 = vunpack.c.h.b16 %v212
    %v1150 = vunpack.c.l.b16 %v213
    %v1151 = vunpack.c.h.b16 %v213
    %v1152 = vunpack.c.l.b16 %v214
    %v1153 = vunpack.c.h.b16 %v214
    %v1154 = vunpack.c.l.b16 %v215
    %v1155 = vunpack.c.h.b16 %v215
    %v1156 = vunpack.c.l.b16 %v216
    %v1157 = vunpack.c.h.b16 %v216
    %v1158 = vunpack.c.l.b16 %v217
    %v1159 = vunpack.c.h.b16 %v217
    %v1160 = vunpack.c.l.b16 %v218
    %v1161 = vunpack.c.h.b16 %v218
    %v1162 = vunpack.c.l.b16 %v219
    %v1163 = vunpack.c.h.b16 %v219
    %v1164 = vunpack.c.l.b16 %v220
    %v1165 = vunpack.c.h.b16 %v220
    %v1166 = vunpack.c.l.b16 %v221
    %v1167 = vunpack.c.h.b16 %v221
    %v1168 = vunpack.c.l.b16 %v222
    %v1169 = vunpack.c.h.b16 %v222
    %v1170 = vunpack.c.l.b16 %v223
    %v1171 = vunpack.c.h.b16 %v223
    %v1172 = vunpack.c.l.b16 %v224
    %v1173 = vunpack.c.h.b16 %v224
    %v1174 = vunpack.c.l.b16 %v225
    %v1175 = vunpack.c.h.b16 %v225
    %v1176 = vunpack.c.l.b16 %v226
    %v1177 = vunpack.c.h.b16 %v226
    %v1178 = vunpack.c.l.b16 %v227
    %v1179 = vunpack.c.h.b16 %v227
    %v1180 = vunpack.c.l.b16 %v228
    %v1181 = vunpack.c.h.b16 %v228
    %v1182 = vunpack.c.l.b16 %v229
    %v1183 = vunpack.c.h.b16 %v229
    %v1184 = vunpack.c.l.b16 %v230
    %v1185 = vunpack.c.h.b16 %v230
    %v1186 = vunpack.c.l.b16 %v231
    %v1187 = vunpack.c.h.b16 %v231
    %v1188 = vunpack.c.l.b16 %v232
    %v1189 = vunpack.c.h.b16 %v232
    %v1190 = vunpack.c.l.b16 %v233
    %v1191 = vunpack.c.h.b16 %v233
    %v1192 = vunpack.c.l.b16 %v234
    %v1193 = vunpack.c.h.b16 %v234
    %v1194 = vunpack.c.l.b16 %v235
    %v1195 = vunpack.c.h.b16 %v235
    %v1196 = vunpack.c.l.b16 %v236
    %v1197 = vunpack.c.h.b16 %v236
    %v1198 = vunpack.c.l.b16 %v237
    %v1199 = vunpack.c.h.b16 %v237
    %v1200 = vunpack.c.l.b16 %v238
    %v1201 = vunpack.c.h.b16 %v238
    %v1202 = vunpack.c.l.b16 %v239
    %v1203 = vunpack.c.h.b16 %v239
    %v1204 = vunpack.c.l.b16 %v240
    %v1205 = vunpack.c.h.b16 %v240
    %v1206 = vunpack.c.l.b16 %v241
    %v1207 = vunpack.c.h.b16 %v241
    %v1208 = vunpack.c.l.b16 %v242
    %v1209 = vunpack.c.h.b16 %v242
    %v1210 = vunpack.c.l.b16 %v243
    %v1211 = vunpack.c.h.b16 %v243
    %v1212 = vunpack.c.l.b16 %v244
    %v1213 = vunpack.c.h.b16 %v244
    %v1214 = vunpack.c.l.b16 %v245
    %v1215 = vunpack.c.h.b16 %v245
    %v1216 = vunpack.c.l.b16 %v246
    %v1217 = vunpack.c.h.b16 %v246
    %v1218 = vunpack.c.l.b16 %v247
    %v1219 = vunpack.c.h.b16 %v247
    %v1220 = vunpack.c.l.b16 %v248
    %v1221 = vunpack.c.h.b16 %v248
    %v1222 = vunpack.c.l.b16 %v249
    %v1223 = vunpack.c.h.b16 %v249
    %v1224 = vunpack.c.l.b16 %v250
    %v1225 = vunpack.c.h.b16 %v250
    %v1226 = vunpack.c.l.b16 %v251
    %v1227 = vunpack.c.h.b16 %v251
    %v1228 = vunpack.c.l.b16 %v252
    %v1229 = vunpack.c.h.b16 %v252
    %v1230 = vunpack.c.l.b16 %v253
    %v1231 = vunpack.c.h.b16 %v253
    %v1232 = vunpack.c.l.b16 %v254
    %v1233 = vunpack.c.h.b16 %v254
    %v1234 = vunpack.c.l.b16 %v255
    %v1235 = vunpack.c.h.b16 %v255
    %v1236 = vunpack.c.l.b16 %v256
    %v1237 = vunpack.c.h.b16 %v256
    %v1238 = vunpack.c.l.b16 %v257
    %v1239 = vunpack.c.h.b16 %v257
    %v1240 = vunpack.c.l.b16 %v258
    %v1241 = vunpack.c.h.b16 %v258
    %v1242 = vunpack.c.l.b16 %v259
    %v1243 = vunpack.c.h.b16 %v259
    %v1244 = vunpack.c.l.b16 %v260
    %v1245 = vunpack.c.h.b16 %v260
    %v1246 = vunpack.c.l.b16 %v261
    %v1247 = vunpack.c.h.b16 %v261
    %v1248 = vunpack.c.l.b16 %v262
    %v1249 = vunpack.c.h.b16 %v262
    %v1250 = vunpack.c.l.b16 %v263
    %v1251 = vunpack.c.h.b16 %v263
    %v1252 = vunpack.c.l.b16 %v264
    %v1253 = vunpack.c.h.b16 %v264
    %v1254 = vunpack.c.l.b16 %v265
    %v1255 = vunpack.c.h.b16 %v265
    %v1256 = vunpack.c.l.b16 %v266
    %v1257 = vunpack.c.h.b16 %v266
    %v1258 = vunpack.c.l.b16 %v267
    %v1259 = vunpack.c.h.b16 %v267
    %v1260 = vunpack.c.l.b16 %v268
    %v1261 = vunpack.c.h.b16 %v268
    %v1262 = vunpack.c.l.b16 %v269
    %v1263 = vunpack.c.h.b16 %v269
    %v1264 = vunpack.c.l.b16 %v270
    %v1265 = vunpack.c.h.b16 %v270
    %v1266 = vunpack.c.l.b16 %v271
    %v1267 = vunpack.c.h.b16 %v271
    %v1268 = vunpack.c.l.b16 %v272
    %v1269 = vunpack.c.h.b16 %v272
    %v1270 = vunpack.c.l.b16 %v273
    %v1271 = vunpack.c.h.b16 %v273
    %v1272 = vunpack.c.l.b16 %v274
    %v1273 = vunpack.c.h.b16 %v274
    %v1274 = vunpack.c.l.b16 %v275
    %v1275 = vunpack.c.h.b16 %v275
    %v1276 = vunpack.c.l.b16 %v276
    %v1277 = vunpack.c.h.b16 %v276
    %v1278 = vunpack.c.l.b16 %v277
    %v1279 = vunpack.c.h.b16 %v277
    %v1280 = vunpack.c.l.b16 %v278
    %v1281 = vunpack.c.h.b16 %v278
    %v1282 = vunpack.c.l.b16 %v279
    %v1283 = vunpack.c.h.b16 %v279
    %v1284 = vunpack.c.l.b16 %v280
    %v1285 = vunpack.c.h.b16 %v280
    %v1286 = vunpack.c.l.b16 %v281
    %v1287 = vunpack.c.h.b16 %v281
    %v1288 = vunpack.c.l.b16 %v282
    %v1289 = vunpack.c.h.b16 %v282
    %v1290 = vunpack.c.l.b16 %v283
    %v1291 = vunpack.c.h.b16 %v283
    %v1292 = vunpack.c.l.b16 %v284
    %v1293 = vunpack.c.h.b16 %v284
    %v1294 = vunpack.c.l.b16 %v285
    %v1295 = vunpack.c.h.b16 %v285
    %v1296 = vunpack.c.l.b16 %v286
    %v1297 = vunpack.c.h.b16 %v286
    %v1298 = vunpack.c.l.b16 %v287
    %v1299 = vunpack.c.h.b16 %v287
    %v1300 = vunpack.c.l.b16 %v288
    %v1301 = vunpack.c.h.b16 %v288
    %v1302 = vunpack.c.l.b16 %v289
    %v1303 = vunpack.c.h.b16 %v289
    %v1304 = vunpack.c.l.b16 %v290
    %v1305 = vunpack.c.h.b16 %v290
    %v1306 = vunpack.c.l.b16 %v291
    %v1307 = vunpack.c.h.b16 %v291
    %v1308 = vunpack.c.l.b16 %v292
    %v1309 = vunpack.c.h.b16 %v292
    %v1310 = vunpack.c.l.b16 %v293
    %v1311 = vunpack.c.h.b16 %v293
    %v1312 = vunpack.c.l.b16 %v294
    %v1313 = vunpack.c.h.b16 %v294
    %v1314 = vunpack.c.l.b16 %v295
    %v1315 = vunpack.c.h.b16 %v295
    %v1316 = vunpack.c.l.b16 %v296
    %v1317 = vunpack.c.h.b16 %v296
    %v1318 = vunpack.c.l.b16 %v297
    %v1319 = vunpack.c.h.b16 %v297
    %v1320 = vunpack.c.l.b16 %v298
    %v1321 = vunpack.c.h.b16 %v298
    %v1322 = vunpack.c.l.b16 %v299
    %v1323 = vunpack.c.h.b16 %v299
    %v1324 = vunpack.c.l.b16 %v300
    %v1325 = vunpack.c.h.b16 %v300
    %v1326 = vunpack.c.l.b16 %v301
    %v1327 = vunpack.c.h.b16 %v301
    %v1328 = vunpack.c.l.b16 %v302
    %v1329 = vunpack.c.h.b16 %v302
    %v1330 = vunpack.c.l.b16 %v303
    %v1331 = vunpack.c.h.b16 %v303
    %v1332 = vunpack.c.l.b16 %v304
    %v1333 = vunpack.c.h.b16 %v304
    %v1334 = vunpack.c.l.b16 %v305
    %v1335 = vunpack.c.h.b16 %v305
    %v1336 = vunpack.c.l.b16 %v306
    %v1337 = vunpack.c.h.b16 %v306
    %v1338 = vunpack.c.l.b16 %v307
    %v1339 = vunpack.c.h.b16 %v307
    %v1340 = vunpack.c.l.b16 %v308
    %v1341 = vunpack.c.h.b16 %v308
    %v1342 = vunpack.c.l.b16 %v309
    %v1343 = vunpack.c.h.b16 %v309
    %v1344 = vunpack.c.l.b16 %v310
    %v1345 = vunpack.c.h.b16 %v310
    %v1346 = vunpack.c.l.b16 %v311
    %v1347 = vunpack.c.h.b16 %v311
    %v1348 = vunpack.c.l.b16 %v312
    %v1349 = vunpack.c.h.b16 %v312
    %v1350 = vunpack.c.l.b16 %v313
    %v1351 = vunpack.c.h.b16 %v313
    %v1352 = vunpack.c.l.b16 %v314
    %v1353 = vunpack.c.h.b16 %v314
    %v1354 = vunpack.c.l.b16 %v315
    %v1355 = vunpack.c.h.b16 %v315
    %v1356 = vunpack.c.l.b16 %v316
    %v1357 = vunpack.c.h.b16 %v316
    %v1358 = vunpack.c.l.b16 %v317
    %v1359 = vunpack.c.h.b16 %v317
    %v1360 = vunpack.c.l.b16 %v318
    %v1361 = vunpack.c.h.b16 %v318
    %v1362 = vunpack.c.l.b16 %v319
    %v1363 = vunpack.c.h.b16 %v319
    %v1364 = vunpack.c.l.b16 %v320
    %v1365 = vunpack.c.h.b16 %v320
    %v1366 = vunpack.c.l.b16 %v321
    %v1367 = vunpack.c.h.b16 %v321
    %v1368 = vunpack.c.l.b16 %v322
    %v1369 = vunpack.c.h.b16 %v322
    %v1370 = vunpack.c.l.b16 %v323
    %v1371 = vunpack.c.h.b16 %v323
    %v1372 = vunpack.c.l.b16 %v324
    %v1373 = vunpack.c.h.b16 %v324
    %v1374 = vunpack.c.l.b16 %v325
    %v1375 = vunpack.c.h.b16 %v325
    %v1376 = vunpack.c.l.b16 %v326
    %v1377 = vunpack.c.h.b16 %v326
    %v1378 = vunpack.c.l.b16 %v327
    %v1379 = vunpack.c.h.b16 %v327
    %v1380 = vunpack.c.l.b16 %v328
    %v1381 = vunpack.c.h.b16 %v328
    %v1382 = vunpack.c.l.b16 %v329
    %v1383 = vunpack.c.h.b16 %v329
    %v1384 = vunpack.c.l.b16 %v330
    %v1385 = vunpack.c.h.b16 %v330
    %v1386 = vunpack.c.l.b16 %v331
    %v1387 = vunpack.c.h.b16 %v331
    %v1388 = vunpack.c.l.b16 %v332
    %v1389 = vunpack.c.h.b16 %v332
    %v1390 = vunpack.c.l.b16 %v333
    %v1391 = vunpack.c.h.b16 %v333
    %v1392 = vunpack.c.l.b16 %v334
    %v1393 = vunpack.c.h.b16 %v334
    %v1394 = vunpack.c.l.b16 %v335
    %v1395 = vunpack.c.h.b16 %v335
    %v1396 = vunpack.c.l.b16 %v336
    %v1397 = vunpack.c.h.b16 %v336
    %v1398 = vunpack.c.l.b16 %v337
    %v1399 = vunpack.c.h.b16 %v337
    %v1400 = vunpack.c.l.b16 %v338
    %v1401 = vunpack.c.h.b16 %v338
    %v1402 = vunpack.c.l.b16 %v339
    %v1403 = vunpack.c.h.b16 %v339
    %v1404 = vunpack.c.l.b16 %v340
    %v1405 = vunpack.c.h.b16 %v340
    %v1406 = vunpack.c.l.b16 %v341
    %v1407 = vunpack.c.h.b16 %v341
    %v1408 = vunpack.c.l.b16 %v342
    %v1409 = vunpack.c.h.b16 %v342
    %v1410 = vunpack.c.l.b16 %v343
    %v1411 = vunpack.c.h.b16 %v343
    %v1412 = vunpack.c.l.b16 %v344
    %v1413 = vunpack.c.h.b16 %v344
    %v1414 = vunpack.c.l.b16 %v345
    %v1415 = vunpack.c.h.b16 %v345
    %v1416 = vunpack.c.l.b16 %v346
    %v1417 = vunpack.c.h.b16 %v346
    %v1418 = vunpack.c.l.b16 %v347
    %v1419 = vunpack.c.h.b16 %v347
    %v1420 = vunpack.c.l.b16 %v348
    %v1421 = vunpack.c.h.b16 %v348
    %v1422 = vunpack.c.l.b16 %v349
    %v1423 = vunpack.c.h.b16 %v349
    %v1424 = vunpack.c.l.b16 %v350
    %v1425 = vunpack.c.h.b16 %v350
    %v1426 = vunpack.c.l.b16 %v351
    %v1427 = vunpack.c.h.b16 %v351
    %v1428 = vunpack.c.l.b16 %v352
    %v1429 = vunpack.c.h.b16 %v352
    %v1430 = vunpack.c.l.b16 %v353
    %v1431 = vunpack.c.h.b16 %v353
    %v1432 = vunpack.c.l.b16 %v354
    %v1433 = vunpack.c.h.b16 %v354
    %v1434 = vunpack.c.l.b16 %v355
    %v1435 = vunpack.c.h.b16 %v355
    %v1436 = vunpack.c.l.b16 %v356
    %v1437 = vunpack.c.h.b16 %v356
    %v1438 = vunpack.c.l.b16 %v357
    %v1439 = vunpack.c.h.b16 %v357
    %v1440 = vunpack.c.l.b16 %v358
    %v1441 = vunpack.c.h.b16 %v358
    %v1442 = vunpack.c.l.b16 %v359
    %v1443 = vunpack.c.h.b16 %v359
    %v1444 = vunpack.c.l.b16 %v360
    %v1445 = vunpack.c.h.b16 %v360
    %v1446 = vunpack.c.l.b16 %v361
    %v1447 = vunpack.c.h.b16 %v361
    %v1448 = vunpack.c.l.b16 %v362
    %v1449 = vunpack.c.h.b16 %v362
    %v1450 = vunpack.c.l.b16 %v363
    %v1451 = vunpack.c.h.b16 %v363
    %v1452 = vunpack.c.l.b16 %v364
    %v1453 = vunpack.c.h.b16 %v364
    %v1454 = vunpack.c.l.b16 %v365
    %v1455 = vunpack.c.h.b16 %v365
    %v1456 = vunpack.c.l.b16 %v366
    %v1457 = vunpack.c.h.b16 %v366
    %v1458 = vunpack.c.l.b16 %v367
    %v1459 = vunpack.c.h.b16 %v367
    %v1460 = vunpack.c.l.b16 %v368
    %v1461 = vunpack.c.h.b16 %v368
    %v1462 = vunpack.c.l.b16 %v369
    %v1463 = vunpack.c.h.b16 %v369
    %v1464 = vunpack.c.l.b16 %v370
    %v1465 = vunpack.c.h.b16 %v370
    %v1466 = vunpack.c.l.b16 %v371
    %v1467 = vunpack.c.h.b16 %v371
    %v1468 = vunpack.c.l.b16 %v372
    %v1469 = vunpack.c.h.b16 %v372
    %v1470 = vunpack.c.l.b16 %v373
    %v1471 = vunpack.c.h.b16 %v373
    %v1472 = vunpack.c.l.b16 %v374
    %v1473 = vunpack.c.h.b16 %v374
    %v1474 = vunpack.c.l.b16 %v375
    %v1475 = vunpack.c.h.b16 %v375
    %v1476 = vunpack.c.l.b16 %v376
    %v1477 = vunpack.c.h.b16 %v376
    %v1478 = vunpack.c.l.b16 %v377
    %v1479 = vunpack.c.h.b16 %v377
    %v1480 = vunpack.c.l.b16 %v378
    %v1481 = vunpack.c.h.b16 %v378
    %v1482 = vunpack.c.l.b16 %v379
    %v1483 = vunpack.c.h.b16 %v379
    %v1484 = vunpack.c.l.b16 %v380
    %v1485 = vunpack.c.h.b16 %v380
    %v1486 = vunpack.c.l.b16 %v381
    %v1487 = vunpack.c.h.b16 %v381
    %v1488 = vunpack.c.l.b16 %v382
    %v1489 = vunpack.c.h.b16 %v382
    %v1490 = vunpack.c.l.b16 %v383
    %v1491 = vunpack.c.h.b16 %v383
    %v1492 = vunpack.c.l.b16 %v384
    %v1493 = vunpack.c.h.b16 %v384
    %v1494 = vunpack.c.l.b16 %v385
    %v1495 = vunpack.c.h.b16 %v385
    %v1496 = vunpack.c.l.b16 %v386
    %v1497 = vunpack.c.h.b16 %v386
    %v1498 = vunpack.c.l.b16 %v387
    %v1499 = vunpack.c.h.b16 %v387
    %v1500 = vunpack.c.l.b16 %v388
    %v1501 = vunpack.c.h.b16 %v388
    %v1502 = vunpack.c.l.b16 %v389
    %v1503 = vunpack.c.h.b16 %v389
    %v1504 = vunpack.c.l.b16 %v390
    %v1505 = vunpack.c.h.b16 %v390
    %v1506 = vunpack.c.l.b16 %v391
    %v1507 = vunpack.c.h.b16 %v391
    %v1508 = vunpack.c.l.b16 %v392
    %v1509 = vunpack.c.h.b16 %v392
    %v1510 = vunpack.c.l.b16 %v393
    %v1511 = vunpack.c.h.b16 %v393
    %v1512 = vunpack.c.l.b16 %v394
    %v1513 = vunpack.c.h.b16 %v394
    %v1514 = vunpack.c.l.b16 %v395
    %v1515 = vunpack.c.h.b16 %v395
    %v1516 = vunpack.c.l.b16 %v396
    %v1517 = vunpack.c.h.b16 %v396
    %v1518 = vunpack.c.l.b16 %v397
    %v1519 = vunpack.c.h.b16 %v397
    %v1520 = vunpack.c.l.b16 %v398
    %v1521 = vunpack.c.h.b16 %v398
    %v1522 = vunpack.c.l.b16 %v399
    %v1523 = vunpack.c.h.b16 %v399
    %v1524 = vunpack.c.l.b16 %v400
    %v1525 = vunpack.c.h.b16 %v400
    %v1526 = vunpack.c.l.b16 %v401
    %v1527 = vunpack.c.h.b16 %v401
    %v1528 = vunpack.c.l.b16 %v402
    %v1529 = vunpack.c.h.b16 %v402
    %v1530 = vunpack.c.l.b16 %v403
    %v1531 = vunpack.c.h.b16 %v403
    %v1532 = vunpack.c.l.b16 %v404
    %v1533 = vunpack.c.h.b16 %v404
    %v1534 = vunpack.c.l.b16 %v405
    %v1535 = vunpack.c.h.b16 %v405
    %v1536 = vunpack.c.l.b16 %v406
    %v1537 = vunpack.c.h.b16 %v406
    %v1538 = vunpack.c.l.b16 %v407
    %v1539 = vunpack.c.h.b16 %v407
    %v1540 = vunpack.c.l.b16 %v408
    %v1541 = vunpack.c.h.b16 %v408
    %v1542 = vunpack.c.l.b16 %v409
    %v1543 = vunpack.c.h.b16 %v409
    %v1544 = vunpack.c.l.b16 %v410
    %v1545 = vunpack.c.h.b16 %v410
    %v1546 = vunpack.c.l.b16 %v411
    %v1547 = vunpack.c.h.b16 %v411
    %v1548 = vunpack.c.l.b16 %v412
    %v1549 = vunpack.c.h.b16 %v412
    %v1550 = vunpack.c.l.b16 %v413
    %v1551 = vunpack.c.h.b16 %v413
    %v1552 = vunpack.c.l.b16 %v414
    %v1553 = vunpack.c.h.b16 %v414
    %v1554 = vunpack.c.l.b16 %v415
    %v1555 = vunpack.c.h.b16 %v415
    %v1556 = vunpack.c.l.b16 %v416
    %v1557 = vunpack.c.h.b16 %v416
    %v1558 = vunpack.c.l.b16 %v417
    %v1559 = vunpack.c.h.b16 %v417
    %v1560 = vunpack.c.l.b16 %v418
    %v1561 = vunpack.c.h.b16 %v418
    %v1562 = vunpack.c.l.b16 %v419
    %v1563 = vunpack.c.h.b16 %v419
    %v1564 = vunpack.c.l.b16 %v420
    %v1565 = vunpack.c.h.b16 %v420
    %v1566 = vunpack.c.l.b16 %v421
    %v1567 = vunpack.c.h.b16 %v421
    %v1568 = vunpack.c.l.b16 %v422
    %v1569 = vunpack.c.h.b16 %v422
    %v1570 = vunpack.c.l.b16 %v423
    %v1571 = vunpack.c.h.b16 %v423
    %v1572 = vunpack.c.l.b16 %v424
    %v1573 = vunpack.c.h.b16 %v424
    %v1574 = vunpack.c.l.b16 %v425
    %v1575 = vunpack.c.h.b16 %v425
    %v1576 = vunpack.c.l.b16 %v426
    %v1577 = vunpack.c.h.b16 %v426
    %v1578 = vunpack.c.l.b16 %v427
    %v1579 = vunpack.c.h.b16 %v427
    %v1580 = vunpack.c.l.b16 %v428
    %v1581 = vunpack.c.h.b16 %v428
    %v1582 = vunpack.c.l.b16 %v429
    %v1583 = vunpack.c.h.b16 %v429
    %v1584 = vunpack.c.l.b16 %v430
    %v1585 = vunpack.c.h.b16 %v430
    %v1586 = vunpack.c.l.b16 %v431
    %v1587 = vunpack.c.h.b16 %v431
    %v1588 = vunpack.c.l.b16 %v432
    %v1589 = vunpack.c.h.b16 %v432
    %v1590 = vunpack.c.l.b16 %v433
    %v1591 = vunpack.c.h.b16 %v433
    %v1592 = vunpack.c.l.b16 %v434
    %v1593 = vunpack.c.h.b16 %v434
    %v1594 = vunpack.c.l.b16 %v435
    %v1595 = vunpack.c.h.b16 %v435
    %v1596 = vunpack.c.l.b16 %v436
    %v1597 = vunpack.c.h.b16 %v436
    %v1598 = vunpack.c.l.b16 %v437
    %v1599 = vunpack.c.h.b16 %v437
    %v1600 = vunpack.c.l.b16 %v438
    %v1601 = vunpack.c.h.b16 %v438
    %v1602 = vunpack.c.l.b16 %v439
    %v1603 = vunpack.c.h.b16 %v439
    %v1604 = vunpack.c.l.b16 %v440
    %v1605 = vunpack.c.h.b16 %v440
    %v1606 = vunpack.c.l.b16 %v441
    %v1607 = vunpack.c.h.b16 %v441
    %v1608 = vunpack.c.l.b16 %v442
    %v1609 = vunpack.c.h.b16 %v442
    %v1610 = vunpack.c.l.b16 %v443
    %v1611 = vunpack.c.h.b16 %v443
    %v1612 = vunpack.c.l.b16 %v444
    %v1613 = vunpack.c.h.b16 %v444
    %v1614 = vunpack.c.l.b16 %v445
    %v1615 = vunpack.c.h.b16 %v445
    %v1616 = vunpack.c.l.b16 %v446
    %v1617 = vunpack.c.h.b16 %v446
    %v1618 = vunpack.c.l.b16 %v447
    %v1619 = vunpack.c.h.b16 %v447
    %v1620 = vunpack.c.l.b16 %v448
    %v1621 = vunpack.c.h.b16 %v448
    %v1622 = vunpack.c.l.b16 %v449
    %v1623 = vunpack.c.h.b16 %v449
    %v1624 = vunpack.c.l.b16 %v450
    %v1625 = vunpack.c.h.b16 %v450
    %v1626 = vunpack.c.l.b16 %v451
    %v1627 = vunpack.c.h.b16 %v451
    %v1628 = vunpack.c.l.b16 %v452
    %v1629 = vunpack.c.h.b16 %v452
    %v1630 = vunpack.c.l.b16 %v453
    %v1631 = vunpack.c.h.b16 %v453
    %v1632 = vunpack.c.l.b16 %v454
    %v1633 = vunpack.c.h.b16 %v454
    %v1634 = vunpack.c.l.b16 %v455
    %v1635 = vunpack.c.h.b16 %v455
    %v1636 = vunpack.c.l.b16 %v456
    %v1637 = vunpack.c.h.b16 %v456
    %v1638 = vunpack.c.l.b16 %v457
    %v1639 = vunpack.c.h.b16 %v457
    %v1640 = vunpack.c.l.b16 %v458
    %v1641 = vunpack.c.h.b16 %v458
    %v1642 = vunpack.c.l.b16 %v459
    %v1643 = vunpack.c.h.b16 %v459
    %v1644 = vunpack.c.l.b16 %v460
    %v1645 = vunpack.c.h.b16 %v460
    %v1646 = vunpack.c.l.b16 %v461
    %v1647 = vunpack.c.h.b16 %v461
    %v1648 = vunpack.c.l.b16 %v462
    %v1649 = vunpack.c.h.b16 %v462
    %v1650 = vunpack.c.l.b16 %v463
    %v1651 = vunpack.c.h.b16 %v463
    %v1652 = vunpack.c.l.b16 %v464
    %v1653 = vunpack.c.h.b16 %v464
    %v1654 = vunpack.c.l.b16 %v465
    %v1655 = vunpack.c.h.b16 %v465
    %v1656 = vunpack.c.l.b16 %v466
    %v1657 = vunpack.c.h.b16 %v466
    %v1658 = vunpack.c.l.b16 %v467
    %v1659 = vunpack.c.h.b16 %v467
    %v1660 = vunpack.c.l.b16 %v468
    %v1661 = vunpack.c.h.b16 %v468
    %v1662 = vunpack.c.l.b16 %v469
    %v1663 = vunpack.c.h.b16 %v469
    %v1664 = vunpack.c.l.b16 %v470
    %v1665 = vunpack.c.h.b16 %v470
    %v1666 = vunpack.c.l.b16 %v471
    %v1667 = vunpack.c.h.b16 %v471
    %v1668 = vunpack.c.l.b16 %v472
    %v1669 = vunpack.c.h.b16 %v472
    %v1670 = vunpack.c.l.b16 %v473
    %v1671 = vunpack.c.h.b16 %v473
    %v1672 = vunpack.c.l.b16 %v474
    %v1673 = vunpack.c.h.b16 %v474
    %v1674 = vunpack.c.l.b16 %v475
    %v1675 = vunpack.c.h.b16 %v475
    %v1676 = vunpack.c.l.b16 %v476
    %v1677 = vunpack.c.h.b16 %v476
    %v1678 = vunpack.c.l.b16 %v477
    %v1679 = vunpack.c.h.b16 %v477
    %v1680 = vunpack.c.l.b16 %v478
    %v1681 = vunpack.c.h.b16 %v478
    %v1682 = vunpack.c.l.b16 %v479
    %v1683 = vunpack.c.h.b16 %v479
    %v1684 = vunpack.c.l.b16 %v480
    %v1685 = vunpack.c.h.b16 %v480
    %v1686 = vunpack.c.l.b16 %v481
    %v1687 = vunpack.c.h.b16 %v481
    %v1688 = vunpack.c.l.b16 %v482
    %v1689 = vunpack.c.h.b16 %v482
    %v1690 = vunpack.c.l.b16 %v483
    %v1691 = vunpack.c.h.b16 %v483
    %v1692 = vunpack.c.l.b16 %v484
    %v1693 = vunpack.c.h.b16 %v484
    %v1694 = vunpack.c.l.b16 %v485
    %v1695 = vunpack.c.h.b16 %v485
    %v1696 = vunpack.c.l.b16 %v486
    %v1697 = vunpack.c.h.b16 %v486
    %v1698 = vunpack.c.l.b16 %v487
    %v1699 = vunpack.c.h.b16 %v487
    %v1700 = vunpack.c.l.b16 %v488
    %v1701 = vunpack.c.h.b16 %v488
    %v1702 = vunpack.c.l.b16 %v489
    %v1703 = vunpack.c.h.b16 %v489
    %v1704 = vunpack.c.l.b16 %v490
    %v1705 = vunpack.c.h.b16 %v490
    %v1706 = vunpack.c.l.b16 %v491
    %v1707 = vunpack.c.h.b16 %v491
    %v1708 = vunpack.c.l.b16 %v492
    %v1709 = vunpack.c.h.b16 %v492
    %v1710 = vunpack.c.l.b16 %v493
    %v1711 = vunpack.c.h.b16 %v493
    %v1712 = vunpack.c.l.b16 %v494
    %v1713 = vunpack.c.h.b16 %v494
    %v1714 = vunpack.c.l.b16 %v495
    %v1715 = vunpack.c.h.b16 %v495
    %v1716 = vunpack.c.l.b16 %v496
    %v1717 = vunpack.c.h.b16 %v496
    %v1718 = vunpack.c.l.b16 %v497
    %v1719 = vunpack.c.h.b16 %v497
    %v1720 = vunpack.c.l.b16 %v498
    %v1721 = vunpack.c.h.b16 %v498
    %v1722 = vunpack.c.l.b16 %v499
    %v1723 = vunpack.c.h.b16 %v499
    %v1724 = vunpack.c.l.b16 %v500
    %v1725 = vunpack.c.h.b16 %v500
    %v1726 = vunpack.c.l.b16 %v501
    %v1727 = vunpack.c.h.b16 %v501
    %v1728 = vunpack.c.l.b16 %v502
    %v1729 = vunpack.c.h.b16 %v502
    %v1730 = vunpack.c.l.b16 %v503
    %v1731 = vunpack.c.h.b16 %v503
    %v1732 = vunpack.c.l.b16 %v504
    %v1733 = vunpack.c.h.b16 %v504
    %v1734 = vunpack.c.l.b16 %v505
    %v1735 = vunpack.c.h.b16 %v505
    %v1736 = vunpack.c.l.b16 %v506
    %v1737 = vunpack.c.h.b16 %v506
    %v1738 = vunpack.c.l.b16 %v507
    %v1739 = vunpack.c.h.b16 %v507
    %v1740 = vunpack.c.l.b16 %v508
    %v1741 = vunpack.c.h.b16 %v508
    %v1742 = vunpack.c.l.b16 %v509
    %v1743 = vunpack.c.h.b16 %v509
    %v1744 = vunpack.c.l.b16 %v510
    %v1745 = vunpack.c.h.b16 %v510
    %v1746 = vunpack.c.l.b16 %v511
    %v1747 = vunpack.c.h.b16 %v511
    %v1748 = vunpack.c.l.b16 %v512
    %v1749 = vunpack.c.h.b16 %v512
    %v1750 = vunpack.c.l.b16 %v513
    %v1751 = vunpack.c.h.b16 %v513
    %v1752 = vunpack.c.l.b16 %v514
    %v1753 = vunpack.c.h.b16 %v514
    %v1754 = vunpack.c.l.b16 %v515
    %v1755 = vunpack.c.h.b16 %v515
    %v1756 = vunpack.c.l.b16 %v516
    %v1757 = vunpack.c.h.b16 %v516
    %v1758 = vunpack.c.l.b16 %v517
    %v1759 = vunpack.c.h.b16 %v517
    %v1760 = vunpack.c.l.b16 %v518
    %v1761 = vunpack.c.h.b16 %v518
    %v1762 = vunpack.c.l.b16 %v519
    %v1763 = vunpack.c.h.b16 %v519
    %v1764 = vunpack.c.l.b16 %v520
    %v1765 = vunpack.c.h.b16 %v520
    %v1766 = vunpack.c.l.b16 %v521
    %v1767 = vunpack.c.h.b16 %v521
    %v1768 = vunpack.c.l.b16 %v522
    %v1769 = vunpack.c.h.b16 %v522
    %v1770 = vpack.c.b16 %v1004, %v1002
    %v1771 = vpack.c.b16 %v1005, %v1003
    %v1772 = vpack.c.b16 %v1008, %v1006
    %v1773 = vpack.c.b16 %v1009, %v1007
    %v1774 = vpack.c.b16 %v1012, %v1010
    %v1775 = vpack.c.b16 %v1013, %v1011
    %v1776 = vpack.c.b16 %v1016, %v1014
    %v1777 = vpack.c.b16 %v1017, %v1015
    %v1778 = vpack.c.b16 %v1020, %v1018
    %v1779 = vpack.c.b16 %v1021, %v1019
    %v1780 = vpack.c.b16 %v1024, %v1022
    %v1781 = vpack.c.b16 %v1025, %v1023
    %v1782 = vpack.c.b16 %v1028, %v1026
    %v1783 = vpack.c.b16 %v1029, %v1027
    %v1784 = vpack.c.b16 %v1032, %v1030
    %v1785 = vpack.c.b16 %v1033, %v1031
    %v1786 = vpack.c.b16 %v1036, %v1034
    %v1787 = vpack.c.b16 %v1037, %v1035
    %v1788 = vpack.c.b16 %v1040, %v1038
    %v1789 = vpack.c.b16 %v1041, %v1039
    %v1790 = vpack.c.b16 %v1044, %v1042
    %v1791 = vpack.c.b16 %v1045, %v1043
    %v1792 = vpack.c.b16 %v1048, %v1046
    %v1793 = vpack.c.b16 %v1049, %v1047
    %v1794 = vpack.c.b16 %v1052, %v1050
    %v1795 = vpack.c.b16 %v1053, %v1051
    %v1796 = vpack.c.b16 %v1056, %v1054
    %v1797 = vpack.c.b16 %v1057, %v1055
    %v1798 = vpack.c.b16 %v1060, %v1058
    %v1799 = vpack.c.b16 %v1061, %v1059
    %v1800 = vpack.c.b16 %v1064, %v1062
    %v1801 = vpack.c.b16 %v1065, %v1063
    %v1802 = vpack.c.b16 %v1068, %v1066
    %v1803 = vpack.c.b16 %v1069, %v1067
    %v1804 = vpack.c.b16 %v1072, %v1070
    %v1805 = vpack.c.b16 %v1073, %v1071
    %v1806 = vpack.c.b16 %v1076, %v1074
    %v1807 = vpack.c.b16 %v1077, %v1075
    %v1808 = vpack.c.b16 %v1080, %v1078
    %v1809 = vpack.c.b16 %v1081, %v1079
    %v1810 = vpack.c.b16 %v1084, %v1082
    %v1811 = vpack.c.b16 %v1085, %v1083
    %v1812 = vpack.c.b16 %v1088, %v1086
    %v1813 = vpack.c.b16 %v1089, %v1087
    %v1814 = vpack.c.b16 %v1092, %v1090
    %v1815 = vpack.c.b16 %v1093, %v1091
    %v1816 = vpack.c.b16 %v1096, %v1094
    %v1817 = vpack.c.b16 %v1097, %v1095
    %v1818 = vpack.c.b16 %v1100, %v1098
    %v1819 = vpack.c.b16 %v1101, %v1099
    %v1820 = vpack.c.b16 %v1104, %v1102
    %v1821 = vpack.c.b16 %v1105, %v1103
    %v1822 = vpack.c.b16 %v1108, %v1106
    %v1823 = vpack.c.b16 %v1109, %v1107
    %v1824 = vpack.c.b16 %v1112, %v1110
    %v1825 = vpack.c.b16 %v1113, %v1111
    %v1826 = vpack.c.b16 %v1116, %v1114
    %v1827 = vpack.c.b16 %v1117, %v1115
    %v1828 = vpack.c.b16 %v1120, %v1118
    %v1829 = vpack.c.b16 %v1121, %v1119
    %v1830 = vpack.c.b16 %v1124, %v1122
    %v1831 = vpack.c.b16 %v1125, %v1123
    %v1832 = vpack.c.b16 %v1128, %v1126
    %v1833 = vpack.c.b16 %v1129, %v1127
    %v1834 = vpack.c.b16 %v1132, %v1130
    %v1835 = vpack.c.b16 %v1133, %v1131
    %v1836 = vpack.c.b16 %v1136, %v1134
    %v1837 = vpack.c.b16 %v1137, %v1135
    %v1838 = vpack.c.b16 %v1140, %v1138
    %v1839 = vpack.c.b16 %v1141, %v1139
    %v1840 = vpack.c.b16 %v1144, %v1142
    %v1841 = vpack.c.b16 %v1145, %v1143
    %v1842 = vpack.c.b16 %v1148, %v1146
    %v1843 = vpack.c.b16 %v1149, %v1147
    %v1844 = vpack.c.b16 %v1152, %v1150
    %v1845 = vpack.c.b16 %v1153, %v1151
    %v1846 = vpack.c.b16 %v1156, %v1154
    %v1847 = vpack.c.b16 %v1157, %v1155
    %v1848 = vpack.c.b16 %v1160, %v1158
    %v1849 = vpack.c.b16 %v1161, %v1159
    %v1850 = vpack.c.b16 %v1164, %v1162
    %v1851 = vpack.c.b16 %v1165, %v1163
    %v1852 = vpack.c.b16 %v1168, %v1166
    %v1853 = vpack.c.b16 %v1169, %v1167
    %v1854 = vpack.c.b16 %v1172, %v1170
    %v1855 = vpack.c.b16 %v1173, %v1171
    %v1856 = vpack.c.b16 %v1176, %v1174
    %v1857 = vpack.c.b16 %v1177, %v1175
    %v1858 = vpack.c.b16 %v1180, %v1178
    %v1859 = vpack.c.b16 %v1181, %v1179
    %v1860 = vpack.c.b16 %v1184, %v1182
    %v1861 = vpack.c.b16 %v1185, %v1183
    %v1862 = vpack.c.b16 %v1188, %v1186
    %v1863 = vpack.c.b16 %v1189, %v1187
    %v1864 = vpack.c.b16 %v1192, %v1190
    %v1865 = vpack.c.b16 %v1193, %v1191
    %v1866 = vpack.c.b16 %v1196, %v1194
    %v1867 = vpack.c.b16 %v1197, %v1195
    %v1868 = vpack.c.b16 %v1200, %v1198
    %v1869 = vpack.c.b16 %v1201, %v1199
    %v1870 = vpack.c.b16 %v1204, %v1202
    %v1871 = vpack.c.b16 %v1205, %v1203
    %v1872 = vpack.c.b16 %v1208, %v1206
    %v1873 = vpack.c.b16 %v1209, %v1207
    %v1874 = vpack.c.b16 %v1212, %v1210
    %v1875 = vpack.c.b16 %v1213, %v1211
    %v1876 = vpack.c.b16 %v1216, %v1214
    %v1877 = vpack.c.b16 %v1217, %v1215
    %v1878 = vpack.c.b16 %v1220, %v1218
    %v1879 = vpack.c.b16 %v1221, %v1219
    %v1880 = vpack.c.b16 %v1224, %v1222
    %v1881 = vpack.c.b16 %v1225, %v1223
    %v1882 = vpack.c.b16 %v1228, %v1226
    %v1883 = vpack.c.b16 %v1229, %v1227
    %v1884 = vpack.c.b16 %v1232, %v1230
    %v1885 = vpack.c.b16 %v1233, %v1231
    %v1886 = vpack.c.b16 %v1236, %v1234
    %v1887 = vpack.c.b16 %v1237, %v1235
    %v1888 = vpack.c.b16 %v1240, %v1238
    %v1889 = vpack.c.b16 %v1241, %v1239
    %v1890 = vpack.c.b16 %v1244, %v1242
    %v1891 = vpack.c.b16 %v1245, %v1243
    %v1892 = vpack.c.b16 %v1248, %v1246
    %v1893 = vpack.c.b16 %v1249, %v1247
    %v1894 = vpack.c.b16 %v1252, %v1250
    %v1895 = vpack.c.b16 %v1253, %v1251
    %v1896 = vpack.c.b16 %v1256, %v1254
    %v1897 = vpack.c.b16 %v1257, %v1255
    %v1898 = vpack.c.b16 %v1260, %v1258
    %v1899 = vpack.c.b16 %v1261, %v1259
    %v1900 = vpack.c.b16 %v1264, %v1262
    %v1901 = vpack.c.b16 %v1265, %v1263
    %v1902 = vpack.c.b16 %v1268, %v1266
    %v1903 = vpack.c.b16 %v1269, %v1267
    %v1904 = vpack.c.b16 %v1272, %v1270
    %v1905 = vpack.c.b16 %v1273, %v1271
    %v1906 = vpack.c.b16 %v1276, %v1274
    %v1907 = vpack.c.b16 %v1277, %v1275
    %v1908 = vpack.c.b16 %v1280, %v1278
    %v1909 = vpack.c.b16 %v1281, %v1279
    %v1910 = vpack.c.b16 %v1284, %v1282
    %v1911 = vpack.c.b16 %v1285, %v1283
    %v1912 = vpack.c.b16 %v1288, %v1286
    %v1913 = vpack.c.b16 %v1289, %v1287
    %v1914 = vpack.c.b16 %v1292, %v1290
    %v1915 = vpack.c.b16 %v1293, %v1291
    %v1916 = vpack.c.b16 %v1296, %v1294
    %v1917 = vpack.c.b16 %v1297, %v1295
    %v1918 = vpack.c.b16 %v1300, %v1298
    %v1919 = vpack.c.b16 %v1301, %v1299
    %v1920 = vpack.c.b16 %v1304, %v1302
    %v1921 = vpack.c.b16 %v1305, %v1303
    %v1922 = vpack.c.b16 %v1308, %v1306
    %v1923 = vpack.c.b16 %v1309, %v1307
    %v1924 = vpack.c.b16 %v1312, %v1310
    %v1925 = vpack.c.b16 %v1313, %v1311
    %v1926 = vpack.c.b16 %v1316, %v1314
    %v1927 = vpack.c.b16 %v1317, %v1315
    %v1928 = vpack.c.b16 %v1320, %v1318
    %v1929 = vpack.c.b16 %v1321, %v1319
    %v1930 = vpack.c.b16 %v1324, %v1322
    %v1931 = vpack.c.b16 %v1325, %v1323
    %v1932 = vpack.c.b16 %v1328, %v1326
    %v1933 = vpack.c.b16 %v1329, %v1327
    %v1934 = vpack.c.b16 %v1332, %v1330
    %v1935 = vpack.c.b16 %v1333, %v1331
    %v1936 = vpack.c.b16 %v1336, %v1334
    %v1937 = vpack.c.b16 %v1337, %v1335
    %v1938 = vpack.c.b16 %v1340, %v1338
    %v1939 = vpack.c.b16 %v1341, %v1339
    %v1940 = vpack.c.b16 %v1344, %v1342
    %v1941 = vpack.c.b16 %v1345, %v1343
    %v1942 = vpack.c.b16 %v1348, %v1346
    %v1943 = vpack.c.b16 %v1349, %v1347
    %v1944 = vpack.c.b16 %v1352, %v1350
    %v1945 = vpack.c.b16 %v1353, %v1351
    %v1946 = vpack.c.b16 %v1356, %v1354
    %v1947 = vpack.c.b16 %v1357, %v1355
    %v1948 = vpack.c.b16 %v1360, %v1358
    %v1949 = vpack.c.b16 %v1361, %v1359
    %v1950 = vpack.c.b16 %v1364, %v1362
    %v1951 = vpack.c.b16 %v1365, %v1363
    %v1952 = vpack.c.b16 %v1368, %v1366
    %v1953 = vpack.c.b16 %v1369, %v1367
    %v1954 = vpack.c.b16 %v1372, %v1370
    %v1955 = vpack.c.b16 %v1373, %v1371
    %v1956 = vpack.c.b16 %v1376, %v1374
    %v1957 = vpack.c.b16 %v1377, %v1375
    %v1958 = vpack.c.b16 %v1380, %v1378
    %v1959 = vpack.c.b16 %v1381, %v1379
    %v1960 = vpack.c.b16 %v1384, %v1382
    %v1961 = vpack.c.b16 %v1385, %v1383
    %v1962 = vpack.c.b16 %v1388, %v1386
    %v1963 = vpack.c.b16 %v1389, %v1387
    %v1964 = vpack.c.b16 %v1392, %v1390
    %v1965 = vpack.c.b16 %v1393, %v1391
    %v1966 = vpack.c.b16 %v1396, %v1394
    %v1967 = vpack.c.b16 %v1397, %v1395
    %v1968 = vpack.c.b16 %v1400, %v1398
    %v1969 = vpack.c.b16 %v1401, %v1399
    %v1970 = vpack.c.b16 %v1404, %v1402
    %v1971 = vpack.c.b16 %v1405, %v1403
    %v1972 = vpack.c.b16 %v1408, %v1406
    %v1973 = vpack.c.b16 %v1409, %v1407
    %v1974 = vpack.c.b16 %v1412, %v1410
    %v1975 = vpack.c.b16 %v1413, %v1411
    %v1976 = vpack.c.b16 %v1416, %v1414
    %v1977 = vpack.c.b16 %v1417, %v1415
    %v1978 = vpack.c.b16 %v1420, %v1418
    %v1979 = vpack.c.b16 %v1421, %v1419
    %v1980 = vpack.c.b16 %v1424, %v1422
    %v1981 = vpack.c.b16 %v1425, %v1423
    %v1982 = vpack.c.b16 %v1428, %v1426
    %v1983 = vpack.c.b16 %v1429, %v1427
    %v1984 = vpack.c.b16 %v1432, %v1430
    %v1985 = vpack.c.b16 %v1433, %v1431
    %v1986 = vpack.c.b16 %v1436, %v1434
    %v1987 = vpack.c.b16 %v1437, %v1435
    %v1988 = vpack.c.b16 %v1440, %v1438
    %v1989 = vpack.c.b16 %v1441, %v1439
    %v1990 = vpack.c.b16 %v1444, %v1442
    %v1991 = vpack.c.b16 %v1445, %v1443
    %v1992 = vpack.c.b16 %v1448, %v1446
    %v1993 = vpack.c.b16 %v1449, %v1447
    %v1994 = vpack.c.b16 %v1452, %v1450
    %v1995 = vpack.c.b16 %v1453, %v1451
    %v1996 = vpack.c.b16 %v1456, %v1454
    %v1997 = vpack.c.b16 %v1457, %v1455
    %v1998 = vpack.c.b16 %v1460, %v1458
    %v1999 = vpack.c.b16 %v1461, %v1459
    %v2000 = vpack.c.b16 %v1464, %v1462
    %v2001 = vpack.c.b16 %v1465, %v1463
    %v2002 = vpack.c.b16 %v1468, %v1466
    %v2003 = vpack.c.b16 %v1469, %v1467
    %v2004 = vpack.c.b16 %v1472, %v1470
    %v2005 = vpack.c.b16 %v1473, %v1471
    %v2006 = vpack.c.b16 %v1476, %v1474
    %v2007 = vpack.c.b16 %v1477, %v1475
    %v2008 = vpack.c.b16 %v1480, %v1478
    %v2009 = vpack.c.b16 %v1481, %v1479
    %v2010 = vpack.c.b16 %v1484, %v1482
    %v2011 = vpack.c.b16 %v1485, %v1483
    %v2012 = vpack.c.b16 %v1488, %v1486
    %v2013 = vpack.c.b16 %v1489, %v1487
    %v2014 = vpack.c.b16 %v1492, %v1490
    %v2015 = vpack.c.b16 %v1493, %v1491
    %v2016 = vpack.c.b16 %v1496, %v1494
    %v2017 = vpack.c.b16 %v1497, %v1495
    %v2018 = vpack.c.b16 %v1500, %v1498
    %v2019 = vpack.c.b16 %v1501, %v1499
    %v2020 = vpack.c.b16 %v1504, %v1502
    %v2021 = vpack.c.b16 %v1505, %v1503
    %v2022 = vpack.c.b16 %v1508, %v1506
    %v2023 = vpack.c.b16 %v1509, %v1507
    %v2024 = vpack.c.b16 %v1512, %v1510
    %v2025 = vpack.c.b16 %v1513, %v1511
    %v2026 = vpack.c.b16 %v1516, %v1514
    %v2027 = vpack.c.b16 %v1517, %v1515
    %v2028 = vpack.c.b16 %v1520, %v1518
    %v2029 = vpack.c.b16 %v1521, %v1519
    %v2030 = vpack.c.b16 %v1524, %v1522
    %v2031 = vpack.c.b16 %v1525, %v1523
    %v2032 = vpack.c.b16 %v1528, %v1526
    %v2033 = vpack.c.b16 %v1529, %v1527
    %v2034 = vpack.c.b16 %v1532, %v1530
    %v2035 = vpack.c.b16 %v1533, %v1531
    %v2036 = vpack.c.b16 %v1536, %v1534
    %v2037 = vpack.c.b16 %v1537, %v1535
    %v2038 = vpack.c.b16 %v1540, %v1538
    %v2039 = vpack.c.b16 %v1541, %v1539
    %v2040 = vpack.c.b16 %v1544, %v1542
    %v2041 = vpack.c.b16 %v1545, %v1543
    %v2042 = vpack.c.b16 %v1548, %v1546
    %v2043 = vpack.c.b16 %v1549, %v1547
    %v2044 = vpack.c.b16 %v1552, %v1550
    %v2045 = vpack.c.b16 %v1553, %v1551
    %v2046 = vpack.c.b16 %v1556, %v1554
    %v2047 = vpack.c.b16 %v1557, %v1555
    %v2048 = vpack.c.b16 %v1560, %v1558
    %v2049 = vpack.c.b16 %v1561, %v1559
    %v2050 = vpack.c.b16 %v1564, %v1562
    %v2051 = vpack.c.b16 %v1565, %v1563
    %v2052 = vpack.c.b16 %v1568, %v1566
    %v2053 = vpack.c.b16 %v1569, %v1567
    %v2054 = vpack.c.b16 %v1572, %v1570
    %v2055 = vpack.c.b16 %v1573, %v1571
    %v2056 = vpack.c.b16 %v1576, %v1574
    %v2057 = vpack.c.b16 %v1577, %v1575
    %v2058 = vpack.c.b16 %v1580, %v1578
    %v2059 = vpack.c.b16 %v1581, %v1579
    %v2060 = vpack.c.b16 %v1584, %v1582
    %v2061 = vpack.c.b16 %v1585, %v1583
    %v2062 = vpack.c.b16 %v1588, %v1586
    %v2063 = vpack.c.b16 %v1589, %v1587
    %v2064 = vpack.c.b16 %v1592, %v1590
    %v2065 = vpack.c.b16 %v1593, %v1591
    %v2066 = vpack.c.b16 %v1596, %v1594
    %v2067 = vpack.c.b16 %v1597, %v1595
    %v2068 = vpack.c.b16 %v1600, %v1598
    %v2069 = vpack.c.b16 %v1601, %v1599
    %v2070 = vpack.c.b16 %v1604, %v1602
    %v2071 = vpack.c.b16 %v1605, %v1603
    %v2072 = vpack.c.b16 %v1608, %v1606
    %v2073 = vpack.c.b16 %v1609, %v1607
    %v2074 = vpack.c.b16 %v1612, %v1610
    %v2075 = vpack.c.b16 %v1613, %v1611
    %v2076 = vpack.c.b16 %v1616, %v1614
    %v2077 = vpack.c.b16 %v1617, %v1615
    %v2078 = vpack.c.b16 %v1620, %v1618
    %v2079 = vpack.c.b16 %v1621, %v1619
    %v2080 = vpack.c.b16 %v1624, %v1622
    %v2081 = vpack.c.b16 %v1625, %v1623
    %v2082 = vpack.c.b16 %v1628, %v1626
    %v2083 = vpack.c.b16 %v1629, %v1627
    %v2084 = vpack.c.b16 %v1632, %v1630
    %v2085 = vpack.c.b16 %v1633, %v1631
    %v2086 = vpack.c.b16 %v1636, %v1634
    %v2087 = vpack.c.b16 %v1637, %v1635
    %v2088 = vpack.c.b16 %v1640, %v1638
    %v2089 = vpack.c.b16 %v1641, %v1639
    %v2090 = vpack.c.b16 %v1644, %v1642
    %v2091 = vpack.c.b16 %v1645, %v1643
    %v2092 = vpack.c.b16 %v1648, %v1646
    %v2093 = vpack.c.b16 %v1649, %v1647
    %v2094 = vpack.c.b16 %v1652, %v1650
    %v2095 = vpack.c.b16 %v1653, %v1651
    %v2096 = vpack.c.b16 %v1656, %v1654
    %v2097 = vpack.c.b16 %v1657, %v1655
    %v2098 = vpack.c.b16 %v1660, %v1658
    %v2099 = vpack.c.b16 %v1661, %v1659
    %v2100 = vpack.c.b16 %v1664, %v1662
    %v2101 = vpack.c.b16 %v1665, %v1663
    %v2102 = vpack.c.b16 %v1668, %v1666
    %v2103 = vpack.c.b16 %v1669, %v1667
    %v2104 = vpack.c.b16 %v1672, %v1670
    %v2105 = vpack.c.b16 %v1673, %v1671
    %v2106 = vpack.c.b16 %v1676, %v1674
    %v2107 = vpack.c.b16 %v1677, %v1675
    %v2108 = vpack.c.b16 %v1680, %v1678
    %v2109 = vpack.c.b16 %v1681, %v1679
    %v2110 = vpack.c.b16 %v1684, %v1682
    %v2111 = vpack.c.b16 %v1685, %v1683
    %v2112 = vpack.c.b16 %v1688, %v1686
    %v2113 = vpack.c.b16 %v1689, %v1687
    %v2114 = vpack.c.b16 %v1692, %v1690
    %v2115 = vpack.c.b16 %v1693, %v1691
    %v2116 = vpack.c.b16 %v1696, %v1694
    %v2117 = vpack.c.b16 %v1697, %v1695
    %v2118 = vpack.c.b16 %v1700, %v1698
    %v2119 = vpack.c.b16 %v1701, %v1699
    %v2120 = vpack.c.b16 %v1704, %v1702
    %v2121 = vpack.c.b16 %v1705, %v1703
    %v2122 = vpack.c.b16 %v1708, %v1706
    %v2123 = vpack.c.b16 %v1709, %v1707
    %v2124 = vpack.c.b16 %v1712, %v1710
    %v2125 = vpack.c.b16 %v1713, %v1711
    %v2126 = vpack.c.b16 %v1716, %v1714
    %v2127 = vpack.c.b16 %v1717, %v1715
    %v2128 = vpack.c.b16 %v1720, %v1718
    %v2129 = vpack.c.b16 %v1721, %v1719
    %v2130 = vpack.c.b16 %v1724, %v1722
    %v2131 = vpack.c.b16 %v1725, %v1723
    %v2132 = vpack.c.b16 %v1728, %v1726
    %v2133 = vpack.c.b16 %v1729, %v1727
    %v2134 = vpack.c.b16 %v1732, %v1730
    %v2135 = vpack.c.b16 %v1733, %v1731
    %v2136 = vpack.c.b16 %v1736, %v1734
    %v2137 = vpack.c.b16 %v1737, %v1735
    %v2138 = vpack.c.b16 %v1740, %v1738
    %v2139 = vpack.c.b16 %v1741, %v1739
    %v2140 = vpack.c.b16 %v1744, %v1742
    %v2141 = vpack.c.b16 %v1745, %v1743
    %v2142 = vpack.c.b16 %v1748, %v1746
    %v2143 = vpack.c.b16 %v1749, %v1747
    %v2144 = vpack.c.b16 %v1752, %v1750
    %v2145 = vpack.c.b16 %v1753, %v1751
    %v2146 = vpack.c.b16 %v1756, %v1754
    %v2147 = vpack.c.b16 %v1757, %v1755
    %v2148 = vpack.c.b16 %v1760, %v1758
    %v2149 = vpack.c.b16 %v1761, %v1759
    %v2150 = vpack.c.b16 %v1764, %v1762
    %v2151 = vpack.c.b16 %v1765, %v1763
    %v2152 = vpack.c.b16 %v1768, %v1766
    %v2153 = vpack.c.b16 %v1769, %v1767
    %2538 = vmatprep.subr.bf16.mxu0 %v1771
    %2539 = vmatpush1.bf16.msra.mxu0 %v1770
    %2540 = vmatprep.subr.bf16.mxu0 %v1773
    %2541 = vmatpush1.bf16.msra.mxu0 %v1772
    %2542 = vmatprep.subr.bf16.mxu0 %v1775
    %2543 = vmatpush1.bf16.msra.mxu0 %v1774
    %2544 = vmatprep.subr.bf16.mxu0 %v1777
    %2545 = vmatpush1.bf16.msra.mxu0 %v1776
    %2546 = vmatprep.subr.bf16.mxu0 %v1779
    %2547 = vmatpush1.bf16.msra.mxu0 %v1778
    %2548 = vmatprep.subr.bf16.mxu0 %v1781
    %2549 = vmatpush1.bf16.msra.mxu0 %v1780
    %2550 = vmatprep.subr.bf16.mxu0 %v1783
    %2551 = vmatpush1.bf16.msra.mxu0 %v1782
    %2552 = vmatprep.subr.bf16.mxu0 %v1785
    %2553 = vmatpush1.bf16.msra.mxu0 %v1784
    %2554 = vmatprep.subr.bf16.mxu0 %v1787
    %2555 = vmatpush1.bf16.msra.mxu0 %v1786
    %2556 = vmatprep.subr.bf16.mxu0 %v1789
    %2557 = vmatpush1.bf16.msra.mxu0 %v1788
    %2558 = vmatprep.subr.bf16.mxu0 %v1791
    %2559 = vmatpush1.bf16.msra.mxu0 %v1790
    %2560 = vmatprep.subr.bf16.mxu0 %v1793
    %2561 = vmatpush1.bf16.msra.mxu0 %v1792
    %2562 = vmatprep.subr.bf16.mxu0 %v1795
    %2563 = vmatpush1.bf16.msra.mxu0 %v1794
    %2564 = vmatprep.subr.bf16.mxu0 %v1797
    %2565 = vmatpush1.bf16.msra.mxu0 %v1796
    %2566 = vmatprep.subr.bf16.mxu0 %v1799
    %2567 = vmatpush1.bf16.msra.mxu0 %v1798
    %2568 = vmatprep.subr.bf16.mxu0 %v1801
    %2569 = vmatpush1.bf16.msra.mxu0 %v1800
    %2570 = vmatprep.mubr.bf16.mxu0 %v571
    %2571 = vmatmul.mubr.bf16.gmra.mrb[0].mxu0 %v570
    %v2572 = vpop.f32.mrb[0].mxu0
    %v2573 = vadd.f32 %v527, %v2572
    %v2574 = vpop.f32.mrb[0].mxu0
    %v2575 = vadd.f32 %v531, %v2574
    %v2576 = vpop.f32.mrb[0].mxu0
    %v2577 = vpop.f32.mrb[0].mxu0
    %2578 = vdwg.mxu0
    %2579 = vmatprep.subr.bf16.mxu0 %v1803
    %2580 = vmatpush1.bf16.msra.mxu0 %v1802
    %2581 = vmatprep.subr.bf16.mxu0 %v1805
    %2582 = vmatpush1.bf16.msra.mxu0 %v1804
    %2583 = vmatprep.subr.bf16.mxu0 %v1807
    %2584 = vmatpush1.bf16.msra.mxu0 %v1806
    %2585 = vmatprep.subr.bf16.mxu0 %v1809
    %2586 = vmatpush1.bf16.msra.mxu0 %v1808
    %2587 = vmatprep.subr.bf16.mxu0 %v1811
    %2588 = vmatpush1.bf16.msra.mxu0 %v1810
    %2589 = vmatprep.subr.bf16.mxu0 %v1813
    %2590 = vmatpush1.bf16.msra.mxu0 %v1812
    %2591 = vmatprep.subr.bf16.mxu0 %v1815
    %2592 = vmatpush1.bf16.msra.mxu0 %v1814
    %2593 = vmatprep.subr.bf16.mxu0 %v1817
    %2594 = vmatpush1.bf16.msra.mxu0 %v1816
    %2595 = vmatprep.subr.bf16.mxu0 %v1819
    %2596 = vmatpush1.bf16.msra.mxu0 %v1818
    %2597 = vmatprep.subr.bf16.mxu0 %v1821
    %2598 = vmatpush1.bf16.msra.mxu0 %v1820
    %2599 = vmatprep.subr.bf16.mxu0 %v1823
    %2600 = vmatpush1.bf16.msra.mxu0 %v1822
    %2601 = vmatprep.subr.bf16.mxu0 %v1825
    %2602 = vmatpush1.bf16.msra.mxu0 %v1824
    %2603 = vmatprep.subr.bf16.mxu0 %v1827
    %2604 = vmatpush1.bf16.msra.mxu0 %v1826
    %2605 = vmatprep.subr.bf16.mxu0 %v1829
    %2606 = vmatpush1.bf16.msra.mxu0 %v1828
    %2607 = vmatprep.subr.bf16.mxu0 %v1831
    %2608 = vmatpush1.bf16.msra.mxu0 %v1830
    %2609 = vmatprep.subr.bf16.mxu0 %v1833
    %2610 = vmatpush1.bf16.msra.mxu0 %v1832
    %2611 = vmatprep.mubr.bf16.mxu0 %v573
    %2612 = vmatmul.mubr.bf16.gmra.mrb[0].mxu0 %v572
    %v2613 = vpop.f32.mrb[0].mxu0
    %v2614 = vadd.f32 %v2573, %v2613
    %v2615 = vpop.f32.mrb[0].mxu0
    %v2616 = vadd.f32 %v2575, %v2615
    %v2617 = vpop.f32.mrb[0].mxu0
    %v2618 = vpop.f32.mrb[0].mxu0
    %2619 = vdwg.mxu0
    %2620 = vmatprep.subr.bf16.mxu0 %v1835
    %2621 = vmatpush1.bf16.msra.mxu0 %v1834
    %2622 = vmatprep.subr.bf16.mxu0 %v1837
    %2623 = vmatpush1.bf16.msra.mxu0 %v1836
    %2624 = vmatprep.subr.bf16.mxu0 %v1839
    %2625 = vmatpush1.bf16.msra.mxu0 %v1838
    %2626 = vmatprep.subr.bf16.mxu0 %v1841
    %2627 = vmatpush1.bf16.msra.mxu0 %v1840
    %2628 = vmatprep.subr.bf16.mxu0 %v1843
    %2629 = vmatpush1.bf16.msra.mxu0 %v1842
    %2630 = vmatprep.subr.bf16.mxu0 %v1845
    %2631 = vmatpush1.bf16.msra.mxu0 %v1844
    %2632 = vmatprep.subr.bf16.mxu0 %v1847
    %2633 = vmatpush1.bf16.msra.mxu0 %v1846
    %2634 = vmatprep.subr.bf16.mxu0 %v1849
    %2635 = vmatpush1.bf16.msra.mxu0 %v1848
    %2636 = vmatprep.subr.bf16.mxu0 %v1851
    %2637 = vmatpush1.bf16.msra.mxu0 %v1850
    %2638 = vmatprep.subr.bf16.mxu0 %v1853
    %2639 = vmatpush1.bf16.msra.mxu0 %v1852
    %2640 = vmatprep.subr.bf16.mxu0 %v1855
    %2641 = vmatpush1.bf16.msra.mxu0 %v1854
    %2642 = vmatprep.subr.bf16.mxu0 %v1857
    %2643 = vmatpush1.bf16.msra.mxu0 %v1856
    %2644 = vmatprep.subr.bf16.mxu0 %v1859
    %2645 = vmatpush1.bf16.msra.mxu0 %v1858
    %2646 = vmatprep.subr.bf16.mxu0 %v1861
    %2647 = vmatpush1.bf16.msra.mxu0 %v1860
    %2648 = vmatprep.subr.bf16.mxu0 %v1863
    %2649 = vmatpush1.bf16.msra.mxu0 %v1862
    %2650 = vmatprep.subr.bf16.mxu0 %v1865
    %2651 = vmatpush1.bf16.msra.mxu0 %v1864
    %2652 = vmatprep.mubr.bf16.mxu0 %v575
    %2653 = vmatmul.mubr.bf16.gmra.mrb[0].mxu0 %v574
    %v2654 = vpop.f32.mrb[0].mxu0
    %v2655 = vadd.f32 %v2614, %v2654
    %v2656 = vpop.f32.mrb[0].mxu0
    %v2657 = vadd.f32 %v2616, %v2656
    %v2658 = vpop.f32.mrb[0].mxu0
    %v2659 = vpop.f32.mrb[0].mxu0
    %2660 = vdwg.mxu0
    %2661 = vmatprep.subr.bf16.mxu0 %v1867
    %2662 = vmatpush1.bf16.msra.mxu0 %v1866
    %2663 = vmatprep.subr.bf16.mxu0 %v1869
    %2664 = vmatpush1.bf16.msra.mxu0 %v1868
    %2665 = vmatprep.subr.bf16.mxu0 %v1871
    %2666 = vmatpush1.bf16.msra.mxu0 %v1870
    %2667 = vmatprep.subr.bf16.mxu0 %v1873
    %2668 = vmatpush1.bf16.msra.mxu0 %v1872
    %2669 = vmatprep.subr.bf16.mxu0 %v1875
    %2670 = vmatpush1.bf16.msra.mxu0 %v1874
    %2671 = vmatprep.subr.bf16.mxu0 %v1877
    %2672 = vmatpush1.bf16.msra.mxu0 %v1876
    %2673 = vmatprep.subr.bf16.mxu0 %v1879
    %2674 = vmatpush1.bf16.msra.mxu0 %v1878
    %2675 = vmatprep.subr.bf16.mxu0 %v1881
    %2676 = vmatpush1.bf16.msra.mxu0 %v1880
    %2677 = vmatprep.subr.bf16.mxu0 %v1883
    %2678 = vmatpush1.bf16.msra.mxu0 %v1882
    %2679 = vmatprep.subr.bf16.mxu0 %v1885
    %2680 = vmatpush1.bf16.msra.mxu0 %v1884
    %2681 = vmatprep.subr.bf16.mxu0 %v1887
    %2682 = vmatpush1.bf16.msra.mxu0 %v1886
    %2683 = vmatprep.subr.bf16.mxu0 %v1889
    %2684 = vmatpush1.bf16.msra.mxu0 %v1888
    %2685 = vmatprep.subr.bf16.mxu0 %v1891
    %2686 = vmatpush1.bf16.msra.mxu0 %v1890
    %2687 = vmatprep.subr.bf16.mxu0 %v1893
    %2688 = vmatpush1.bf16.msra.mxu0 %v1892
    %2689 = vmatprep.subr.bf16.mxu0 %v1895
    %2690 = vmatpush1.bf16.msra.mxu0 %v1894
    %2691 = vmatprep.subr.bf16.mxu0 %v1897
    %2692 = vmatpush1.bf16.msra.mxu0 %v1896
    %2693 = vmatprep.mubr.bf16.mxu0 %v577
    %2694 = vmatmul.mubr.bf16.gmra.mrb[0].mxu0 %v576
    %v2695 = vpop.f32.mrb[0].mxu0
    %v2696 = vadd.f32 %v2655, %v2695
    %v2697 = vpop.f32.mrb[0].mxu0
    %v2698 = vadd.f32 %v2657, %v2697
    %v2699 = vpop.f32.mrb[0].mxu0
    %v2700 = vpop.f32.mrb[0].mxu0
    %2701 = vdwg.mxu0
    %2702 = vmatprep.subr.bf16.mxu0 %v1899
    %2703 = vmatpush1.bf16.msra.mxu0 %v1898
    %2704 = vmatprep.subr.bf16.mxu0 %v1901
    %2705 = vmatpush1.bf16.msra.mxu0 %v1900
    %2706 = vmatprep.subr.bf16.mxu0 %v1903
    %2707 = vmatpush1.bf16.msra.mxu0 %v1902
    %2708 = vmatprep.subr.bf16.mxu0 %v1905
    %2709 = vmatpush1.bf16.msra.mxu0 %v1904
    %2710 = vmatprep.subr.bf16.mxu0 %v1907
    %2711 = vmatpush1.bf16.msra.mxu0 %v1906
    %2712 = vmatprep.subr.bf16.mxu0 %v1909
    %2713 = vmatpush1.bf16.msra.mxu0 %v1908
    %2714 = vmatprep.subr.bf16.mxu0 %v1911
    %2715 = vmatpush1.bf16.msra.mxu0 %v1910
    %2716 = vmatprep.subr.bf16.mxu0 %v1913
    %2717 = vmatpush1.bf16.msra.mxu0 %v1912
    %2718 = vmatprep.subr.bf16.mxu0 %v1915
    %2719 = vmatpush1.bf16.msra.mxu0 %v1914
    %2720 = vmatprep.subr.bf16.mxu0 %v1917
    %2721 = vmatpush1.bf16.msra.mxu0 %v1916
    %2722 = vmatprep.subr.bf16.mxu0 %v1919
    %2723 = vmatpush1.bf16.msra.mxu0 %v1918
    %2724 = vmatprep.subr.bf16.mxu0 %v1921
    %2725 = vmatpush1.bf16.msra.mxu0 %v1920
    %2726 = vmatprep.subr.bf16.mxu0 %v1923
    %2727 = vmatpush1.bf16.msra.mxu0 %v1922
    %2728 = vmatprep.subr.bf16.mxu0 %v1925
    %2729 = vmatpush1.bf16.msra.mxu0 %v1924
    %2730 = vmatprep.subr.bf16.mxu0 %v1927
    %2731 = vmatpush1.bf16.msra.mxu0 %v1926
    %2732 = vmatprep.subr.bf16.mxu0 %v1929
    %2733 = vmatpush1.bf16.msra.mxu0 %v1928
    %2734 = vmatprep.mubr.bf16.mxu0 %v579
    %2735 = vmatmul.mubr.bf16.gmra.mrb[0].mxu0 %v578
    %v2736 = vpop.f32.mrb[0].mxu0
    %v2737 = vadd.f32 %v2696, %v2736
    %v2738 = vpop.f32.mrb[0].mxu0
    %v2739 = vadd.f32 %v2698, %v2738
    %v2740 = vpop.f32.mrb[0].mxu0
    %v2741 = vpop.f32.mrb[0].mxu0
    %2742 = vdwg.mxu0
    %2743 = vmatprep.subr.bf16.mxu0 %v1931
    %2744 = vmatpush1.bf16.msra.mxu0 %v1930
    %2745 = vmatprep.subr.bf16.mxu0 %v1933
    %2746 = vmatpush1.bf16.msra.mxu0 %v1932
    %2747 = vmatprep.subr.bf16.mxu0 %v1935
    %2748 = vmatpush1.bf16.msra.mxu0 %v1934
    %2749 = vmatprep.subr.bf16.mxu0 %v1937
    %2750 = vmatpush1.bf16.msra.mxu0 %v1936
    %2751 = vmatprep.subr.bf16.mxu0 %v1939
    %2752 = vmatpush1.bf16.msra.mxu0 %v1938
    %2753 = vmatprep.subr.bf16.mxu0 %v1941
    %2754 = vmatpush1.bf16.msra.mxu0 %v1940
    %2755 = vmatprep.subr.bf16.mxu0 %v1943
    %2756 = vmatpush1.bf16.msra.mxu0 %v1942
    %2757 = vmatprep.subr.bf16.mxu0 %v1945
    %2758 = vmatpush1.bf16.msra.mxu0 %v1944
    %2759 = vmatprep.subr.bf16.mxu0 %v1947
    %2760 = vmatpush1.bf16.msra.mxu0 %v1946
    %2761 = vmatprep.subr.bf16.mxu0 %v1949
    %2762 = vmatpush1.bf16.msra.mxu0 %v1948
    %2763 = vmatprep.subr.bf16.mxu0 %v1951
    %2764 = vmatpush1.bf16.msra.mxu0 %v1950
    %2765 = vmatprep.subr.bf16.mxu0 %v1953
    %2766 = vmatpush1.bf16.msra.mxu0 %v1952
    %2767 = vmatprep.subr.bf16.mxu0 %v1955
    %2768 = vmatpush1.bf16.msra.mxu0 %v1954
    %2769 = vmatprep.subr.bf16.mxu0 %v1957
    %2770 = vmatpush1.bf16.msra.mxu0 %v1956
    %2771 = vmatprep.subr.bf16.mxu0 %v1959
    %2772 = vmatpush1.bf16.msra.mxu0 %v1958
    %2773 = vmatprep.subr.bf16.mxu0 %v1961
    %2774 = vmatpush1.bf16.msra.mxu0 %v1960
    %2775 = vmatprep.mubr.bf16.mxu0 %v581
    %2776 = vmatmul.mubr.bf16.gmra.mrb[0].mxu0 %v580
    %v2777 = vpop.f32.mrb[0].mxu0
    %v2778 = vadd.f32 %v2737, %v2777
    %v2779 = vpop.f32.mrb[0].mxu0
    %v2780 = vadd.f32 %v2739, %v2779
    %v2781 = vpop.f32.mrb[0].mxu0
    %v2782 = vpop.f32.mrb[0].mxu0
    %2783 = vdwg.mxu0
    %2784 = vmatprep.subr.bf16.mxu0 %v1963
    %2785 = vmatpush1.bf16.msra.mxu0 %v1962
    %2786 = vmatprep.subr.bf16.mxu0 %v1965
    %2787 = vmatpush1.bf16.msra.mxu0 %v1964
    %2788 = vmatprep.subr.bf16.mxu0 %v1967
    %2789 = vmatpush1.bf16.msra.mxu0 %v1966
    %2790 = vmatprep.subr.bf16.mxu0 %v1969
    %2791 = vmatpush1.bf16.msra.mxu0 %v1968
    %2792 = vmatprep.subr.bf16.mxu0 %v1971
    %2793 = vmatpush1.bf16.msra.mxu0 %v1970
    %2794 = vmatprep.subr.bf16.mxu0 %v1973
    %2795 = vmatpush1.bf16.msra.mxu0 %v1972
    %2796 = vmatprep.subr.bf16.mxu0 %v1975
    %2797 = vmatpush1.bf16.msra.mxu0 %v1974
    %2798 = vmatprep.subr.bf16.mxu0 %v1977
    %2799 = vmatpush1.bf16.msra.mxu0 %v1976
    %2800 = vmatprep.subr.bf16.mxu0 %v1979
    %2801 = vmatpush1.bf16.msra.mxu0 %v1978
    %2802 = vmatprep.subr.bf16.mxu0 %v1981
    %2803 = vmatpush1.bf16.msra.mxu0 %v1980
    %2804 = vmatprep.subr.bf16.mxu0 %v1983
    %2805 = vmatpush1.bf16.msra.mxu0 %v1982
    %2806 = vmatprep.subr.bf16.mxu0 %v1985
    %2807 = vmatpush1.bf16.msra.mxu0 %v1984
    %2808 = vmatprep.subr.bf16.mxu0 %v1987
    %2809 = vmatpush1.bf16.msra.mxu0 %v1986
    %2810 = vmatprep.subr.bf16.mxu0 %v1989
    %2811 = vmatpush1.bf16.msra.mxu0 %v1988
    %2812 = vmatprep.subr.bf16.mxu0 %v1991
    %2813 = vmatpush1.bf16.msra.mxu0 %v1990
    %2814 = vmatprep.subr.bf16.mxu0 %v1993
    %2815 = vmatpush1.bf16.msra.mxu0 %v1992
    %2816 = vmatprep.mubr.bf16.mxu0 %v583
    %2817 = vmatmul.mubr.bf16.gmra.mrb[0].mxu0 %v582
    %v2818 = vpop.f32.mrb[0].mxu0
    %v2819 = vadd.f32 %v2778, %v2818
    %v2820 = vpop.f32.mrb[0].mxu0
    %v2821 = vadd.f32 %v2780, %v2820
    %v2822 = vpop.f32.mrb[0].mxu0
    %v2823 = vpop.f32.mrb[0].mxu0
    %2824 = vdwg.mxu0
    %2825 = vmatprep.subr.bf16.mxu0 %v1995
    %2826 = vmatpush1.bf16.msra.mxu0 %v1994
    %2827 = vmatprep.subr.bf16.mxu0 %v1997
    %2828 = vmatpush1.bf16.msra.mxu0 %v1996
    %2829 = vmatprep.subr.bf16.mxu0 %v1999
    %2830 = vmatpush1.bf16.msra.mxu0 %v1998
    %2831 = vmatprep.subr.bf16.mxu0 %v2001
    %2832 = vmatpush1.bf16.msra.mxu0 %v2000
    %2833 = vmatprep.subr.bf16.mxu0 %v2003
    %2834 = vmatpush1.bf16.msra.mxu0 %v2002
    %2835 = vmatprep.subr.bf16.mxu0 %v2005
    %2836 = vmatpush1.bf16.msra.mxu0 %v2004
    %2837 = vmatprep.subr.bf16.mxu0 %v2007
    %2838 = vmatpush1.bf16.msra.mxu0 %v2006
    %2839 = vmatprep.subr.bf16.mxu0 %v2009
    %2840 = vmatpush1.bf16.msra.mxu0 %v2008
    %2841 = vmatprep.subr.bf16.mxu0 %v2011
    %2842 = vmatpush1.bf16.msra.mxu0 %v2010
    %2843 = vmatprep.subr.bf16.mxu0 %v2013
    %2844 = vmatpush1.bf16.msra.mxu0 %v2012
    %2845 = vmatprep.subr.bf16.mxu0 %v2015
    %2846 = vmatpush1.bf16.msra.mxu0 %v2014
    %2847 = vmatprep.subr.bf16.mxu0 %v2017
    %2848 = vmatpush1.bf16.msra.mxu0 %v2016
    %2849 = vmatprep.subr.bf16.mxu0 %v2019
    %2850 = vmatpush1.bf16.msra.mxu0 %v2018
    %2851 = vmatprep.subr.bf16.mxu0 %v2021
    %2852 = vmatpush1.bf16.msra.mxu0 %v2020
    %2853 = vmatprep.subr.bf16.mxu0 %v2023
    %2854 = vmatpush1.bf16.msra.mxu0 %v2022
    %2855 = vmatprep.subr.bf16.mxu0 %v2025
    %2856 = vmatpush1.bf16.msra.mxu0 %v2024
    %2857 = vmatprep.mubr.bf16.mxu0 %v585
    %2858 = vmatmul.mubr.bf16.gmra.mrb[0].mxu0 %v584
    %v2859 = vpop.f32.mrb[0].mxu0
    %v2860 = vadd.f32 %v2819, %v2859
    %v2861 = vpop.f32.mrb[0].mxu0
    %v2862 = vadd.f32 %v2821, %v2861
    %v2863 = vpop.f32.mrb[0].mxu0
    %v2864 = vpop.f32.mrb[0].mxu0
    %2865 = vdwg.mxu0
    %2866 = vmatprep.subr.bf16.mxu0 %v2027
    %2867 = vmatpush1.bf16.msra.mxu0 %v2026
    %2868 = vmatprep.subr.bf16.mxu0 %v2029
    %2869 = vmatpush1.bf16.msra.mxu0 %v2028
    %2870 = vmatprep.subr.bf16.mxu0 %v2031
    %2871 = vmatpush1.bf16.msra.mxu0 %v2030
    %2872 = vmatprep.subr.bf16.mxu0 %v2033
    %2873 = vmatpush1.bf16.msra.mxu0 %v2032
    %2874 = vmatprep.subr.bf16.mxu0 %v2035
    %2875 = vmatpush1.bf16.msra.mxu0 %v2034
    %2876 = vmatprep.subr.bf16.mxu0 %v2037
    %2877 = vmatpush1.bf16.msra.mxu0 %v2036
    %2878 = vmatprep.subr.bf16.mxu0 %v2039
    %2879 = vmatpush1.bf16.msra.mxu0 %v2038
    %2880 = vmatprep.subr.bf16.mxu0 %v2041
    %2881 = vmatpush1.bf16.msra.mxu0 %v2040
    %2882 = vmatprep.subr.bf16.mxu0 %v2043
    %2883 = vmatpush1.bf16.msra.mxu0 %v2042
    %2884 = vmatprep.subr.bf16.mxu0 %v2045
    %2885 = vmatpush1.bf16.msra.mxu0 %v2044
    %2886 = vmatprep.subr.bf16.mxu0 %v2047
    %2887 = vmatpush1.bf16.msra.mxu0 %v2046
    %2888 = vmatprep.subr.bf16.mxu0 %v2049
    %2889 = vmatpush1.bf16.msra.mxu0 %v2048
    %2890 = vmatprep.subr.bf16.mxu0 %v2051
    %2891 = vmatpush1.bf16.msra.mxu0 %v2050
    %2892 = vmatprep.subr.bf16.mxu0 %v2053
    %2893 = vmatpush1.bf16.msra.mxu0 %v2052
    %2894 = vmatprep.subr.bf16.mxu0 %v2055
    %2895 = vmatpush1.bf16.msra.mxu0 %v2054
    %2896 = vmatprep.subr.bf16.mxu0 %v2057
    %2897 = vmatpush1.bf16.msra.mxu0 %v2056
    %2898 = vmatprep.mubr.bf16.mxu0 %v587
    %2899 = vmatmul.mubr.bf16.gmra.mrb[0].mxu0 %v586
    %v2900 = vpop.f32.mrb[0].mxu0
    %v2901 = vadd.f32 %v2860, %v2900
    %v2902 = vpop.f32.mrb[0].mxu0
    %v2903 = vadd.f32 %v2862, %v2902
    %v2904 = vpop.f32.mrb[0].mxu0
    %v2905 = vpop.f32.mrb[0].mxu0
    %2906 = vdwg.mxu0
    %2907 = vmatprep.subr.bf16.mxu0 %v2059
    %2908 = vmatpush1.bf16.msra.mxu0 %v2058
    %2909 = vmatprep.subr.bf16.mxu0 %v2061
    %2910 = vmatpush1.bf16.msra.mxu0 %v2060
    %2911 = vmatprep.subr.bf16.mxu0 %v2063
    %2912 = vmatpush1.bf16.msra.mxu0 %v2062
    %2913 = vmatprep.subr.bf16.mxu0 %v2065
    %2914 = vmatpush1.bf16.msra.mxu0 %v2064
    %2915 = vmatprep.subr.bf16.mxu0 %v2067
    %2916 = vmatpush1.bf16.msra.mxu0 %v2066
    %2917 = vmatprep.subr.bf16.mxu0 %v2069
    %2918 = vmatpush1.bf16.msra.mxu0 %v2068
    %2919 = vmatprep.subr.bf16.mxu0 %v2071
    %2920 = vmatpush1.bf16.msra.mxu0 %v2070
    %2921 = vmatprep.subr.bf16.mxu0 %v2073
    %2922 = vmatpush1.bf16.msra.mxu0 %v2072
    %2923 = vmatprep.subr.bf16.mxu0 %v2075
    %2924 = vmatpush1.bf16.msra.mxu0 %v2074
    %2925 = vmatprep.subr.bf16.mxu0 %v2077
    %2926 = vmatpush1.bf16.msra.mxu0 %v2076
    %2927 = vmatprep.subr.bf16.mxu0 %v2079
    %2928 = vmatpush1.bf16.msra.mxu0 %v2078
    %2929 = vmatprep.subr.bf16.mxu0 %v2081
    %2930 = vmatpush1.bf16.msra.mxu0 %v2080
    %2931 = vmatprep.subr.bf16.mxu0 %v2083
    %2932 = vmatpush1.bf16.msra.mxu0 %v2082
    %2933 = vmatprep.subr.bf16.mxu0 %v2085
    %2934 = vmatpush1.bf16.msra.mxu0 %v2084
    %2935 = vmatprep.subr.bf16.mxu0 %v2087
    %2936 = vmatpush1.bf16.msra.mxu0 %v2086
    %2937 = vmatprep.subr.bf16.mxu0 %v2089
    %2938 = vmatpush1.bf16.msra.mxu0 %v2088
    %2939 = vmatprep.mubr.bf16.mxu0 %v589
    %2940 = vmatmul.mubr.bf16.gmra.mrb[0].mxu0 %v588
    %v2941 = vpop.f32.mrb[0].mxu0
    %v2942 = vadd.f32 %v2901, %v2941
    %v2943 = vpop.f32.mrb[0].mxu0
    %v2944 = vadd.f32 %v2903, %v2943
    %v2945 = vpop.f32.mrb[0].mxu0
    %v2946 = vpop.f32.mrb[0].mxu0
    %2947 = vdwg.mxu0
    %2948 = vmatprep.subr.bf16.mxu0 %v2091
    %2949 = vmatpush1.bf16.msra.mxu0 %v2090
    %2950 = vmatprep.subr.bf16.mxu0 %v2093
    %2951 = vmatpush1.bf16.msra.mxu0 %v2092
    %2952 = vmatprep.subr.bf16.mxu0 %v2095
    %2953 = vmatpush1.bf16.msra.mxu0 %v2094
    %2954 = vmatprep.subr.bf16.mxu0 %v2097
    %2955 = vmatpush1.bf16.msra.mxu0 %v2096
    %2956 = vmatprep.subr.bf16.mxu0 %v2099
    %2957 = vmatpush1.bf16.msra.mxu0 %v2098
    %2958 = vmatprep.subr.bf16.mxu0 %v2101
    %2959 = vmatpush1.bf16.msra.mxu0 %v2100
    %2960 = vmatprep.subr.bf16.mxu0 %v2103
    %2961 = vmatpush1.bf16.msra.mxu0 %v2102
    %2962 = vmatprep.subr.bf16.mxu0 %v2105
    %2963 = vmatpush1.bf16.msra.mxu0 %v2104
    %2964 = vmatprep.subr.bf16.mxu0 %v2107
    %2965 = vmatpush1.bf16.msra.mxu0 %v2106
    %2966 = vmatprep.subr.bf16.mxu0 %v2109
    %2967 = vmatpush1.bf16.msra.mxu0 %v2108
    %2968 = vmatprep.subr.bf16.mxu0 %v2111
    %2969 = vmatpush1.bf16.msra.mxu0 %v2110
    %2970 = vmatprep.subr.bf16.mxu0 %v2113
    %2971 = vmatpush1.bf16.msra.mxu0 %v2112
    %2972 = vmatprep.subr.bf16.mxu0 %v2115
    %2973 = vmatpush1.bf16.msra.mxu0 %v2114
    %2974 = vmatprep.subr.bf16.mxu0 %v2117
    %2975 = vmatpush1.bf16.msra.mxu0 %v2116
    %2976 = vmatprep.subr.bf16.mxu0 %v2119
    %2977 = vmatpush1.bf16.msra.mxu0 %v2118
    %2978 = vmatprep.subr.bf16.mxu0 %v2121
    %2979 = vmatpush1.bf16.msra.mxu0 %v2120
    %2980 = vmatprep.mubr.bf16.mxu0 %v591
    %2981 = vmatmul.mubr.bf16.gmra.mrb[0].mxu0 %v590
    %v2982 = vpop.f32.mrb[0].mxu0
    %v2983 = vadd.f32 %v2942, %v2982
    %v2984 = vpop.f32.mrb[0].mxu0
    %v2985 = vadd.f32 %v2944, %v2984
    %v2986 = vpop.f32.mrb[0].mxu0
    %v2987 = vpop.f32.mrb[0].mxu0
    %2988 = vdwg.mxu0
    %2989 = vmatprep.subr.bf16.mxu0 %v2123
    %2990 = vmatpush1.bf16.msra.mxu0 %v2122
    %2991 = vmatprep.subr.bf16.mxu0 %v2125
    %2992 = vmatpush1.bf16.msra.mxu0 %v2124
    %2993 = vmatprep.subr.bf16.mxu0 %v2127
    %2994 = vmatpush1.bf16.msra.mxu0 %v2126
    %2995 = vmatprep.subr.bf16.mxu0 %v2129
    %2996 = vmatpush1.bf16.msra.mxu0 %v2128
    %2997 = vmatprep.subr.bf16.mxu0 %v2131
    %2998 = vmatpush1.bf16.msra.mxu0 %v2130
    %2999 = vmatprep.subr.bf16.mxu0 %v2133
    %3000 = vmatpush1.bf16.msra.mxu0 %v2132
    %3001 = vmatprep.subr.bf16.mxu0 %v2135
    %3002 = vmatpush1.bf16.msra.mxu0 %v2134
    %3003 = vmatprep.subr.bf16.mxu0 %v2137
    %3004 = vmatpush1.bf16.msra.mxu0 %v2136
    %3005 = vmatprep.subr.bf16.mxu0 %v2139
    %3006 = vmatpush1.bf16.msra.mxu0 %v2138
    %3007 = vmatprep.subr.bf16.mxu0 %v2141
    %3008 = vmatpush1.bf16.msra.mxu0 %v2140
    %3009 = vmatprep.subr.bf16.mxu0 %v2143
    %3010 = vmatpush1.bf16.msra.mxu0 %v2142
    %3011 = vmatprep.subr.bf16.mxu0 %v2145
    %3012 = vmatpush1.bf16.msra.mxu0 %v2144
    %3013 = vmatprep.subr.bf16.mxu0 %v2147
    %3014 = vmatpush1.bf16.msra.mxu0 %v2146
    %3015 = vmatprep.subr.bf16.mxu0 %v2149
    %3016 = vmatpush1.bf16.msra.mxu0 %v2148
    %3017 = vmatprep.subr.bf16.mxu0 %v2151
    %3018 = vmatpush1.bf16.msra.mxu0 %v2150
    %3019 = vmatprep.subr.bf16.mxu0 %v2153
    %3020 = vmatpush1.bf16.msra.mxu0 %v2152
    %3021 = vmatprep.mubr.bf16.mxu0 %v593
    %3022 = vmatmul.mubr.bf16.gmra.mrb[0].mxu0 %v592
    %v3023 = vpop.f32.mrb[0].mxu0
    %v3024 = vadd.f32 %v2983, %v3023
    %v3025 = vpop.f32.mrb[0].mxu0
    %v3026 = vadd.f32 %v2985, %v3025
    %v3027 = vpop.f32.mrb[0].mxu0
    %v3028 = vpop.f32.mrb[0].mxu0
    %3029 = vdwg.mxu0
    %v3030 = vmax.f32 %v3024, 0.0
    %v3031 = vmax.f32 %v3026, 0.0
    %v3032 = vpack.c.bf16 %v3030, %v3030
    %v3033 = vpack.c.bf16 %v3031, %v3031
    %v3034 = vld [vmem:[#allocation5] sm:$0xff]
    %v3035 = vld [vmem:[#allocation5 + $0x8] sm:$0xff]
    %v3036 = vld [vmem:[#allocation5 + $0x10] sm:$0xff]
    %v3037 = vld [vmem:[#allocation5 + $0x18] sm:$0xff]
    %v3038 = vld [vmem:[#allocation5 + $0x20] sm:$0xff]
    %v3039 = vld [vmem:[#allocation5 + $0x28] sm:$0xff]
    %v3040 = vld [vmem:[#allocation5 + $0x30] sm:$0xff]
    %v3041 = vld [vmem:[#allocation5 + $0x38] sm:$0xff]
    %v3042 = vld [vmem:[#allocation5 + $0x40] sm:$0xff]
    %v3043 = vld [vmem:[#allocation5 + $0x48] sm:$0xff]
    %v3044 = vld [vmem:[#allocation5 + $0x50] sm:$0xff]
    %v3045 = vld [vmem:[#allocation5 + $0x58] sm:$0xff]
    %v3046 = vld [vmem:[#allocation5 + $0x60] sm:$0xff]
    %v3047 = vld [vmem:[#allocation5 + $0x68] sm:$0xff]
    %v3048 = vld [vmem:[#allocation5 + $0x70] sm:$0xff]
    %v3049 = vld [vmem:[#allocation5 + $0x78] sm:$0xff]
    %v3050 = vld [vmem:[#allocation5 + $0x80] sm:$0xff]
    %v3051 = vld [vmem:[#allocation5 + $0x88] sm:$0xff]
    %v3052 = vld [vmem:[#allocation5 + $0x90] sm:$0xff]
    %v3053 = vld [vmem:[#allocation5 + $0x98] sm:$0xff]
    %v3054 = vld [vmem:[#allocation5 + $0xa0] sm:$0xff]
    %v3055 = vld [vmem:[#allocation5 + $0xa8] sm:$0xff]
    %v3056 = vld [vmem:[#allocation5 + $0xb0] sm:$0xff]
    %v3057 = vld [vmem:[#allocation5 + $0xb8] sm:$0xff]
    %v3058 = vld [vmem:[#allocation5 + $0xc0] sm:$0xff]
    %v3059 = vld [vmem:[#allocation5 + $0xc8] sm:$0xff]
    %v3060 = vld [vmem:[#allocation5 + $0xd0] sm:$0xff]
    %v3061 = vld [vmem:[#allocation5 + $0xd8] sm:$0xff]
    %v3062 = vld [vmem:[#allocation5 + $0xe0] sm:$0xff]
    %v3063 = vld [vmem:[#allocation5 + $0xe8] sm:$0xff]
    %v3064 = vld [vmem:[#allocation5 + $0xf0] sm:$0xff]
    %v3065 = vld [vmem:[#allocation5 + $0xf8] sm:$0xff]
    %v3067 = vlaneseq
    %v3068 = vshrl.u32 %v3067, 7
    %v3069 = vsub.s32 0, %v3068
    %v3070 = vrot.slane %v123, %v3069
    %v3071 = vlaneseq
    %v3072 = vshrl.u32 %v3071, 7
    %v3073 = vsub.s32 1, %v3072
    %v3074 = vrot.slane %v123, %v3073
    %v3109 = vunpack.c.l.b16 %v3034
    %v3110 = vunpack.c.h.b16 %v3034
    %v3111 = vunpack.c.l.b16 %v3035
    %v3112 = vunpack.c.h.b16 %v3035
    %v3113 = vunpack.c.l.b16 %v3036
    %v3114 = vunpack.c.h.b16 %v3036
    %v3115 = vunpack.c.l.b16 %v3037
    %v3116 = vunpack.c.h.b16 %v3037
    %v3117 = vunpack.c.l.b16 %v3038
    %v3118 = vunpack.c.h.b16 %v3038
    %v3119 = vunpack.c.l.b16 %v3039
    %v3120 = vunpack.c.h.b16 %v3039
    %v3121 = vunpack.c.l.b16 %v3040
    %v3122 = vunpack.c.h.b16 %v3040
    %v3123 = vunpack.c.l.b16 %v3041
    %v3124 = vunpack.c.h.b16 %v3041
    %v3125 = vunpack.c.l.b16 %v3042
    %v3126 = vunpack.c.h.b16 %v3042
    %v3127 = vunpack.c.l.b16 %v3043
    %v3128 = vunpack.c.h.b16 %v3043
    %v3129 = vunpack.c.l.b16 %v3044
    %v3130 = vunpack.c.h.b16 %v3044
    %v3131 = vunpack.c.l.b16 %v3045
    %v3132 = vunpack.c.h.b16 %v3045
    %v3133 = vunpack.c.l.b16 %v3046
    %v3134 = vunpack.c.h.b16 %v3046
    %v3135 = vunpack.c.l.b16 %v3047
    %v3136 = vunpack.c.h.b16 %v3047
    %v3137 = vunpack.c.l.b16 %v3048
    %v3138 = vunpack.c.h.b16 %v3048
    %v3139 = vunpack.c.l.b16 %v3049
    %v3140 = vunpack.c.h.b16 %v3049
    %v3141 = vunpack.c.l.b16 %v3050
    %v3142 = vunpack.c.h.b16 %v3050
    %v3143 = vunpack.c.l.b16 %v3051
    %v3144 = vunpack.c.h.b16 %v3051
    %v3145 = vunpack.c.l.b16 %v3052
    %v3146 = vunpack.c.h.b16 %v3052
    %v3147 = vunpack.c.l.b16 %v3053
    %v3148 = vunpack.c.h.b16 %v3053
    %v3149 = vunpack.c.l.b16 %v3054
    %v3150 = vunpack.c.h.b16 %v3054
    %v3151 = vunpack.c.l.b16 %v3055
    %v3152 = vunpack.c.h.b16 %v3055
    %v3153 = vunpack.c.l.b16 %v3056
    %v3154 = vunpack.c.h.b16 %v3056
    %v3155 = vunpack.c.l.b16 %v3057
    %v3156 = vunpack.c.h.b16 %v3057
    %v3157 = vunpack.c.l.b16 %v3058
    %v3158 = vunpack.c.h.b16 %v3058
    %v3159 = vunpack.c.l.b16 %v3059
    %v3160 = vunpack.c.h.b16 %v3059
    %v3161 = vunpack.c.l.b16 %v3060
    %v3162 = vunpack.c.h.b16 %v3060
    %v3163 = vunpack.c.l.b16 %v3061
    %v3164 = vunpack.c.h.b16 %v3061
    %v3165 = vunpack.c.l.b16 %v3062
    %v3166 = vunpack.c.h.b16 %v3062
    %v3167 = vunpack.c.l.b16 %v3063
    %v3168 = vunpack.c.h.b16 %v3063
    %v3169 = vunpack.c.l.b16 %v3064
    %v3170 = vunpack.c.h.b16 %v3064
    %v3171 = vunpack.c.l.b16 %v3065
    %v3172 = vunpack.c.h.b16 %v3065
    %v3173 = vpack.c.b16 %v3111, %v3109
    %v3174 = vpack.c.b16 %v3112, %v3110
    %v3175 = vpack.c.b16 %v3115, %v3113
    %v3176 = vpack.c.b16 %v3116, %v3114
    %v3177 = vpack.c.b16 %v3119, %v3117
    %v3178 = vpack.c.b16 %v3120, %v3118
    %v3179 = vpack.c.b16 %v3123, %v3121
    %v3180 = vpack.c.b16 %v3124, %v3122
    %v3181 = vpack.c.b16 %v3127, %v3125
    %v3182 = vpack.c.b16 %v3128, %v3126
    %v3183 = vpack.c.b16 %v3131, %v3129
    %v3184 = vpack.c.b16 %v3132, %v3130
    %v3185 = vpack.c.b16 %v3135, %v3133
    %v3186 = vpack.c.b16 %v3136, %v3134
    %v3187 = vpack.c.b16 %v3139, %v3137
    %v3188 = vpack.c.b16 %v3140, %v3138
    %v3189 = vpack.c.b16 %v3143, %v3141
    %v3190 = vpack.c.b16 %v3144, %v3142
    %v3191 = vpack.c.b16 %v3147, %v3145
    %v3192 = vpack.c.b16 %v3148, %v3146
    %v3193 = vpack.c.b16 %v3151, %v3149
    %v3194 = vpack.c.b16 %v3152, %v3150
    %v3195 = vpack.c.b16 %v3155, %v3153
    %v3196 = vpack.c.b16 %v3156, %v3154
    %v3197 = vpack.c.b16 %v3159, %v3157
    %v3198 = vpack.c.b16 %v3160, %v3158
    %v3199 = vpack.c.b16 %v3163, %v3161
    %v3200 = vpack.c.b16 %v3164, %v3162
    %v3201 = vpack.c.b16 %v3167, %v3165
    %v3202 = vpack.c.b16 %v3168, %v3166
    %v3203 = vpack.c.b16 %v3171, %v3169
    %v3204 = vpack.c.b16 %v3172, %v3170
    %3237 = vmatprep.subr.bf16.mxu0 %v3174
    %3238 = vmatpush1.bf16.msra.mxu0 %v3173
    %3239 = vmatprep.subr.bf16.mxu0 %v3176
    %3240 = vmatpush1.bf16.msra.mxu0 %v3175
    %3241 = vmatprep.subr.bf16.mxu0 %v3178
    %3242 = vmatpush1.bf16.msra.mxu0 %v3177
    %3243 = vmatprep.subr.bf16.mxu0 %v3180
    %3244 = vmatpush1.bf16.msra.mxu0 %v3179
    %3245 = vmatprep.subr.bf16.mxu0 %v3182
    %3246 = vmatpush1.bf16.msra.mxu0 %v3181
    %3247 = vmatprep.subr.bf16.mxu0 %v3184
    %3248 = vmatpush1.bf16.msra.mxu0 %v3183
    %3249 = vmatprep.subr.bf16.mxu0 %v3186
    %3250 = vmatpush1.bf16.msra.mxu0 %v3185
    %3251 = vmatprep.subr.bf16.mxu0 %v3188
    %3252 = vmatpush1.bf16.msra.mxu0 %v3187
    %3253 = vmatprep.subr.bf16.mxu0 %v3190
    %3254 = vmatpush1.bf16.msra.mxu0 %v3189
    %3255 = vmatprep.subr.bf16.mxu0 %v3192
    %3256 = vmatpush1.bf16.msra.mxu0 %v3191
    %3257 = vmatprep.subr.bf16.mxu0 %v3194
    %3258 = vmatpush1.bf16.msra.mxu0 %v3193
    %3259 = vmatprep.subr.bf16.mxu0 %v3196
    %3260 = vmatpush1.bf16.msra.mxu0 %v3195
    %3261 = vmatprep.subr.bf16.mxu0 %v3198
    %3262 = vmatpush1.bf16.msra.mxu0 %v3197
    %3263 = vmatprep.subr.bf16.mxu0 %v3200
    %3264 = vmatpush1.bf16.msra.mxu0 %v3199
    %3265 = vmatprep.subr.bf16.mxu0 %v3202
    %3266 = vmatpush1.bf16.msra.mxu0 %v3201
    %3267 = vmatprep.subr.bf16.mxu0 %v3204
    %3268 = vmatpush1.bf16.msra.mxu0 %v3203
    %3269 = vmatprep.mubr.bf16.mxu0 %v3033
    %3270 = vmatmul.mubr.bf16.gmra.mrb[0].mxu0 %v3032
    %v3271 = vpop.f32.mrb[0].mxu0
    %v3272 = vadd.f32 %v3070, %v3271
    %v3273 = vpop.f32.mrb[0].mxu0
    %v3274 = vadd.f32 %v3074, %v3273
    %v3275 = vpop.f32.mrb[0].mxu0
    %v3276 = vpop.f32.mrb[0].mxu0
    %3277 = vdwg.mxu0
    %v3278 = vmax.f32 %v3272, 0.0
    %v3279 = vmax.f32 %v3274, 0.0
    %v3280 = vpack.c.bf16 %v3278, %v3278
    %v3281 = vpack.c.bf16 %v3279, %v3279
    %v3282 = vld [vmem:[#allocation7] sm:$0xff]
    %v3283 = vld [vmem:[#allocation7 + $0x8] sm:$0xff]
    %v3284 = vld [vmem:[#allocation7 + $0x10] sm:$0xff]
    %v3285 = vld [vmem:[#allocation7 + $0x18] sm:$0xff]
    %v3286 = vld [vmem:[#allocation7 + $0x20] sm:$0xff]
    %v3287 = vld [vmem:[#allocation7 + $0x28] sm:$0xff]
    %v3288 = vld [vmem:[#allocation7 + $0x30] sm:$0xff]
    %v3289 = vld [vmem:[#allocation7 + $0x38] sm:$0xff]
    %v3290 = vld [vmem:[#allocation7 + $0x40] sm:$0xff]
    %v3291 = vld [vmem:[#allocation7 + $0x48] sm:$0xff]
    %v3292 = vld [vmem:[#allocation7 + $0x50] sm:$0xff]
    %v3293 = vld [vmem:[#allocation7 + $0x58] sm:$0xff]
    %v3294 = vld [vmem:[#allocation7 + $0x60] sm:$0xff]
    %v3295 = vld [vmem:[#allocation7 + $0x68] sm:$0xff]
    %v3296 = vld [vmem:[#allocation7 + $0x70] sm:$0xff]
    %v3297 = vld [vmem:[#allocation7 + $0x78] sm:$0xff]
    %v3298 = vld [vmem:[#allocation7 + $0x80] sm:$0xff]
    %v3299 = vld [vmem:[#allocation7 + $0x88] sm:$0xff]
    %v3300 = vld [vmem:[#allocation7 + $0x90] sm:$0xff]
    %v3301 = vld [vmem:[#allocation7 + $0x98] sm:$0xff]
    %v3302 = vld [vmem:[#allocation7 + $0xa0] sm:$0xff]
    %v3303 = vld [vmem:[#allocation7 + $0xa8] sm:$0xff]
    %v3304 = vld [vmem:[#allocation7 + $0xb0] sm:$0xff]
    %v3305 = vld [vmem:[#allocation7 + $0xb8] sm:$0xff]
    %v3306 = vld [vmem:[#allocation7 + $0xc0] sm:$0xff]
    %v3307 = vld [vmem:[#allocation7 + $0xc8] sm:$0xff]
    %v3308 = vld [vmem:[#allocation7 + $0xd0] sm:$0xff]
    %v3309 = vld [vmem:[#allocation7 + $0xd8] sm:$0xff]
    %v3310 = vld [vmem:[#allocation7 + $0xe0] sm:$0xff]
    %v3311 = vld [vmem:[#allocation7 + $0xe8] sm:$0xff]
    %v3312 = vld [vmem:[#allocation7 + $0xf0] sm:$0xff]
    %v3313 = vld [vmem:[#allocation7 + $0xf8] sm:$0xff]
    %v3314 = vld [vmem:[#allocation7 + $0x100] sm:$0xff]
    %v3315 = vld [vmem:[#allocation7 + $0x108] sm:$0xff]
    %v3316 = vld [vmem:[#allocation7 + $0x110] sm:$0xff]
    %v3317 = vld [vmem:[#allocation7 + $0x118] sm:$0xff]
    %v3318 = vld [vmem:[#allocation7 + $0x120] sm:$0xff]
    %v3319 = vld [vmem:[#allocation7 + $0x128] sm:$0xff]
    %v3320 = vld [vmem:[#allocation7 + $0x130] sm:$0xff]
    %v3321 = vld [vmem:[#allocation7 + $0x138] sm:$0xff]
    %v3322 = vld [vmem:[#allocation7 + $0x140] sm:$0xff]
    %v3323 = vld [vmem:[#allocation7 + $0x148] sm:$0xff]
    %v3324 = vld [vmem:[#allocation7 + $0x150] sm:$0xff]
    %v3325 = vld [vmem:[#allocation7 + $0x158] sm:$0xff]
    %v3326 = vld [vmem:[#allocation7 + $0x160] sm:$0xff]
    %v3327 = vld [vmem:[#allocation7 + $0x168] sm:$0xff]
    %v3328 = vld [vmem:[#allocation7 + $0x170] sm:$0xff]
    %v3329 = vld [vmem:[#allocation7 + $0x178] sm:$0xff]
    %v3330 = vld [vmem:[#allocation7 + $0x180] sm:$0xff]
    %v3331 = vld [vmem:[#allocation7 + $0x188] sm:$0xff]
    %v3332 = vld [vmem:[#allocation7 + $0x190] sm:$0xff]
    %v3333 = vld [vmem:[#allocation7 + $0x198] sm:$0xff]
    %v3334 = vld [vmem:[#allocation7 + $0x1a0] sm:$0xff]
    %v3335 = vld [vmem:[#allocation7 + $0x1a8] sm:$0xff]
    %v3336 = vld [vmem:[#allocation7 + $0x1b0] sm:$0xff]
    %v3337 = vld [vmem:[#allocation7 + $0x1b8] sm:$0xff]
    %v3338 = vld [vmem:[#allocation7 + $0x1c0] sm:$0xff]
    %v3339 = vld [vmem:[#allocation7 + $0x1c8] sm:$0xff]
    %v3340 = vld [vmem:[#allocation7 + $0x1d0] sm:$0xff]
    %v3341 = vld [vmem:[#allocation7 + $0x1d8] sm:$0xff]
    %v3342 = vld [vmem:[#allocation7 + $0x1e0] sm:$0xff]
    %v3343 = vld [vmem:[#allocation7 + $0x1e8] sm:$0xff]
    %v3344 = vld [vmem:[#allocation7 + $0x1f0] sm:$0xff]
    %v3345 = vld [vmem:[#allocation7 + $0x1f8] sm:$0xff]
    %v3347 = vlaneseq
    %v3348 = vshrl.u32 %v3347, 7
    %v3349 = vsub.s32 0, %v3348
    %v3350 = vrot.slane %v124, %v3349
    %v3351 = vlaneseq
    %v3352 = vshrl.u32 %v3351, 7
    %v3353 = vsub.s32 1, %v3352
    %v3354 = vrot.slane %v124, %v3353
    %v3355 = vlaneseq
    %v3356 = vshrl.u32 %v3355, 7
    %v3357 = vsub.s32 2, %v3356
    %v3358 = vrot.slane %v124, %v3357
    %v3359 = vlaneseq
    %v3360 = vshrl.u32 %v3359, 7
    %v3361 = vsub.s32 3, %v3360
    %v3362 = vrot.slane %v124, %v3361
    %v3431 = vunpack.c.l.b16 %v3282
    %v3432 = vunpack.c.h.b16 %v3282
    %v3433 = vunpack.c.l.b16 %v3283
    %v3434 = vunpack.c.h.b16 %v3283
    %v3435 = vunpack.c.l.b16 %v3284
    %v3436 = vunpack.c.h.b16 %v3284
    %v3437 = vunpack.c.l.b16 %v3285
    %v3438 = vunpack.c.h.b16 %v3285
    %v3439 = vunpack.c.l.b16 %v3286
    %v3440 = vunpack.c.h.b16 %v3286
    %v3441 = vunpack.c.l.b16 %v3287
    %v3442 = vunpack.c.h.b16 %v3287
    %v3443 = vunpack.c.l.b16 %v3288
    %v3444 = vunpack.c.h.b16 %v3288
    %v3445 = vunpack.c.l.b16 %v3289
    %v3446 = vunpack.c.h.b16 %v3289
    %v3447 = vunpack.c.l.b16 %v3290
    %v3448 = vunpack.c.h.b16 %v3290
    %v3449 = vunpack.c.l.b16 %v3291
    %v3450 = vunpack.c.h.b16 %v3291
    %v3451 = vunpack.c.l.b16 %v3292
    %v3452 = vunpack.c.h.b16 %v3292
    %v3453 = vunpack.c.l.b16 %v3293
    %v3454 = vunpack.c.h.b16 %v3293
    %v3455 = vunpack.c.l.b16 %v3294
    %v3456 = vunpack.c.h.b16 %v3294
    %v3457 = vunpack.c.l.b16 %v3295
    %v3458 = vunpack.c.h.b16 %v3295
    %v3459 = vunpack.c.l.b16 %v3296
    %v3460 = vunpack.c.h.b16 %v3296
    %v3461 = vunpack.c.l.b16 %v3297
    %v3462 = vunpack.c.h.b16 %v3297
    %v3463 = vunpack.c.l.b16 %v3298
    %v3464 = vunpack.c.h.b16 %v3298
    %v3465 = vunpack.c.l.b16 %v3299
    %v3466 = vunpack.c.h.b16 %v3299
    %v3467 = vunpack.c.l.b16 %v3300
    %v3468 = vunpack.c.h.b16 %v3300
    %v3469 = vunpack.c.l.b16 %v3301
    %v3470 = vunpack.c.h.b16 %v3301
    %v3471 = vunpack.c.l.b16 %v3302
    %v3472 = vunpack.c.h.b16 %v3302
    %v3473 = vunpack.c.l.b16 %v3303
    %v3474 = vunpack.c.h.b16 %v3303
    %v3475 = vunpack.c.l.b16 %v3304
    %v3476 = vunpack.c.h.b16 %v3304
    %v3477 = vunpack.c.l.b16 %v3305
    %v3478 = vunpack.c.h.b16 %v3305
    %v3479 = vunpack.c.l.b16 %v3306
    %v3480 = vunpack.c.h.b16 %v3306
    %v3481 = vunpack.c.l.b16 %v3307
    %v3482 = vunpack.c.h.b16 %v3307
    %v3483 = vunpack.c.l.b16 %v3308
    %v3484 = vunpack.c.h.b16 %v3308
    %v3485 = vunpack.c.l.b16 %v3309
    %v3486 = vunpack.c.h.b16 %v3309
    %v3487 = vunpack.c.l.b16 %v3310
    %v3488 = vunpack.c.h.b16 %v3310
    %v3489 = vunpack.c.l.b16 %v3311
    %v3490 = vunpack.c.h.b16 %v3311
    %v3491 = vunpack.c.l.b16 %v3312
    %v3492 = vunpack.c.h.b16 %v3312
    %v3493 = vunpack.c.l.b16 %v3313
    %v3494 = vunpack.c.h.b16 %v3313
    %v3495 = vunpack.c.l.b16 %v3314
    %v3496 = vunpack.c.h.b16 %v3314
    %v3497 = vunpack.c.l.b16 %v3315
    %v3498 = vunpack.c.h.b16 %v3315
    %v3499 = vunpack.c.l.b16 %v3316
    %v3500 = vunpack.c.h.b16 %v3316
    %v3501 = vunpack.c.l.b16 %v3317
    %v3502 = vunpack.c.h.b16 %v3317
    %v3503 = vunpack.c.l.b16 %v3318
    %v3504 = vunpack.c.h.b16 %v3318
    %v3505 = vunpack.c.l.b16 %v3319
    %v3506 = vunpack.c.h.b16 %v3319
    %v3507 = vunpack.c.l.b16 %v3320
    %v3508 = vunpack.c.h.b16 %v3320
    %v3509 = vunpack.c.l.b16 %v3321
    %v3510 = vunpack.c.h.b16 %v3321
    %v3511 = vunpack.c.l.b16 %v3322
    %v3512 = vunpack.c.h.b16 %v3322
    %v3513 = vunpack.c.l.b16 %v3323
    %v3514 = vunpack.c.h.b16 %v3323
    %v3515 = vunpack.c.l.b16 %v3324
    %v3516 = vunpack.c.h.b16 %v3324
    %v3517 = vunpack.c.l.b16 %v3325
    %v3518 = vunpack.c.h.b16 %v3325
    %v3519 = vunpack.c.l.b16 %v3326
    %v3520 = vunpack.c.h.b16 %v3326
    %v3521 = vunpack.c.l.b16 %v3327
    %v3522 = vunpack.c.h.b16 %v3327
    %v3523 = vunpack.c.l.b16 %v3328
    %v3524 = vunpack.c.h.b16 %v3328
    %v3525 = vunpack.c.l.b16 %v3329
    %v3526 = vunpack.c.h.b16 %v3329
    %v3527 = vunpack.c.l.b16 %v3330
    %v3528 = vunpack.c.h.b16 %v3330
    %v3529 = vunpack.c.l.b16 %v3331
    %v3530 = vunpack.c.h.b16 %v3331
    %v3531 = vunpack.c.l.b16 %v3332
    %v3532 = vunpack.c.h.b16 %v3332
    %v3533 = vunpack.c.l.b16 %v3333
    %v3534 = vunpack.c.h.b16 %v3333
    %v3535 = vunpack.c.l.b16 %v3334
    %v3536 = vunpack.c.h.b16 %v3334
    %v3537 = vunpack.c.l.b16 %v3335
    %v3538 = vunpack.c.h.b16 %v3335
    %v3539 = vunpack.c.l.b16 %v3336
    %v3540 = vunpack.c.h.b16 %v3336
    %v3541 = vunpack.c.l.b16 %v3337
    %v3542 = vunpack.c.h.b16 %v3337
    %v3543 = vunpack.c.l.b16 %v3338
    %v3544 = vunpack.c.h.b16 %v3338
    %v3545 = vunpack.c.l.b16 %v3339
    %v3546 = vunpack.c.h.b16 %v3339
    %v3547 = vunpack.c.l.b16 %v3340
    %v3548 = vunpack.c.h.b16 %v3340
    %v3549 = vunpack.c.l.b16 %v3341
    %v3550 = vunpack.c.h.b16 %v3341
    %v3551 = vunpack.c.l.b16 %v3342
    %v3552 = vunpack.c.h.b16 %v3342
    %v3553 = vunpack.c.l.b16 %v3343
    %v3554 = vunpack.c.h.b16 %v3343
    %v3555 = vunpack.c.l.b16 %v3344
    %v3556 = vunpack.c.h.b16 %v3344
    %v3557 = vunpack.c.l.b16 %v3345
    %v3558 = vunpack.c.h.b16 %v3345
    %v3559 = vpack.c.b16 %v3435, %v3431
    %v3560 = vpack.c.b16 %v3436, %v3432
    %v3561 = vpack.c.b16 %v3437, %v3433
    %v3562 = vpack.c.b16 %v3438, %v3434
    %v3563 = vpack.c.b16 %v3443, %v3439
    %v3564 = vpack.c.b16 %v3444, %v3440
    %v3565 = vpack.c.b16 %v3445, %v3441
    %v3566 = vpack.c.b16 %v3446, %v3442
    %v3567 = vpack.c.b16 %v3451, %v3447
    %v3568 = vpack.c.b16 %v3452, %v3448
    %v3569 = vpack.c.b16 %v3453, %v3449
    %v3570 = vpack.c.b16 %v3454, %v3450
    %v3571 = vpack.c.b16 %v3459, %v3455
    %v3572 = vpack.c.b16 %v3460, %v3456
    %v3573 = vpack.c.b16 %v3461, %v3457
    %v3574 = vpack.c.b16 %v3462, %v3458
    %v3575 = vpack.c.b16 %v3467, %v3463
    %v3576 = vpack.c.b16 %v3468, %v3464
    %v3577 = vpack.c.b16 %v3469, %v3465
    %v3578 = vpack.c.b16 %v3470, %v3466
    %v3579 = vpack.c.b16 %v3475, %v3471
    %v3580 = vpack.c.b16 %v3476, %v3472
    %v3581 = vpack.c.b16 %v3477, %v3473
    %v3582 = vpack.c.b16 %v3478, %v3474
    %v3583 = vpack.c.b16 %v3483, %v3479
    %v3584 = vpack.c.b16 %v3484, %v3480
    %v3585 = vpack.c.b16 %v3485, %v3481
    %v3586 = vpack.c.b16 %v3486, %v3482
    %v3587 = vpack.c.b16 %v3491, %v3487
    %v3588 = vpack.c.b16 %v3492, %v3488
    %v3589 = vpack.c.b16 %v3493, %v3489
    %v3590 = vpack.c.b16 %v3494, %v3490
    %v3591 = vpack.c.b16 %v3499, %v3495
    %v3592 = vpack.c.b16 %v3500, %v3496
    %v3593 = vpack.c.b16 %v3501, %v3497
    %v3594 = vpack.c.b16 %v3502, %v3498
    %v3595 = vpack.c.b16 %v3507, %v3503
    %v3596 = vpack.c.b16 %v3508, %v3504
    %v3597 = vpack.c.b16 %v3509, %v3505
    %v3598 = vpack.c.b16 %v3510, %v3506
    %v3599 = vpack.c.b16 %v3515, %v3511
    %v3600 = vpack.c.b16 %v3516, %v3512
    %v3601 = vpack.c.b16 %v3517, %v3513
    %v3602 = vpack.c.b16 %v3518, %v3514
    %v3603 = vpack.c.b16 %v3523, %v3519
    %v3604 = vpack.c.b16 %v3524, %v3520
    %v3605 = vpack.c.b16 %v3525, %v3521
    %v3606 = vpack.c.b16 %v3526, %v3522
    %v3607 = vpack.c.b16 %v3531, %v3527
    %v3608 = vpack.c.b16 %v3532, %v3528
    %v3609 = vpack.c.b16 %v3533, %v3529
    %v3610 = vpack.c.b16 %v3534, %v3530
    %v3611 = vpack.c.b16 %v3539, %v3535
    %v3612 = vpack.c.b16 %v3540, %v3536
    %v3613 = vpack.c.b16 %v3541, %v3537
    %v3614 = vpack.c.b16 %v3542, %v3538
    %v3615 = vpack.c.b16 %v3547, %v3543
    %v3616 = vpack.c.b16 %v3548, %v3544
    %v3617 = vpack.c.b16 %v3549, %v3545
    %v3618 = vpack.c.b16 %v3550, %v3546
    %v3619 = vpack.c.b16 %v3555, %v3551
    %v3620 = vpack.c.b16 %v3556, %v3552
    %v3621 = vpack.c.b16 %v3557, %v3553
    %v3622 = vpack.c.b16 %v3558, %v3554
    %3687 = vmatprep.subr.bf16.mxu0 %v3560
    %3688 = vmatpush1.bf16.msra.mxu0 %v3559
    %3689 = vmatprep.subr.bf16.mxu0 %v3564
    %3690 = vmatpush1.bf16.msra.mxu0 %v3563
    %3691 = vmatprep.subr.bf16.mxu0 %v3568
    %3692 = vmatpush1.bf16.msra.mxu0 %v3567
    %3693 = vmatprep.subr.bf16.mxu0 %v3572
    %3694 = vmatpush1.bf16.msra.mxu0 %v3571
    %3695 = vmatprep.subr.bf16.mxu0 %v3576
    %3696 = vmatpush1.bf16.msra.mxu0 %v3575
    %3697 = vmatprep.subr.bf16.mxu0 %v3580
    %3698 = vmatpush1.bf16.msra.mxu0 %v3579
    %3699 = vmatprep.subr.bf16.mxu0 %v3584
    %3700 = vmatpush1.bf16.msra.mxu0 %v3583
    %3701 = vmatprep.subr.bf16.mxu0 %v3588
    %3702 = vmatpush1.bf16.msra.mxu0 %v3587
    %3703 = vmatprep.subr.bf16.mxu0 %v3592
    %3704 = vmatpush1.bf16.msra.mxu0 %v3591
    %3705 = vmatprep.subr.bf16.mxu0 %v3596
    %3706 = vmatpush1.bf16.msra.mxu0 %v3595
    %3707 = vmatprep.subr.bf16.mxu0 %v3600
    %3708 = vmatpush1.bf16.msra.mxu0 %v3599
    %3709 = vmatprep.subr.bf16.mxu0 %v3604
    %3710 = vmatpush1.bf16.msra.mxu0 %v3603
    %3711 = vmatprep.subr.bf16.mxu0 %v3608
    %3712 = vmatpush1.bf16.msra.mxu0 %v3607
    %3713 = vmatprep.subr.bf16.mxu0 %v3612
    %3714 = vmatpush1.bf16.msra.mxu0 %v3611
    %3715 = vmatprep.subr.bf16.mxu0 %v3616
    %3716 = vmatpush1.bf16.msra.mxu0 %v3615
    %3717 = vmatprep.subr.bf16.mxu0 %v3620
    %3718 = vmatpush1.bf16.msra.mxu0 %v3619
    %3719 = vmatprep.mubr.bf16.mxu0 %v3281
    %3720 = vmatmul.mubr.bf16.gmra.mrb[0].mxu0 %v3280
    %v3721 = vpop.f32.mrb[0].mxu0
    %v3722 = vadd.f32 %v3350, %v3721
    %v3723 = vpop.f32.mrb[0].mxu0
    %v3724 = vadd.f32 %v3354, %v3723
    %v3725 = vpop.f32.mrb[0].mxu0
    %v3726 = vpop.f32.mrb[0].mxu0
    %3727 = vdwg.mxu0
    %3728 = vmatprep.subr.bf16.mxu0 %v3562
    %3729 = vmatpush1.bf16.msra.mxu0 %v3561
    %3730 = vmatprep.subr.bf16.mxu0 %v3566
    %3731 = vmatpush1.bf16.msra.mxu0 %v3565
    %3732 = vmatprep.subr.bf16.mxu0 %v3570
    %3733 = vmatpush1.bf16.msra.mxu0 %v3569
    %3734 = vmatprep.subr.bf16.mxu0 %v3574
    %3735 = vmatpush1.bf16.msra.mxu0 %v3573
    %3736 = vmatprep.subr.bf16.mxu0 %v3578
    %3737 = vmatpush1.bf16.msra.mxu0 %v3577
    %3738 = vmatprep.subr.bf16.mxu0 %v3582
    %3739 = vmatpush1.bf16.msra.mxu0 %v3581
    %3740 = vmatprep.subr.bf16.mxu0 %v3586
    %3741 = vmatpush1.bf16.msra.mxu0 %v3585
    %3742 = vmatprep.subr.bf16.mxu0 %v3590
    %3743 = vmatpush1.bf16.msra.mxu0 %v3589
    %3744 = vmatprep.subr.bf16.mxu0 %v3594
    %3745 = vmatpush1.bf16.msra.mxu0 %v3593
    %3746 = vmatprep.subr.bf16.mxu0 %v3598
    %3747 = vmatpush1.bf16.msra.mxu0 %v3597
    %3748 = vmatprep.subr.bf16.mxu0 %v3602
    %3749 = vmatpush1.bf16.msra.mxu0 %v3601
    %3750 = vmatprep.subr.bf16.mxu0 %v3606
    %3751 = vmatpush1.bf16.msra.mxu0 %v3605
    %3752 = vmatprep.subr.bf16.mxu0 %v3610
    %3753 = vmatpush1.bf16.msra.mxu0 %v3609
    %3754 = vmatprep.subr.bf16.mxu0 %v3614
    %3755 = vmatpush1.bf16.msra.mxu0 %v3613
    %3756 = vmatprep.subr.bf16.mxu0 %v3618
    %3757 = vmatpush1.bf16.msra.mxu0 %v3617
    %3758 = vmatprep.subr.bf16.mxu0 %v3622
    %3759 = vmatpush1.bf16.msra.mxu0 %v3621
    %3760 = vmatprep.mubr.bf16.mxu0 %v3281
    %3761 = vmatmul.mubr.bf16.gmra.mrb[0].mxu0 %v3280
    %v3762 = vpop.f32.mrb[0].mxu0
    %v3763 = vadd.f32 %v3358, %v3762
    %v3764 = vpop.f32.mrb[0].mxu0
    %v3765 = vadd.f32 %v3362, %v3764
    %v3766 = vpop.f32.mrb[0].mxu0
    %v3767 = vpop.f32.mrb[0].mxu0
    %3768 = vdwg.mxu0
    %v3769 = vmul.f32 %v3763, 0.5
    %v3770 = vmul.f32 %v3765, 0.5
    %v3771 = vmul.f32 %v3769, 1.442695
    %v3772 = vpow.pop %v3771
    %v3773 = vmul.f32 %v3770, 1.442695
    %v3774 = vpow.pop %v3773
    %v3775 = vld [vmem:[#allocation13] sm:$0xff]
    %v3776 = vld [vmem:[#allocation13 + $0x8] sm:$0xff]
    %v3777 = vmul.f32 %v3772, %v3775
    %v3778 = vmul.f32 %v3774, %v3776
    %v3779 = vadd.f32 %v3722, %v3777
    %v3780 = vadd.f32 %v3724, %v3778
    %v3781 = vpack.c.bf16 %v3779, %v3779
    %v3782 = vpack.c.bf16 %v3780, %v3780
    %v3783 = vld [vmem:[#allocation8] sm:$0xff]
    %v3784 = vld [vmem:[#allocation8 + $0x8] sm:$0xff]
    %v3785 = vld [vmem:[#allocation8 + $0x10] sm:$0xff]
    %v3786 = vld [vmem:[#allocation8 + $0x18] sm:$0xff]
    %v3787 = vld [vmem:[#allocation8 + $0x20] sm:$0xff]
    %v3788 = vld [vmem:[#allocation8 + $0x28] sm:$0xff]
    %v3789 = vld [vmem:[#allocation8 + $0x30] sm:$0xff]
    %v3790 = vld [vmem:[#allocation8 + $0x38] sm:$0xff]
    %v3791 = vld [vmem:[#allocation8 + $0x40] sm:$0xff]
    %v3792 = vld [vmem:[#allocation8 + $0x48] sm:$0xff]
    %v3793 = vld [vmem:[#allocation8 + $0x50] sm:$0xff]
    %v3794 = vld [vmem:[#allocation8 + $0x58] sm:$0xff]
    %v3795 = vld [vmem:[#allocation8 + $0x60] sm:$0xff]
    %v3796 = vld [vmem:[#allocation8 + $0x68] sm:$0xff]
    %v3797 = vld [vmem:[#allocation8 + $0x70] sm:$0xff]
    %v3798 = vld [vmem:[#allocation8 + $0x78] sm:$0xff]
    %v3799 = vld [vmem:[#allocation8 + $0x80] sm:$0xff]
    %v3800 = vld [vmem:[#allocation8 + $0x88] sm:$0xff]
    %v3801 = vld [vmem:[#allocation8 + $0x90] sm:$0xff]
    %v3802 = vld [vmem:[#allocation8 + $0x98] sm:$0xff]
    %v3803 = vld [vmem:[#allocation8 + $0xa0] sm:$0xff]
    %v3804 = vld [vmem:[#allocation8 + $0xa8] sm:$0xff]
    %v3805 = vld [vmem:[#allocation8 + $0xb0] sm:$0xff]
    %v3806 = vld [vmem:[#allocation8 + $0xb8] sm:$0xff]
    %v3807 = vld [vmem:[#allocation8 + $0xc0] sm:$0xff]
    %v3808 = vld [vmem:[#allocation8 + $0xc8] sm:$0xff]
    %v3809 = vld [vmem:[#allocation8 + $0xd0] sm:$0xff]
    %v3810 = vld [vmem:[#allocation8 + $0xd8] sm:$0xff]
    %v3811 = vld [vmem:[#allocation8 + $0xe0] sm:$0xff]
    %v3812 = vld [vmem:[#allocation8 + $0xe8] sm:$0xff]
    %v3813 = vld [vmem:[#allocation8 + $0xf0] sm:$0xff]
    %v3814 = vld [vmem:[#allocation8 + $0xf8] sm:$0xff]
    %v3816 = vlaneseq
    %v3817 = vshrl.u32 %v3816, 7
    %v3818 = vsub.s32 0, %v3817
    %v3819 = vrot.slane %v125, %v3818
    %v3820 = vlaneseq
    %v3821 = vshrl.u32 %v3820, 7
    %v3822 = vsub.s32 1, %v3821
    %v3823 = vrot.slane %v125, %v3822
    %v3858 = vunpack.c.l.b16 %v3783
    %v3859 = vunpack.c.h.b16 %v3783
    %v3860 = vunpack.c.l.b16 %v3784
    %v3861 = vunpack.c.h.b16 %v3784
    %v3862 = vunpack.c.l.b16 %v3785
    %v3863 = vunpack.c.h.b16 %v3785
    %v3864 = vunpack.c.l.b16 %v3786
    %v3865 = vunpack.c.h.b16 %v3786
    %v3866 = vunpack.c.l.b16 %v3787
    %v3867 = vunpack.c.h.b16 %v3787
    %v3868 = vunpack.c.l.b16 %v3788
    %v3869 = vunpack.c.h.b16 %v3788
    %v3870 = vunpack.c.l.b16 %v3789
    %v3871 = vunpack.c.h.b16 %v3789
    %v3872 = vunpack.c.l.b16 %v3790
    %v3873 = vunpack.c.h.b16 %v3790
    %v3874 = vunpack.c.l.b16 %v3791
    %v3875 = vunpack.c.h.b16 %v3791
    %v3876 = vunpack.c.l.b16 %v3792
    %v3877 = vunpack.c.h.b16 %v3792
    %v3878 = vunpack.c.l.b16 %v3793
    %v3879 = vunpack.c.h.b16 %v3793
    %v3880 = vunpack.c.l.b16 %v3794
    %v3881 = vunpack.c.h.b16 %v3794
    %v3882 = vunpack.c.l.b16 %v3795
    %v3883 = vunpack.c.h.b16 %v3795
    %v3884 = vunpack.c.l.b16 %v3796
    %v3885 = vunpack.c.h.b16 %v3796
    %v3886 = vunpack.c.l.b16 %v3797
    %v3887 = vunpack.c.h.b16 %v3797
    %v3888 = vunpack.c.l.b16 %v3798
    %v3889 = vunpack.c.h.b16 %v3798
    %v3890 = vunpack.c.l.b16 %v3799
    %v3891 = vunpack.c.h.b16 %v3799
    %v3892 = vunpack.c.l.b16 %v3800
    %v3893 = vunpack.c.h.b16 %v3800
    %v3894 = vunpack.c.l.b16 %v3801
    %v3895 = vunpack.c.h.b16 %v3801
    %v3896 = vunpack.c.l.b16 %v3802
    %v3897 = vunpack.c.h.b16 %v3802
    %v3898 = vunpack.c.l.b16 %v3803
    %v3899 = vunpack.c.h.b16 %v3803
    %v3900 = vunpack.c.l.b16 %v3804
    %v3901 = vunpack.c.h.b16 %v3804
    %v3902 = vunpack.c.l.b16 %v3805
    %v3903 = vunpack.c.h.b16 %v3805
    %v3904 = vunpack.c.l.b16 %v3806
    %v3905 = vunpack.c.h.b16 %v3806
    %v3906 = vunpack.c.l.b16 %v3807
    %v3907 = vunpack.c.h.b16 %v3807
    %v3908 = vunpack.c.l.b16 %v3808
    %v3909 = vunpack.c.h.b16 %v3808
    %v3910 = vunpack.c.l.b16 %v3809
    %v3911 = vunpack.c.h.b16 %v3809
    %v3912 = vunpack.c.l.b16 %v3810
    %v3913 = vunpack.c.h.b16 %v3810
    %v3914 = vunpack.c.l.b16 %v3811
    %v3915 = vunpack.c.h.b16 %v3811
    %v3916 = vunpack.c.l.b16 %v3812
    %v3917 = vunpack.c.h.b16 %v3812
    %v3918 = vunpack.c.l.b16 %v3813
    %v3919 = vunpack.c.h.b16 %v3813
    %v3920 = vunpack.c.l.b16 %v3814
    %v3921 = vunpack.c.h.b16 %v3814
    %v3922 = vpack.c.b16 %v3860, %v3858
    %v3923 = vpack.c.b16 %v3861, %v3859
    %v3924 = vpack.c.b16 %v3864, %v3862
    %v3925 = vpack.c.b16 %v3865, %v3863
    %v3926 = vpack.c.b16 %v3868, %v3866
    %v3927 = vpack.c.b16 %v3869, %v3867
    %v3928 = vpack.c.b16 %v3872, %v3870
    %v3929 = vpack.c.b16 %v3873, %v3871
    %v3930 = vpack.c.b16 %v3876, %v3874
    %v3931 = vpack.c.b16 %v3877, %v3875
    %v3932 = vpack.c.b16 %v3880, %v3878
    %v3933 = vpack.c.b16 %v3881, %v3879
    %v3934 = vpack.c.b16 %v3884, %v3882
    %v3935 = vpack.c.b16 %v3885, %v3883
    %v3936 = vpack.c.b16 %v3888, %v3886
    %v3937 = vpack.c.b16 %v3889, %v3887
    %v3938 = vpack.c.b16 %v3892, %v3890
    %v3939 = vpack.c.b16 %v3893, %v3891
    %v3940 = vpack.c.b16 %v3896, %v3894
    %v3941 = vpack.c.b16 %v3897, %v3895
    %v3942 = vpack.c.b16 %v3900, %v3898
    %v3943 = vpack.c.b16 %v3901, %v3899
    %v3944 = vpack.c.b16 %v3904, %v3902
    %v3945 = vpack.c.b16 %v3905, %v3903
    %v3946 = vpack.c.b16 %v3908, %v3906
    %v3947 = vpack.c.b16 %v3909, %v3907
    %v3948 = vpack.c.b16 %v3912, %v3910
    %v3949 = vpack.c.b16 %v3913, %v3911
    %v3950 = vpack.c.b16 %v3916, %v3914
    %v3951 = vpack.c.b16 %v3917, %v3915
    %v3952 = vpack.c.b16 %v3920, %v3918
    %v3953 = vpack.c.b16 %v3921, %v3919
    %3986 = vmatprep.subr.bf16.mxu0 %v3923
    %3987 = vmatpush1.bf16.msra.mxu0 %v3922
    %3988 = vmatprep.subr.bf16.mxu0 %v3925
    %3989 = vmatpush1.bf16.msra.mxu0 %v3924
    %3990 = vmatprep.subr.bf16.mxu0 %v3927
    %3991 = vmatpush1.bf16.msra.mxu0 %v3926
    %3992 = vmatprep.subr.bf16.mxu0 %v3929
    %3993 = vmatpush1.bf16.msra.mxu0 %v3928
    %3994 = vmatprep.subr.bf16.mxu0 %v3931
    %3995 = vmatpush1.bf16.msra.mxu0 %v3930
    %3996 = vmatprep.subr.bf16.mxu0 %v3933
    %3997 = vmatpush1.bf16.msra.mxu0 %v3932
    %3998 = vmatprep.subr.bf16.mxu0 %v3935
    %3999 = vmatpush1.bf16.msra.mxu0 %v3934
    %4000 = vmatprep.subr.bf16.mxu0 %v3937
    %4001 = vmatpush1.bf16.msra.mxu0 %v3936
    %4002 = vmatprep.subr.bf16.mxu0 %v3939
    %4003 = vmatpush1.bf16.msra.mxu0 %v3938
    %4004 = vmatprep.subr.bf16.mxu0 %v3941
    %4005 = vmatpush1.bf16.msra.mxu0 %v3940
    %4006 = vmatprep.subr.bf16.mxu0 %v3943
    %4007 = vmatpush1.bf16.msra.mxu0 %v3942
    %4008 = vmatprep.subr.bf16.mxu0 %v3945
    %4009 = vmatpush1.bf16.msra.mxu0 %v3944
    %4010 = vmatprep.subr.bf16.mxu0 %v3947
    %4011 = vmatpush1.bf16.msra.mxu0 %v3946
    %4012 = vmatprep.subr.bf16.mxu0 %v3949
    %4013 = vmatpush1.bf16.msra.mxu0 %v3948
    %4014 = vmatprep.subr.bf16.mxu0 %v3951
    %4015 = vmatpush1.bf16.msra.mxu0 %v3950
    %4016 = vmatprep.subr.bf16.mxu0 %v3953
    %4017 = vmatpush1.bf16.msra.mxu0 %v3952
    %4018 = vmatprep.mubr.bf16.mxu0 %v3782
    %4019 = vmatmul.mubr.bf16.gmra.mrb[0].mxu0 %v3781
    %v4020 = vpop.f32.mrb[0].mxu0
    %v4021 = vadd.f32 %v3819, %v4020
    %v4022 = vpop.f32.mrb[0].mxu0
    %v4023 = vadd.f32 %v3823, %v4022
    %v4024 = vpop.f32.mrb[0].mxu0
    %v4025 = vpop.f32.mrb[0].mxu0
    %4026 = vdwg.mxu0
    %v4027 = vpack.c.bf16 %v4021, %v4021
    %v4028 = vpack.c.bf16 %v4023, %v4023
    %v4029 = vld [vmem:[#allocation10] sm:$0xf]
    %v4030 = vld [vmem:[#allocation10 + $0x4] sm:$0xf]
    %v4031 = vld [vmem:[#allocation10 + $0x8] sm:$0xf]
    %v4032 = vld [vmem:[#allocation10 + $0xc] sm:$0xf]
    %v4033 = vld [vmem:[#allocation10 + $0x10] sm:$0xf]
    %v4034 = vld [vmem:[#allocation10 + $0x14] sm:$0xf]
    %v4035 = vld [vmem:[#allocation10 + $0x18] sm:$0xf]
    %v4036 = vld [vmem:[#allocation10 + $0x1c] sm:$0xf]
    %v4037 = vld [vmem:[#allocation10 + $0x20] sm:$0xf]
    %v4038 = vld [vmem:[#allocation10 + $0x24] sm:$0xf]
    %v4039 = vld [vmem:[#allocation10 + $0x28] sm:$0xf]
    %v4040 = vld [vmem:[#allocation10 + $0x2c] sm:$0xf]
    %v4041 = vld [vmem:[#allocation10 + $0x30] sm:$0xf]
    %v4042 = vld [vmem:[#allocation10 + $0x34] sm:$0xf]
    %v4043 = vld [vmem:[#allocation10 + $0x38] sm:$0xf]
    %v4044 = vld [vmem:[#allocation10 + $0x3c] sm:$0xf]
    %v4045 = vld [vmem:[#allocation10 + $0x40] sm:$0xf]
    %v4046 = vld [vmem:[#allocation10 + $0x44] sm:$0xf]
    %v4047 = vld [vmem:[#allocation10 + $0x48] sm:$0xf]
    %v4048 = vld [vmem:[#allocation10 + $0x4c] sm:$0xf]
    %v4049 = vld [vmem:[#allocation10 + $0x50] sm:$0xf]
    %v4050 = vld [vmem:[#allocation10 + $0x54] sm:$0xf]
    %v4051 = vld [vmem:[#allocation10 + $0x58] sm:$0xf]
    %v4052 = vld [vmem:[#allocation10 + $0x5c] sm:$0xf]
    %v4053 = vld [vmem:[#allocation10 + $0x60] sm:$0xf]
    %v4054 = vld [vmem:[#allocation10 + $0x64] sm:$0xf]
    %v4055 = vld [vmem:[#allocation10 + $0x68] sm:$0xf]
    %v4056 = vld [vmem:[#allocation10 + $0x6c] sm:$0xf]
    %v4057 = vld [vmem:[#allocation10 + $0x70] sm:$0xf]
    %v4058 = vld [vmem:[#allocation10 + $0x74] sm:$0xf]
    %v4059 = vld [vmem:[#allocation10 + $0x78] sm:$0xf]
    %v4060 = vld [vmem:[#allocation10 + $0x7c] sm:$0xf]
    %v4062 = vlaneseq
    %v4063 = vshrl.u32 %v4062, 7
    %v4064 = vsub.s32 0, %v4063
    %v4065 = vrot.slane %v126, %v4064
    %v4099 = vunpack.c.l.b16 %v4029
    %v4100 = vunpack.c.l.b16 %v4030
    %v4101 = vunpack.c.l.b16 %v4031
    %v4102 = vunpack.c.l.b16 %v4032
    %v4103 = vunpack.c.l.b16 %v4033
    %v4104 = vunpack.c.l.b16 %v4034
    %v4105 = vunpack.c.l.b16 %v4035
    %v4106 = vunpack.c.l.b16 %v4036
    %v4107 = vunpack.c.l.b16 %v4037
    %v4108 = vunpack.c.l.b16 %v4038
    %v4109 = vunpack.c.l.b16 %v4039
    %v4110 = vunpack.c.l.b16 %v4040
    %v4111 = vunpack.c.l.b16 %v4041
    %v4112 = vunpack.c.l.b16 %v4042
    %v4113 = vunpack.c.l.b16 %v4043
    %v4114 = vunpack.c.l.b16 %v4044
    %v4115 = vunpack.c.l.b16 %v4045
    %v4116 = vunpack.c.l.b16 %v4046
    %v4117 = vunpack.c.l.b16 %v4047
    %v4118 = vunpack.c.l.b16 %v4048
    %v4119 = vunpack.c.l.b16 %v4049
    %v4120 = vunpack.c.l.b16 %v4050
    %v4121 = vunpack.c.l.b16 %v4051
    %v4122 = vunpack.c.l.b16 %v4052
    %v4123 = vunpack.c.l.b16 %v4053
    %v4124 = vunpack.c.l.b16 %v4054
    %v4125 = vunpack.c.l.b16 %v4055
    %v4126 = vunpack.c.l.b16 %v4056
    %v4127 = vunpack.c.l.b16 %v4057
    %v4128 = vunpack.c.l.b16 %v4058
    %v4129 = vunpack.c.l.b16 %v4059
    %v4130 = vunpack.c.l.b16 %v4060
    %v4131 = vpack.c.b16 %v4100, %v4099
    %v4132 = vpack.c.b16 %v4102, %v4101
    %v4133 = vpack.c.b16 %v4104, %v4103
    %v4134 = vpack.c.b16 %v4106, %v4105
    %v4135 = vpack.c.b16 %v4108, %v4107
    %v4136 = vpack.c.b16 %v4110, %v4109
    %v4137 = vpack.c.b16 %v4112, %v4111
    %v4138 = vpack.c.b16 %v4114, %v4113
    %v4139 = vpack.c.b16 %v4116, %v4115
    %v4140 = vpack.c.b16 %v4118, %v4117
    %v4141 = vpack.c.b16 %v4120, %v4119
    %v4142 = vpack.c.b16 %v4122, %v4121
    %v4143 = vpack.c.b16 %v4124, %v4123
    %v4144 = vpack.c.b16 %v4126, %v4125
    %v4145 = vpack.c.b16 %v4128, %v4127
    %v4146 = vpack.c.b16 %v4130, %v4129
    %4163 = vmatprep.subr.bf16.mxu0 0
    %4164 = vmatpush1.bf16.msra.mxu0 %v4131
    %4165 = vmatprep.subr.bf16.mxu0 0
    %4166 = vmatpush1.bf16.msra.mxu0 %v4132
    %4167 = vmatprep.subr.bf16.mxu0 0
    %4168 = vmatpush1.bf16.msra.mxu0 %v4133
    %4169 = vmatprep.subr.bf16.mxu0 0
    %4170 = vmatpush1.bf16.msra.mxu0 %v4134
    %4171 = vmatprep.subr.bf16.mxu0 0
    %4172 = vmatpush1.bf16.msra.mxu0 %v4135
    %4173 = vmatprep.subr.bf16.mxu0 0
    %4174 = vmatpush1.bf16.msra.mxu0 %v4136
    %4175 = vmatprep.subr.bf16.mxu0 0
    %4176 = vmatpush1.bf16.msra.mxu0 %v4137
    %4177 = vmatprep.subr.bf16.mxu0 0
    %4178 = vmatpush1.bf16.msra.mxu0 %v4138
    %4179 = vmatprep.subr.bf16.mxu0 0
    %4180 = vmatpush1.bf16.msra.mxu0 %v4139
    %4181 = vmatprep.subr.bf16.mxu0 0
    %4182 = vmatpush1.bf16.msra.mxu0 %v4140
    %4183 = vmatprep.subr.bf16.mxu0 0
    %4184 = vmatpush1.bf16.msra.mxu0 %v4141
    %4185 = vmatprep.subr.bf16.mxu0 0
    %4186 = vmatpush1.bf16.msra.mxu0 %v4142
    %4187 = vmatprep.subr.bf16.mxu0 0
    %4188 = vmatpush1.bf16.msra.mxu0 %v4143
    %4189 = vmatprep.subr.bf16.mxu0 0
    %4190 = vmatpush1.bf16.msra.mxu0 %v4144
    %4191 = vmatprep.subr.bf16.mxu0 0
    %4192 = vmatpush1.bf16.msra.mxu0 %v4145
    %4193 = vmatprep.subr.bf16.mxu0 0
    %4194 = vmatpush1.bf16.msra.mxu0 %v4146
    %4195 = vmatprep.mubr.bf16.mxu0 %v4028
    %4196 = vmatmul.mubr.bf16.gmra.mrb[0].mxu0 %v4027
    %v4197 = vpop.f32.mrb[0].mxu0
    %v4198 = vadd.f32 %v4065, %v4197
    %v4199 = vpop.f32.mrb[0].mxu0
    %v4200 = vpop.f32.mrb[0].mxu0
    %v4201 = vpop.f32.mrb[0].mxu0
    %4202 = vdwg.mxu0
    %4203 = vst [vmem:[#allocation14] sm:$0xff] %v4198
    // Predicated region
    $region62: #{vbmlp_forward.1} parent=1 // pred_check
      _
    $region63: #{vbmlp_forward.1} parent=1 // pred_check_branch
      %4205 = sbr.rel (0) target = $region65
    $region64: #{vbmlp_forward.1} parent=1 // pred_region
      %s4207 = ssub.s32 128, 128
      %4208 = vsyncadd [#allocation4], %s4207
      %s4210 = sshll.u32 [#allocation14], 4
      %s4211 = int_to_ptr.vmem [resolvable:$true] %s4210
      %4213 = dma.vmem_to_hbm [thread:$0]  %s4211, 128, %s8, [#allocation4]
    $region65: #{vbmlp_forward.1} parent=1 // pred_fallthru
      _
    // Predicated region
    $region66: #{vbmlp_forward.1} parent=1 // pred_check
      _
    $region67: #{vbmlp_forward.1} parent=1 // pred_check_branch
      %4215 = sbr.rel (0) target = $region69
    $region68: #{vbmlp_forward.1} parent=1 // pred_region
      %4216 = dma.done [#allocation4], 128
    $region69: #{vbmlp_forward.1} parent=1 // pred_fallthru
      _
    %4217 = vsyncpa [#allocation3], 1
    %4218 = vsyncpa [#allocation6], 1
    %4219 = vsyncpa [#allocation9], 1
    %4220 = vsyncpa [#allocation12], 1
    %4221 = vsyncpa [#allocation4], 1

</llo_original>
